<compile_context>
chip_gen: v5e
topology: v5e:2x2
jax: 0.10.0
libtpu: 0.0.40
codegen_flags: <defaults>
</compile_context>

<pallas_src>
import math

import jax
import jax.numpy as jnp
from jax.experimental import pallas as pl
from jax.experimental.pallas import tpu as pltpu

NEG_SLOPE = 0.01                       # nn.LeakyReLU default
INV_LOG2 = 1.0 / math.log(2.0)
SEG_SIZES = (3, 2, 2, 2, 2, 2, 2, 2)   # light_state (3) + 7 binary heads = 17 logits
N_LOGITS = sum(SEG_SIZES)              # 17
BETA = 0.001
LATENT = 256
INIT_DIM = 1296                        # interfuser


def _leaky(x):
    return jnp.where(x > 0, x, NEG_SLOPE * x)


def _softplus(x):
    # numerically stable log(1 + exp(x)) == torch.nn.functional.softplus(x, beta=1)
    return jnp.maximum(x, 0.0) + jnp.log(1.0 + jnp.exp(-jnp.abs(x)))


def vib_kernel(f1_ref, f2_ref,
               w1a_ref, w1b_ref, b1_ref, w2_ref, b2_ref, w3_ref, b3_ref,
               dw1_ref, db1_ref, dw2_ref, db2_ref, dw3_ref, db3_ref,
               eps_ref, onehot_ref, segmat_ref, loss_ref):
    f32 = jnp.float32
    bf16 = jnp.bfloat16

    # ---------------- forward_encoder ----------------
    # per-feature token mean (torch.mean(feature, dim=1)); concat is folded
    # into the split first-layer weights.  Activations are cast to bf16 only
    # at the MXU boundary; accumulation is f32.
    m1 = jnp.mean(f1_ref[...], axis=1).astype(bf16)           # [B, 648]
    m2 = jnp.mean(f2_ref[...], axis=1).astype(bf16)           # [B, 648]

    h = (jnp.dot(m1, w1a_ref[...], preferred_element_type=f32)
         + jnp.dot(m2, w1b_ref[...], preferred_element_type=f32)
         + b1_ref[...])
    h = _leaky(h)
    h = _leaky(jnp.dot(h.astype(bf16), w2_ref[...],
                       preferred_element_type=f32) + b2_ref[...])
    stats = (jnp.dot(h.astype(bf16), w3_ref[...],
                     preferred_element_type=f32) + b3_ref[...])   # [B, 512]

    mu = stats[:, :LATENT]
    std = _softplus(stats[:, LATENT:] - 5.0)
    z = mu + eps_ref[...] * std                               # reparametrize_n (n=1)

    # ---------------- decoder ----------------
    d = _leaky(jnp.dot(z.astype(bf16), dw1_ref[...],
                       preferred_element_type=f32) + db1_ref[...])
    d = _leaky(jnp.dot(d.astype(bf16), dw2_ref[...],
                       preferred_element_type=f32) + db2_ref[...])
    logit = (jnp.dot(d.astype(bf16), dw3_ref[...],
                     preferred_element_type=f32) + db3_ref[...])  # [B, 17]

    # ---------------- get_loss ----------------
    # Segmented cross-entropy without the serial 8-slice loop:
    #   lse_s = row_max + log(sum_{j in seg s} exp(logit_j - row_max))
    # computed for all 8 segments with one [B,17]x[17,8] matmul.  Since each
    # one-hot target picks exactly one column per segment,
    #   class_ps = sum_s lse_s - sum_j onehot_j * logit_j.
    onehot = onehot_ref[...]
    row_max = jnp.max(logit, axis=1, keepdims=True)                   # [B, 1]
    e = jnp.exp(logit - row_max)                                      # [B, 17]
    seg_sum = jnp.dot(e, segmat_ref[...], preferred_element_type=f32)  # [B, 8]
    seg_lse = row_max + jnp.log(seg_sum)                              # [B, 8]
    class_ps = (jnp.sum(seg_lse, axis=1, keepdims=True)
                - jnp.sum(onehot * logit, axis=1, keepdims=True))     # [B, 1]

    info_ps = jnp.sum(
        -0.5 * (1.0 + 2.0 * jnp.log(std + 1e-15) - mu * mu - std * std),
        axis=1, keepdims=True)                                        # [B, 1]

    # class_loss and info_loss are both batch means / log(2); combine per sample.
    B = logit.shape[0]
    total_ps = (class_ps + BETA * info_ps) * INV_LOG2                 # [B, 1]
    loss_ref[...] = jnp.sum(total_ps, axis=0, keepdims=True) / B


# ----------------------------------------------------------------------------
# Parameters
# ----------------------------------------------------------------------------
def init_params(key):
    """f32 master parameters, weights stored [in, out]."""
    ks = jax.random.split(key, 12)

    def lin(kw, kb, fin, fout):
        w = jax.random.normal(kw, (fin, fout), jnp.float32) / jnp.sqrt(float(fin))
        b = jax.random.normal(kb, (fout,), jnp.float32) * 0.01
        return w, b

    p = {}
    p["w1"], p["b1"] = lin(ks[0], ks[1], INIT_DIM, 512)
    p["w2"], p["b2"] = lin(ks[2], ks[3], 512, 512)
    p["w3"], p["b3"] = lin(ks[4], ks[5], 512, 512)
    p["dw1"], p["db1"] = lin(ks[6], ks[7], LATENT, 512)
    p["dw2"], p["db2"] = lin(ks[8], ks[9], 512, 512)
    p["dw3"], p["db3"] = lin(ks[10], ks[11], 512, N_LOGITS)
    return p


def make_segmat():
    """Static [17, 8] segment-membership matrix (column s = 1 on segment s)."""
    rows = []
    st = 0
    bounds = []
    for sz in SEG_SIZES:
        bounds.append((st, st + sz))
        st += sz
    for j in range(N_LOGITS):
        rows.append([1.0 if lo <= j < hi else 0.0 for (lo, hi) in bounds])
    return jnp.array(rows, jnp.float32)


def pack_params(p, d_split):
    """One-time packing for the kernel: split W1, bf16 weights, [1,out] biases."""
    bf = jnp.bfloat16
    return {
        "w1a": p["w1"][:d_split, :].astype(bf),
        "w1b": p["w1"][d_split:, :].astype(bf),
        "b1": p["b1"].reshape(1, -1),
        "w2": p["w2"].astype(bf), "b2": p["b2"].reshape(1, -1),
        "w3": p["w3"].astype(bf), "b3": p["b3"].reshape(1, -1),
        "dw1": p["dw1"].astype(bf), "db1": p["db1"].reshape(1, -1),
        "dw2": p["dw2"].astype(bf), "db2": p["db2"].reshape(1, -1),
        "dw3": p["dw3"].astype(bf), "db3": p["db3"].reshape(1, -1),
        "segmat": make_segmat(),
    }


# ----------------------------------------------------------------------------
# Wrapper
# ----------------------------------------------------------------------------
def vib_forward(f1, f2, kp, eps, onehot):
    args = (f1, f2,
            kp["w1a"], kp["w1b"], kp["b1"],
            kp["w2"], kp["b2"], kp["w3"], kp["b3"],
            kp["dw1"], kp["db1"], kp["dw2"], kp["db2"], kp["dw3"], kp["db3"],
            eps, onehot, kp["segmat"])

    B = f1.shape[0]
    flops = 2 * B * (INIT_DIM * 512 + 3 * 512 * 512 + LATENT * 512
                     + 512 * N_LOGITS + N_LOGITS * len(SEG_SIZES))
    bytes_accessed = sum(math.prod(a.shape) * a.dtype.itemsize for a in args) + 4
    cost = pl.CostEstimate(flops=int(flops),
                           transcendentals=int(B * 1024),
                           bytes_accessed=int(bytes_accessed))

    vmem = pl.BlockSpec(memory_space=pltpu.MemorySpace.VMEM)
    loss = pl.pallas_call(
        vib_kernel,
        out_shape=jax.ShapeDtypeStruct((1, 1), jnp.float32),
        in_specs=[vmem] * len(args),
        out_specs=vmem,
        cost_estimate=cost,
    )(*args)
    return loss[0, 0]


# ----------------------------------------------------------------------------
# References
# ----------------------------------------------------------------------------
def vib_reference_bf16(f1, f2, kp, eps, onehot):
    """Pure-JAX reference using the SAME bf16 weights / cast points as the kernel."""
    f32, bf = jnp.float32, jnp.bfloat16
    m1 = jnp.mean(f1, axis=1).astype(bf)
    m2 = jnp.mean(f2, axis=1).astype(bf)
    h = (jnp.dot(m1, kp["w1a"], preferred_element_type=f32)
         + jnp.dot(m2, kp["w1b"], preferred_element_type=f32) + kp["b1"])
    h = _leaky(h)
    h = _leaky(jnp.dot(h.astype(bf), kp["w2"], preferred_element_type=f32) + kp["b2"])
    stats = jnp.dot(h.astype(bf), kp["w3"], preferred_element_type=f32) + kp["b3"]
    mu = stats[:, :LATENT]
    std = jax.nn.softplus(stats[:, LATENT:] - 5.0)
    z = mu + eps * std
    d = _leaky(jnp.dot(z.astype(bf), kp["dw1"], preferred_element_type=f32) + kp["db1"])
    d = _leaky(jnp.dot(d.astype(bf), kp["dw2"], preferred_element_type=f32) + kp["db2"])
    logit = jnp.dot(d.astype(bf), kp["dw3"], preferred_element_type=f32) + kp["db3"]

    class_loss, st = 0.0, 0
    for sz in SEG_SIZES:
        logsm = jax.nn.log_softmax(logit[:, st:st + sz], axis=1)
        class_loss += jnp.mean(
            -jnp.sum(onehot[:, st:st + sz] * logsm, axis=1)) / math.log(2)
        st += sz
    info_loss = jnp.mean(jnp.sum(
        -0.5 * (1.0 + 2.0 * jnp.log(std + 1e-15) - mu ** 2 - std ** 2),
        axis=1)) / math.log(2)
    return class_loss + BETA * info_loss


def vib_reference_f32(f1, f2, params, eps, onehot):
    """Full-precision reference matching the torch forward (same eps / labels)."""
    m1 = jnp.mean(f1, axis=1)
    m2 = jnp.mean(f2, axis=1)
    allf = jnp.concatenate([m1, m2], axis=1)                  # [B, 1296]
    h = _leaky(allf @ params["w1"] + params["b1"])
    h = _leaky(h @ params["w2"] + params["b2"])
    stats = h @ params["w3"] + params["b3"]
    mu = stats[:, :LATENT]
    std = jax.nn.softplus(stats[:, LATENT:] - 5.0)
    z = mu + eps * std
    d = _leaky(z @ params["dw1"] + params["db1"])
    d = _leaky(d @ params["dw2"] + params["db2"])
    logit = d @ params["dw3"] + params["db3"]

    class_loss, st = 0.0, 0
    for sz in SEG_SIZES:
        logsm = jax.nn.log_softmax(logit[:, st:st + sz], axis=1)
        class_loss += jnp.mean(
            -jnp.sum(onehot[:, st:st + sz] * logsm, axis=1)) / math.log(2)
        st += sz
    info_loss = jnp.mean(jnp.sum(
        -0.5 * (1.0 + 2.0 * jnp.log(std + 1e-15) - mu ** 2 - std ** 2),
        axis=1)) / math.log(2)
    return class_loss + BETA * info_loss


if __name__ == "__main__":
    key = jax.random.PRNGKey(0)
    k_f1, k_f2, k_eps, k_lab, k_par = jax.random.split(key, 5)

    B, S = 2, 8
    D_half = INIT_DIM // 2                                    # 648 + 648 = 1296
    f1 = jax.random.normal(k_f1, (B, S, D_half), jnp.float32)
    f2 = jax.random.normal(k_f2, (B, S, D_half), jnp.float32)

    # TODO(synk): torch samples eps via std.data.new(...).normal_() inside the
    # module; here the gaussian noise is drawn deterministically with JAX RNG
    # outside the kernel and passed in.
    eps = jax.random.normal(k_eps, (B, LATENT), jnp.float32)

    # labels for the 8 prediction heads (light_state has 3 classes, rest 2),
    # materialized as a concatenated one-hot [B, 17] target.
    lab_keys = jax.random.split(k_lab, len(SEG_SIZES))
    oh_parts = []
    for kk, sz in zip(lab_keys, SEG_SIZES):
        lab = jax.random.randint(kk, (B,), 0, sz)
        oh_parts.append(jax.nn.one_hot(lab, sz, dtype=jnp.float32))
    onehot = jnp.concatenate(oh_parts, axis=1)

    params = init_params(k_par)                 # f32 master params
    kparams = pack_params(params, D_half)       # one-time: split W1, bf16, bias reshape

    loss = jax.block_until_ready(vib_forward(f1, f2, kparams, eps, onehot))
    ref_bf16 = jax.block_until_ready(vib_reference_bf16(f1, f2, kparams, eps, onehot))
    ref_f32 = jax.block_until_ready(vib_reference_f32(f1, f2, params, eps, onehot))

    assert jnp.isfinite(loss), loss
    # exact-precision match (same bf16 weights / cast points)
    assert jnp.allclose(loss, ref_bf16, rtol=2e-3, atol=2e-3), (loss, ref_bf16)
    # semantics sanity vs full-f32 torch-equivalent forward
    assert jnp.allclose(loss, ref_f32, rtol=5e-2, atol=5e-2), (loss, ref_f32)
    print("KERNEL_OK")
</pallas_src>

<mosaic_0001>
module attributes {stable_mosaic.version = 11 : i64} {
  func.func @vib_kernel(%arg0: memref<2x8x648xf32, #tpu.memory_space<vmem>>, %arg1: memref<2x8x648xf32, #tpu.memory_space<vmem>>, %arg2: memref<648x512xbf16, #tpu.memory_space<vmem>>, %arg3: memref<648x512xbf16, #tpu.memory_space<vmem>>, %arg4: memref<1x512xf32, #tpu.memory_space<vmem>>, %arg5: memref<512x512xbf16, #tpu.memory_space<vmem>>, %arg6: memref<1x512xf32, #tpu.memory_space<vmem>>, %arg7: memref<512x512xbf16, #tpu.memory_space<vmem>>, %arg8: memref<1x512xf32, #tpu.memory_space<vmem>>, %arg9: memref<256x512xbf16, #tpu.memory_space<vmem>>, %arg10: memref<1x512xf32, #tpu.memory_space<vmem>>, %arg11: memref<512x512xbf16, #tpu.memory_space<vmem>>, %arg12: memref<1x512xf32, #tpu.memory_space<vmem>>, %arg13: memref<512x17xbf16, #tpu.memory_space<vmem>>, %arg14: memref<1x17xf32, #tpu.memory_space<vmem>>, %arg15: memref<2x256xf32, #tpu.memory_space<vmem>>, %arg16: memref<2x17xf32, #tpu.memory_space<vmem>>, %arg17: memref<17x8xf32, #tpu.memory_space<vmem>>, %arg18: memref<1x1xf32, #tpu.memory_space<vmem>>) attributes {dimension_semantics = [], scalar_prefetch = 0 : i64, scratch_operands = 0 : i64, tpu.core_type = #tpu.core_type<tc>} {
    %c0 = arith.constant 0 : index
    %c0_0 = arith.constant 0 : index
    %c0_1 = arith.constant 0 : index
    %0 = vector.load %arg0[%c0, %c0_0, %c0_1] : memref<2x8x648xf32, #tpu.memory_space<vmem>>, vector<2x8x648xf32>
    %cst = arith.constant dense<0.000000e+00> : vector<2x648xf32>
    %1 = vector.multi_reduction <add>, %0, %cst [1] : vector<2x8x648xf32> to vector<2x648xf32>
    %cst_2 = arith.constant 8.000000e+00 : f32
    %2 = vector.broadcast %cst_2 : f32 to vector<2x648xf32>
    %3 = arith.divf %1, %2 : vector<2x648xf32>
    %4 = arith.truncf %3 : vector<2x648xf32> to vector<2x648xbf16>
    %c0_3 = arith.constant 0 : index
    %c0_4 = arith.constant 0 : index
    %c0_5 = arith.constant 0 : index
    %5 = vector.load %arg1[%c0_3, %c0_4, %c0_5] : memref<2x8x648xf32, #tpu.memory_space<vmem>>, vector<2x8x648xf32>
    %cst_6 = arith.constant dense<0.000000e+00> : vector<2x648xf32>
    %6 = vector.multi_reduction <add>, %5, %cst_6 [1] : vector<2x8x648xf32> to vector<2x648xf32>
    %cst_7 = arith.constant 8.000000e+00 : f32
    %7 = vector.broadcast %cst_7 : f32 to vector<2x648xf32>
    %8 = arith.divf %6, %7 : vector<2x648xf32>
    %9 = arith.truncf %8 : vector<2x648xf32> to vector<2x648xbf16>
    %c0_8 = arith.constant 0 : index
    %c0_9 = arith.constant 0 : index
    %10 = vector.load %arg2[%c0_8, %c0_9] : memref<648x512xbf16, #tpu.memory_space<vmem>>, vector<648x512xbf16>
    %cst_10 = arith.constant dense<0.000000e+00> : vector<2x512xf32>
    %11 = tpu.matmul %4, %10, %cst_10 {dimension_numbers = #tpu.dot_dimension_numbers<[1], [0], [0], [1], [0, 0, 1, 1], [], []>} : vector<2x648xbf16>, vector<648x512xbf16>, vector<2x512xf32> -> vector<2x512xf32>
    %c0_11 = arith.constant 0 : index
    %c0_12 = arith.constant 0 : index
    %12 = vector.load %arg3[%c0_11, %c0_12] : memref<648x512xbf16, #tpu.memory_space<vmem>>, vector<648x512xbf16>
    %cst_13 = arith.constant dense<0.000000e+00> : vector<2x512xf32>
    %13 = tpu.matmul %9, %12, %cst_13 {dimension_numbers = #tpu.dot_dimension_numbers<[1], [0], [0], [1], [0, 0, 1, 1], [], []>} : vector<2x648xbf16>, vector<648x512xbf16>, vector<2x512xf32> -> vector<2x512xf32>
    %14 = arith.addf %11, %13 : vector<2x512xf32>
    %c0_14 = arith.constant 0 : index
    %c0_15 = arith.constant 0 : index
    %15 = vector.load %arg4[%c0_14, %c0_15] : memref<1x512xf32, #tpu.memory_space<vmem>>, vector<1x512xf32>
    %16 = vector.broadcast %15 : vector<1x512xf32> to vector<2x512xf32>
    %17 = arith.addf %14, %16 : vector<2x512xf32>
    %cst_16 = arith.constant 0.000000e+00 : f32
    %18 = vector.broadcast %cst_16 : f32 to vector<2x512xf32>
    %19 = arith.cmpf ogt, %17, %18 : vector<2x512xf32>
    %cst_17 = arith.constant 0.00999999977 : f32
    %20 = vector.broadcast %cst_17 : f32 to vector<2x512xf32>
    %21 = arith.mulf %20, %17 : vector<2x512xf32>
    %22 = arith.select %19, %17, %21 : vector<2x512xi1>, vector<2x512xf32>
    %23 = arith.truncf %22 : vector<2x512xf32> to vector<2x512xbf16>
    %c0_18 = arith.constant 0 : index
    %c0_19 = arith.constant 0 : index
    %24 = vector.load %arg5[%c0_18, %c0_19] : memref<512x512xbf16, #tpu.memory_space<vmem>>, vector<512x512xbf16>
    %cst_20 = arith.constant dense<0.000000e+00> : vector<2x512xf32>
    %25 = tpu.matmul %23, %24, %cst_20 {dimension_numbers = #tpu.dot_dimension_numbers<[1], [0], [0], [1], [0, 0, 1, 1], [], []>} : vector<2x512xbf16>, vector<512x512xbf16>, vector<2x512xf32> -> vector<2x512xf32>
    %c0_21 = arith.constant 0 : index
    %c0_22 = arith.constant 0 : index
    %26 = vector.load %arg6[%c0_21, %c0_22] : memref<1x512xf32, #tpu.memory_space<vmem>>, vector<1x512xf32>
    %27 = vector.broadcast %26 : vector<1x512xf32> to vector<2x512xf32>
    %28 = arith.addf %25, %27 : vector<2x512xf32>
    %cst_23 = arith.constant 0.000000e+00 : f32
    %29 = vector.broadcast %cst_23 : f32 to vector<2x512xf32>
    %30 = arith.cmpf ogt, %28, %29 : vector<2x512xf32>
    %cst_24 = arith.constant 0.00999999977 : f32
    %31 = vector.broadcast %cst_24 : f32 to vector<2x512xf32>
    %32 = arith.mulf %31, %28 : vector<2x512xf32>
    %33 = arith.select %30, %28, %32 : vector<2x512xi1>, vector<2x512xf32>
    %34 = arith.truncf %33 : vector<2x512xf32> to vector<2x512xbf16>
    %c0_25 = arith.constant 0 : index
    %c0_26 = arith.constant 0 : index
    %35 = vector.load %arg7[%c0_25, %c0_26] : memref<512x512xbf16, #tpu.memory_space<vmem>>, vector<512x512xbf16>
    %cst_27 = arith.constant dense<0.000000e+00> : vector<2x512xf32>
    %36 = tpu.matmul %34, %35, %cst_27 {dimension_numbers = #tpu.dot_dimension_numbers<[1], [0], [0], [1], [0, 0, 1, 1], [], []>} : vector<2x512xbf16>, vector<512x512xbf16>, vector<2x512xf32> -> vector<2x512xf32>
    %c0_28 = arith.constant 0 : index
    %c0_29 = arith.constant 0 : index
    %37 = vector.load %arg8[%c0_28, %c0_29] : memref<1x512xf32, #tpu.memory_space<vmem>>, vector<1x512xf32>
    %38 = vector.broadcast %37 : vector<1x512xf32> to vector<2x512xf32>
    %39 = arith.addf %36, %38 : vector<2x512xf32>
    %40 = vector.extract_strided_slice %39 {offsets = [0, 0], sizes = [2, 256], strides = [1, 1]} : vector<2x512xf32> to vector<2x256xf32>
    %41 = vector.extract_strided_slice %39 {offsets = [0, 256], sizes = [2, 256], strides = [1, 1]} : vector<2x512xf32> to vector<2x256xf32>
    %cst_30 = arith.constant 5.000000e+00 : f32
    %42 = vector.broadcast %cst_30 : f32 to vector<2x256xf32>
    %43 = arith.subf %41, %42 : vector<2x256xf32>
    %cst_31 = arith.constant 0.000000e+00 : f32
    %44 = vector.broadcast %cst_31 : f32 to vector<2x256xf32>
    %45 = arith.maximumf %43, %44 : vector<2x256xf32>
    %46 = math.absf %43 : vector<2x256xf32>
    %cst_32 = arith.constant 0.000000e+00 : f32
    %47 = vector.broadcast %cst_32 : f32 to vector<2x256xf32>
    %48 = arith.subf %47, %46 : vector<2x256xf32>
    %49 = math.exp %48 : vector<2x256xf32>
    %cst_33 = arith.constant 1.000000e+00 : f32
    %50 = vector.broadcast %cst_33 : f32 to vector<2x256xf32>
    %51 = arith.addf %50, %49 : vector<2x256xf32>
    %52 = math.log %51 : vector<2x256xf32>
    %53 = arith.addf %45, %52 : vector<2x256xf32>
    %c0_34 = arith.constant 0 : index
    %c0_35 = arith.constant 0 : index
    %54 = vector.load %arg15[%c0_34, %c0_35] : memref<2x256xf32, #tpu.memory_space<vmem>>, vector<2x256xf32>
    %55 = arith.mulf %54, %53 : vector<2x256xf32>
    %56 = arith.addf %40, %55 : vector<2x256xf32>
    %57 = arith.truncf %56 : vector<2x256xf32> to vector<2x256xbf16>
    %c0_36 = arith.constant 0 : index
    %c0_37 = arith.constant 0 : index
    %58 = vector.load %arg9[%c0_36, %c0_37] : memref<256x512xbf16, #tpu.memory_space<vmem>>, vector<256x512xbf16>
    %cst_38 = arith.constant dense<0.000000e+00> : vector<2x512xf32>
    %59 = tpu.matmul %57, %58, %cst_38 {dimension_numbers = #tpu.dot_dimension_numbers<[1], [0], [0], [1], [0, 0, 1, 1], [], []>} : vector<2x256xbf16>, vector<256x512xbf16>, vector<2x512xf32> -> vector<2x512xf32>
    %c0_39 = arith.constant 0 : index
    %c0_40 = arith.constant 0 : index
    %60 = vector.load %arg10[%c0_39, %c0_40] : memref<1x512xf32, #tpu.memory_space<vmem>>, vector<1x512xf32>
    %61 = vector.broadcast %60 : vector<1x512xf32> to vector<2x512xf32>
    %62 = arith.addf %59, %61 : vector<2x512xf32>
    %cst_41 = arith.constant 0.000000e+00 : f32
    %63 = vector.broadcast %cst_41 : f32 to vector<2x512xf32>
    %64 = arith.cmpf ogt, %62, %63 : vector<2x512xf32>
    %cst_42 = arith.constant 0.00999999977 : f32
    %65 = vector.broadcast %cst_42 : f32 to vector<2x512xf32>
    %66 = arith.mulf %65, %62 : vector<2x512xf32>
    %67 = arith.select %64, %62, %66 : vector<2x512xi1>, vector<2x512xf32>
    %68 = arith.truncf %67 : vector<2x512xf32> to vector<2x512xbf16>
    %c0_43 = arith.constant 0 : index
    %c0_44 = arith.constant 0 : index
    %69 = vector.load %arg11[%c0_43, %c0_44] : memref<512x512xbf16, #tpu.memory_space<vmem>>, vector<512x512xbf16>
    %cst_45 = arith.constant dense<0.000000e+00> : vector<2x512xf32>
    %70 = tpu.matmul %68, %69, %cst_45 {dimension_numbers = #tpu.dot_dimension_numbers<[1], [0], [0], [1], [0, 0, 1, 1], [], []>} : vector<2x512xbf16>, vector<512x512xbf16>, vector<2x512xf32> -> vector<2x512xf32>
    %c0_46 = arith.constant 0 : index
    %c0_47 = arith.constant 0 : index
    %71 = vector.load %arg12[%c0_46, %c0_47] : memref<1x512xf32, #tpu.memory_space<vmem>>, vector<1x512xf32>
    %72 = vector.broadcast %71 : vector<1x512xf32> to vector<2x512xf32>
    %73 = arith.addf %70, %72 : vector<2x512xf32>
    %cst_48 = arith.constant 0.000000e+00 : f32
    %74 = vector.broadcast %cst_48 : f32 to vector<2x512xf32>
    %75 = arith.cmpf ogt, %73, %74 : vector<2x512xf32>
    %cst_49 = arith.constant 0.00999999977 : f32
    %76 = vector.broadcast %cst_49 : f32 to vector<2x512xf32>
    %77 = arith.mulf %76, %73 : vector<2x512xf32>
    %78 = arith.select %75, %73, %77 : vector<2x512xi1>, vector<2x512xf32>
    %79 = arith.truncf %78 : vector<2x512xf32> to vector<2x512xbf16>
    %c0_50 = arith.constant 0 : index
    %c0_51 = arith.constant 0 : index
    %80 = vector.load %arg13[%c0_50, %c0_51] : memref<512x17xbf16, #tpu.memory_space<vmem>>, vector<512x17xbf16>
    %cst_52 = arith.constant dense<0.000000e+00> : vector<2x17xf32>
    %81 = tpu.matmul %79, %80, %cst_52 {dimension_numbers = #tpu.dot_dimension_numbers<[1], [0], [0], [1], [0, 0, 1, 1], [], []>} : vector<2x512xbf16>, vector<512x17xbf16>, vector<2x17xf32> -> vector<2x17xf32>
    %c0_53 = arith.constant 0 : index
    %c0_54 = arith.constant 0 : index
    %82 = vector.load %arg14[%c0_53, %c0_54] : memref<1x17xf32, #tpu.memory_space<vmem>>, vector<1x17xf32>
    %83 = vector.broadcast %82 : vector<1x17xf32> to vector<2x17xf32>
    %84 = arith.addf %81, %83 : vector<2x17xf32>
    %c0_55 = arith.constant 0 : index
    %c0_56 = arith.constant 0 : index
    %85 = vector.load %arg16[%c0_55, %c0_56] : memref<2x17xf32, #tpu.memory_space<vmem>>, vector<2x17xf32>
    %cst_57 = arith.constant dense<0xFF800000> : vector<2xf32>
    %86 = vector.multi_reduction <maximumf>, %84, %cst_57 [1] : vector<2x17xf32> to vector<2xf32>
    %87 = vector.shape_cast %86 : vector<2xf32> to vector<2x1xf32>
    %88 = vector.broadcast %87 : vector<2x1xf32> to vector<2x17xf32>
    %89 = arith.subf %84, %88 : vector<2x17xf32>
    %90 = math.exp %89 : vector<2x17xf32>
    %c0_58 = arith.constant 0 : index
    %c0_59 = arith.constant 0 : index
    %91 = vector.load %arg17[%c0_58, %c0_59] : memref<17x8xf32, #tpu.memory_space<vmem>>, vector<17x8xf32>
    %cst_60 = arith.constant dense<0.000000e+00> : vector<2x8xf32>
    %92 = tpu.matmul %90, %91, %cst_60 {dimension_numbers = #tpu.dot_dimension_numbers<[1], [0], [0], [1], [0, 0, 1, 1], [], []>} : vector<2x17xf32>, vector<17x8xf32>, vector<2x8xf32> -> vector<2x8xf32>
    %93 = math.log %92 : vector<2x8xf32>
    %94 = vector.broadcast %87 : vector<2x1xf32> to vector<2x8xf32>
    %95 = arith.addf %94, %93 : vector<2x8xf32>
    %cst_61 = arith.constant dense<0.000000e+00> : vector<2xf32>
    %96 = vector.multi_reduction <add>, %95, %cst_61 [1] : vector<2x8xf32> to vector<2xf32>
    %97 = vector.shape_cast %96 : vector<2xf32> to vector<2x1xf32>
    %98 = arith.mulf %85, %84 : vector<2x17xf32>
    %cst_62 = arith.constant dense<0.000000e+00> : vector<2xf32>
    %99 = vector.multi_reduction <add>, %98, %cst_62 [1] : vector<2x17xf32> to vector<2xf32>
    %100 = vector.shape_cast %99 : vector<2xf32> to vector<2x1xf32>
    %101 = arith.subf %97, %100 : vector<2x1xf32>
    %cst_63 = arith.constant 1.000000e-15 : f32
    %102 = vector.broadcast %cst_63 : f32 to vector<2x256xf32>
    %103 = arith.addf %53, %102 : vector<2x256xf32>
    %104 = math.log %103 : vector<2x256xf32>
    %cst_64 = arith.constant 2.000000e+00 : f32
    %105 = vector.broadcast %cst_64 : f32 to vector<2x256xf32>
    %106 = arith.mulf %105, %104 : vector<2x256xf32>
    %cst_65 = arith.constant 1.000000e+00 : f32
    %107 = vector.broadcast %cst_65 : f32 to vector<2x256xf32>
    %108 = arith.addf %107, %106 : vector<2x256xf32>
    %109 = arith.mulf %40, %40 : vector<2x256xf32>
    %110 = arith.subf %108, %109 : vector<2x256xf32>
    %111 = arith.mulf %53, %53 : vector<2x256xf32>
    %112 = arith.subf %110, %111 : vector<2x256xf32>
    %cst_66 = arith.constant -5.000000e-01 : f32
    %113 = vector.broadcast %cst_66 : f32 to vector<2x256xf32>
    %114 = arith.mulf %113, %112 : vector<2x256xf32>
    %cst_67 = arith.constant dense<0.000000e+00> : vector<2xf32>
    %115 = vector.multi_reduction <add>, %114, %cst_67 [1] : vector<2x256xf32> to vector<2xf32>
    %116 = vector.shape_cast %115 : vector<2xf32> to vector<2x1xf32>
    %cst_68 = arith.constant 1.000000e-03 : f32
    %117 = vector.broadcast %cst_68 : f32 to vector<2x1xf32>
    %118 = arith.mulf %117, %116 : vector<2x1xf32>
    %119 = arith.addf %101, %118 : vector<2x1xf32>
    %cst_69 = arith.constant 1.44269502 : f32
    %120 = vector.broadcast %cst_69 : f32 to vector<2x1xf32>
    %121 = arith.mulf %119, %120 : vector<2x1xf32>
    %cst_70 = arith.constant dense<0.000000e+00> : vector<1xf32>
    %122 = vector.multi_reduction <add>, %121, %cst_70 [0] : vector<2x1xf32> to vector<1xf32>
    %123 = vector.shape_cast %122 : vector<1xf32> to vector<1x1xf32>
    %cst_71 = arith.constant 2.000000e+00 : f32
    %124 = vector.broadcast %cst_71 : f32 to vector<1x1xf32>
    %125 = arith.divf %123, %124 : vector<1x1xf32>
    %c0_72 = arith.constant 0 : index
    %c0_73 = arith.constant 0 : index
    %126 = vector.load %arg18[%c0_72, %c0_73] : memref<1x1xf32, #tpu.memory_space<vmem>>, vector<1x1xf32>
    tpu.vector_store %arg18[%c0_72, %c0_73], %125 {strides = array<i32>} : memref<1x1xf32, #tpu.memory_space<vmem>>, vector<1x1xf32>,
    return
  }
}

</mosaic_0001>

<llo_original>
// kernel: tpu_custom_call.1
$region0: #{tpu_custom_call.1}
  #allocation0 [shape = 'u32[]', space=smem, size = 0x4, offset = 0x4, fixed_abs, tag = 'smem constant byte address 0x4 - core index']
  #allocation1 [shape = 'u32[72,128]{1,0:T(1,128)}', space=vmem, size = 0x9000, scoped, tag = 'internal scratch']
  %s0 = inlined_call_operand.vmem [shape: f32[2,8,648], index: 0, kind: input, shape index: {}]
  %s1 = inlined_call_operand.vmem [shape: f32[2,8,648], index: 1, kind: input, shape index: {}]
  %s2 = inlined_call_operand.hbm [shape: bf16[648,512], index: 2, kind: input, shape index: {}]
  %s3 = inlined_call_operand.hbm [shape: bf16[648,512], index: 3, kind: input, shape index: {}]
  %s4 = inlined_call_operand.vmem [shape: f32[1,512], index: 4, kind: input, shape index: {}]
  %s5 = inlined_call_operand.hbm [shape: bf16[512,512], index: 5, kind: input, shape index: {}]
  %s6 = inlined_call_operand.vmem [shape: f32[1,512], index: 6, kind: input, shape index: {}]
  %s7 = inlined_call_operand.hbm [shape: bf16[512,512], index: 7, kind: input, shape index: {}]
  %s8 = inlined_call_operand.vmem [shape: f32[1,512], index: 8, kind: input, shape index: {}]
  %s9 = inlined_call_operand.hbm [shape: bf16[256,512], index: 9, kind: input, shape index: {}]
  %s10 = inlined_call_operand.vmem [shape: f32[1,512], index: 10, kind: input, shape index: {}]
  %s11 = inlined_call_operand.hbm [shape: bf16[512,512], index: 11, kind: input, shape index: {}]
  %s12 = inlined_call_operand.vmem [shape: f32[1,512], index: 12, kind: input, shape index: {}]
  %s13 = inlined_call_operand.vmem [shape: bf16[512,17], index: 13, kind: input, shape index: {}]
  %s14 = inlined_call_operand.vmem [shape: f32[1,17], index: 14, kind: input, shape index: {}]
  %s15 = inlined_call_operand.vmem [shape: f32[2,256], index: 15, kind: input, shape index: {}]
  %s16 = inlined_call_operand.vmem [shape: f32[2,17], index: 16, kind: input, shape index: {}]
  %s17 = inlined_call_operand.vmem [shape: f32[17,8], index: 17, kind: input, shape index: {}]
  %s18 = inlined_call_operand.hbm [shape: f32[1,1], index: 18, kind: output, shape index: {}]
  %s19 = sld [smem:[#allocation0]]
  $region106: #{tpu_custom_call.1} parent=0
    _
  %s21 = ssub.s32 1, %s19
  %s22 = scalar_select 0, %s21, %s19
  $region1: #{tpu_custom_call.1} parent=0
    #allocation2 [shape = 'u8[663552]{0}', space=vmem, size = 0xa2000, scoped, tag = 'input window, operand 2, single buffered']
    #allocation3 [shape = 's32[1]{0}', space=sflag, size = 0x4, scoped, tag = 'scoped memory for tpu_custom_call.1']
    #allocation4 [shape = 's32[1]{0}', space=sflag, size = 0x4, scoped, tag = 'scoped memory for tpu_custom_call.1']
    #allocation5 [shape = 'u8[663552]{0}', space=vmem, size = 0xa2000, scoped, tag = 'input window, operand 3, single buffered']
    #allocation6 [shape = 's32[1]{0}', space=sflag, size = 0x4, scoped, tag = 'scoped memory for tpu_custom_call.1']
    #allocation7 [shape = 'u8[524288]{0}', space=vmem, size = 0x80000, scoped, tag = 'input window, operand 5, single buffered']
    #allocation8 [shape = 'u8[524288]{0}', space=vmem, size = 0x80000, scoped, tag = 'input window, operand 7, single buffered']
    #allocation9 [shape = 's32[1]{0}', space=sflag, size = 0x4, scoped, tag = 'scoped memory for tpu_custom_call.1']
    #allocation10 [shape = 'u8[262144]{0}', space=vmem, size = 0x40000, scoped, tag = 'input window, operand 9, single buffered']
    #allocation11 [shape = 'u8[524288]{0}', space=vmem, size = 0x80000, scoped, tag = 'input window, operand 11, single buffered']
    #allocation12 [shape = 's32[1]{0}', space=sflag, size = 0x4, scoped, tag = 'scoped memory for tpu_custom_call.1']
    #allocation13 [shape = 'u8[512]{0}', space=vmem, size = 0x400, scoped, tag = 'output window, operand 0, single buffered']
    %23 = vsyncpa [#allocation3], 0
    %24 = vsyncpa [#allocation6], 0
    %25 = vsyncpa [#allocation9], 0
    %26 = vsyncpa [#allocation12], 0
    %27 = vsyncpa [#allocation4], 0
    // Predicated region
    $region2: #{tpu_custom_call.1} parent=1 // pred_check
      _
    $region3: #{tpu_custom_call.1} parent=1 // pred_check_branch
      %29 = sbr.rel (0) target = $region5
    $region4: #{tpu_custom_call.1} parent=1 // pred_region
      _
    $region5: #{tpu_custom_call.1} parent=1 // pred_fallthru
      _
    // Predicated region
    $region6: #{tpu_custom_call.1} parent=1 // pred_check
      _
    $region7: #{tpu_custom_call.1} parent=1 // pred_check_branch
      %31 = sbr.rel (0) target = $region9
    $region8: #{tpu_custom_call.1} parent=1 // pred_region
      _
    $region9: #{tpu_custom_call.1} parent=1 // pred_fallthru
      _
    // Predicated region
    $region10: #{tpu_custom_call.1} parent=1 // pred_check
      _
    $region11: #{tpu_custom_call.1} parent=1 // pred_check_branch
      %33 = sbr.rel (0) target = $region13
    $region12: #{tpu_custom_call.1} parent=1 // pred_region
      %35 = vsyncadd [#allocation3], 0
      %s36 = sshll.u32 %s2, 4
      %s37 = int_to_ptr.hbm [resolvable:$true] %s36
      %s38 = sshll.u32 [#allocation2], 4
      %s39 = int_to_ptr.vmem [resolvable:$true] %s38
      %44 = dma.hbm_to_vmem [thread:$0]  %s37, 20736, %s39, [#allocation3], 256, 256, 16
    $region13: #{tpu_custom_call.1} parent=1 // pred_fallthru
      _
    // Predicated region
    $region14: #{tpu_custom_call.1} parent=1 // pred_check
      _
    $region15: #{tpu_custom_call.1} parent=1 // pred_check_branch
      %46 = sbr.rel (0) target = $region17
    $region16: #{tpu_custom_call.1} parent=1 // pred_region
      %48 = vsyncadd [#allocation6], 0
      %s49 = sshll.u32 %s3, 4
      %s50 = int_to_ptr.hbm [resolvable:$true] %s49
      %s51 = sshll.u32 [#allocation5], 4
      %s52 = int_to_ptr.vmem [resolvable:$true] %s51
      %57 = dma.hbm_to_vmem [thread:$0]  %s50, 20736, %s52, [#allocation6], 256, 256, 16
    $region17: #{tpu_custom_call.1} parent=1 // pred_fallthru
      _
    // Predicated region
    $region18: #{tpu_custom_call.1} parent=1 // pred_check
      _
    $region19: #{tpu_custom_call.1} parent=1 // pred_check_branch
      %59 = sbr.rel (0) target = $region21
    $region20: #{tpu_custom_call.1} parent=1 // pred_region
      _
    $region21: #{tpu_custom_call.1} parent=1 // pred_fallthru
      _
    // Predicated region
    $region22: #{tpu_custom_call.1} parent=1 // pred_check
      _
    $region23: #{tpu_custom_call.1} parent=1 // pred_check_branch
      %61 = sbr.rel (0) target = $region25
    $region24: #{tpu_custom_call.1} parent=1 // pred_region
      %63 = vsyncadd [#allocation6], 0
      %s64 = sshll.u32 %s5, 4
      %s65 = int_to_ptr.hbm [resolvable:$true] %s64
      %s66 = sshll.u32 [#allocation7], 4
      %s67 = int_to_ptr.vmem [resolvable:$true] %s66
      %72 = dma.hbm_to_vmem [thread:$0]  %s65, 16384, %s67, [#allocation6], 256, 256, 16
    $region25: #{tpu_custom_call.1} parent=1 // pred_fallthru
      _
    // Predicated region
    $region26: #{tpu_custom_call.1} parent=1 // pred_check
      _
    $region27: #{tpu_custom_call.1} parent=1 // pred_check_branch
      %74 = sbr.rel (0) target = $region29
    $region28: #{tpu_custom_call.1} parent=1 // pred_region
      _
    $region29: #{tpu_custom_call.1} parent=1 // pred_fallthru
      _
    // Predicated region
    $region30: #{tpu_custom_call.1} parent=1 // pred_check
      _
    $region31: #{tpu_custom_call.1} parent=1 // pred_check_branch
      %76 = sbr.rel (0) target = $region33
    $region32: #{tpu_custom_call.1} parent=1 // pred_region
      %78 = vsyncadd [#allocation9], 0
      %s79 = sshll.u32 %s7, 4
      %s80 = int_to_ptr.hbm [resolvable:$true] %s79
      %s81 = sshll.u32 [#allocation8], 4
      %s82 = int_to_ptr.vmem [resolvable:$true] %s81
      %87 = dma.hbm_to_vmem [thread:$0]  %s80, 16384, %s82, [#allocation9], 256, 256, 16
    $region33: #{tpu_custom_call.1} parent=1 // pred_fallthru
      _
    // Predicated region
    $region34: #{tpu_custom_call.1} parent=1 // pred_check
      _
    $region35: #{tpu_custom_call.1} parent=1 // pred_check_branch
      %89 = sbr.rel (0) target = $region37
    $region36: #{tpu_custom_call.1} parent=1 // pred_region
      _
    $region37: #{tpu_custom_call.1} parent=1 // pred_fallthru
      _
    // Predicated region
    $region38: #{tpu_custom_call.1} parent=1 // pred_check
      _
    $region39: #{tpu_custom_call.1} parent=1 // pred_check_branch
      %91 = sbr.rel (0) target = $region41
    $region40: #{tpu_custom_call.1} parent=1 // pred_region
      %93 = vsyncadd [#allocation9], 0
      %s94 = sshll.u32 %s9, 4
      %s95 = int_to_ptr.hbm [resolvable:$true] %s94
      %s96 = sshll.u32 [#allocation10], 4
      %s97 = int_to_ptr.vmem [resolvable:$true] %s96
      %102 = dma.hbm_to_vmem [thread:$0]  %s95, 8192, %s97, [#allocation9], 256, 256, 16
    $region41: #{tpu_custom_call.1} parent=1 // pred_fallthru
      _
    // Predicated region
    $region42: #{tpu_custom_call.1} parent=1 // pred_check
      _
    $region43: #{tpu_custom_call.1} parent=1 // pred_check_branch
      %104 = sbr.rel (0) target = $region45
    $region44: #{tpu_custom_call.1} parent=1 // pred_region
      _
    $region45: #{tpu_custom_call.1} parent=1 // pred_fallthru
      _
    // Predicated region
    $region46: #{tpu_custom_call.1} parent=1 // pred_check
      _
    $region47: #{tpu_custom_call.1} parent=1 // pred_check_branch
      %106 = sbr.rel (0) target = $region49
    $region48: #{tpu_custom_call.1} parent=1 // pred_region
      %108 = vsyncadd [#allocation12], 0
      %s109 = sshll.u32 %s11, 4
      %s110 = int_to_ptr.hbm [resolvable:$true] %s109
      %s111 = sshll.u32 [#allocation11], 4
      %s112 = int_to_ptr.vmem [resolvable:$true] %s111
      %117 = dma.hbm_to_vmem [thread:$0]  %s110, 16384, %s112, [#allocation12], 256, 256, 16
    $region49: #{tpu_custom_call.1} parent=1 // pred_fallthru
      _
    // Predicated region
    $region50: #{tpu_custom_call.1} parent=1 // pred_check
      _
    $region51: #{tpu_custom_call.1} parent=1 // pred_check_branch
      %119 = sbr.rel (0) target = $region53
    $region52: #{tpu_custom_call.1} parent=1 // pred_region
      _
    $region53: #{tpu_custom_call.1} parent=1 // pred_fallthru
      _
    // Predicated region
    $region54: #{tpu_custom_call.1} parent=1 // pred_check
      _
    $region55: #{tpu_custom_call.1} parent=1 // pred_check_branch
      %121 = sbr.rel (0) target = $region57
    $region56: #{tpu_custom_call.1} parent=1 // pred_region
      _
    $region57: #{tpu_custom_call.1} parent=1 // pred_fallthru
      _
    // Predicated region
    $region58: #{tpu_custom_call.1} parent=1 // pred_check
      _
    $region59: #{tpu_custom_call.1} parent=1 // pred_check_branch
      %123 = sbr.rel (0) target = $region61
    $region60: #{tpu_custom_call.1} parent=1 // pred_region
      _
    $region61: #{tpu_custom_call.1} parent=1 // pred_fallthru
      _
    // Predicated region
    $region62: #{tpu_custom_call.1} parent=1 // pred_check
      _
    $region63: #{tpu_custom_call.1} parent=1 // pred_check_branch
      %125 = sbr.rel (0) target = $region65
    $region64: #{tpu_custom_call.1} parent=1 // pred_region
      _
    $region65: #{tpu_custom_call.1} parent=1 // pred_fallthru
      _
    // Predicated region
    $region66: #{tpu_custom_call.1} parent=1 // pred_check
      _
    $region67: #{tpu_custom_call.1} parent=1 // pred_check_branch
      %127 = sbr.rel (0) target = $region69
    $region68: #{tpu_custom_call.1} parent=1 // pred_region
      _
    $region69: #{tpu_custom_call.1} parent=1 // pred_fallthru
      _
    // Predicated region
    $region70: #{tpu_custom_call.1} parent=1 // pred_check
      _
    $region71: #{tpu_custom_call.1} parent=1 // pred_check_branch
      %129 = sbr.rel (0) target = $region73
    $region72: #{tpu_custom_call.1} parent=1 // pred_region
      _
    $region73: #{tpu_custom_call.1} parent=1 // pred_fallthru
      _
    // Predicated region
    $region74: #{tpu_custom_call.1} parent=1 // pred_check
      _
    $region75: #{tpu_custom_call.1} parent=1 // pred_check_branch
      %131 = sbr.rel (0) target = $region77
    $region76: #{tpu_custom_call.1} parent=1 // pred_region
      %133 = dma.done [#allocation3], 20736
    $region77: #{tpu_custom_call.1} parent=1 // pred_fallthru
      _
    // Predicated region
    $region78: #{tpu_custom_call.1} parent=1 // pred_check
      _
    $region79: #{tpu_custom_call.1} parent=1 // pred_check_branch
      %135 = sbr.rel (0) target = $region81
    $region80: #{tpu_custom_call.1} parent=1 // pred_region
      %137 = dma.done [#allocation6], 20736
    $region81: #{tpu_custom_call.1} parent=1 // pred_fallthru
      _
    // Predicated region
    $region82: #{tpu_custom_call.1} parent=1 // pred_check
      _
    $region83: #{tpu_custom_call.1} parent=1 // pred_check_branch
      %139 = sbr.rel (0) target = $region85
    $region84: #{tpu_custom_call.1} parent=1 // pred_region
      %141 = dma.done [#allocation6], 16384
    $region85: #{tpu_custom_call.1} parent=1 // pred_fallthru
      _
    // Predicated region
    $region86: #{tpu_custom_call.1} parent=1 // pred_check
      _
    $region87: #{tpu_custom_call.1} parent=1 // pred_check_branch
      %143 = sbr.rel (0) target = $region89
    $region88: #{tpu_custom_call.1} parent=1 // pred_region
      %145 = dma.done [#allocation9], 16384
    $region89: #{tpu_custom_call.1} parent=1 // pred_fallthru
      _
    // Predicated region
    $region90: #{tpu_custom_call.1} parent=1 // pred_check
      _
    $region91: #{tpu_custom_call.1} parent=1 // pred_check_branch
      %147 = sbr.rel (0) target = $region93
    $region92: #{tpu_custom_call.1} parent=1 // pred_region
      %149 = dma.done [#allocation9], 8192
    $region93: #{tpu_custom_call.1} parent=1 // pred_fallthru
      _
    // Predicated region
    $region94: #{tpu_custom_call.1} parent=1 // pred_check
      _
    $region95: #{tpu_custom_call.1} parent=1 // pred_check_branch
      %151 = sbr.rel (0) target = $region97
    $region96: #{tpu_custom_call.1} parent=1 // pred_region
      %153 = dma.done [#allocation12], 16384
    $region97: #{tpu_custom_call.1} parent=1 // pred_fallthru
      _
    %v155 = vld [vmem:[%s0] sm:$0xff]
    %v156 = vld [vmem:[%s0 + $0x8] sm:$0xff]
    %v157 = vld [vmem:[%s0 + $0x10] sm:$0xff]
    %v158 = vld [vmem:[%s0 + $0x18] sm:$0xff]
    %v159 = vld [vmem:[%s0 + $0x20] sm:$0xff]
    %v160 = vld [vmem:[%s0 + $0x28] sm:$0xff]
    %v161 = vld [vmem:[%s0 + $0x30] sm:$0xff]
    %v162 = vld [vmem:[%s0 + $0x38] sm:$0xff]
    %v163 = vld [vmem:[%s0 + $0x40] sm:$0xff]
    %v164 = vld [vmem:[%s0 + $0x48] sm:$0xff]
    %v165 = vld [vmem:[%s0 + $0x50] sm:$0xff]
    %v166 = vld [vmem:[%s0 + $0x58] sm:$0xff]
    %v167 = vrot.slane %v155, 4
    %v168 = vadd.f32 %v155, %v167
    %v169 = vrot.slane %v168, 2
    %v170 = vadd.f32 %v168, %v169
    %v171 = vrot.slane %v170, 1
    %v172 = vadd.f32 %v170, %v171
    %v173 = vrot.slane %v156, 4
    %v174 = vadd.f32 %v156, %v173
    %v175 = vrot.slane %v174, 2
    %v176 = vadd.f32 %v174, %v175
    %v177 = vrot.slane %v176, 1
    %v178 = vadd.f32 %v176, %v177
    %v179 = vrot.slane %v157, 4
    %v180 = vadd.f32 %v157, %v179
    %v181 = vrot.slane %v180, 2
    %v182 = vadd.f32 %v180, %v181
    %v183 = vrot.slane %v182, 1
    %v184 = vadd.f32 %v182, %v183
    %v185 = vrot.slane %v158, 4
    %v186 = vadd.f32 %v158, %v185
    %v187 = vrot.slane %v186, 2
    %v188 = vadd.f32 %v186, %v187
    %v189 = vrot.slane %v188, 1
    %v190 = vadd.f32 %v188, %v189
    %v191 = vrot.slane %v159, 4
    %v192 = vadd.f32 %v159, %v191
    %v193 = vrot.slane %v192, 2
    %v194 = vadd.f32 %v192, %v193
    %v195 = vrot.slane %v194, 1
    %v196 = vadd.f32 %v194, %v195
    %vm197 = vcmask 64512
    %v198 = vsel %vm197, %v160, 0.0
    %v199 = vrot.slane %v198, 4
    %v200 = vadd.f32 %v198, %v199
    %v201 = vrot.slane %v200, 2
    %v202 = vadd.f32 %v200, %v201
    %v203 = vrot.slane %v202, 1
    %v204 = vadd.f32 %v202, %v203
    %v205 = vrot.slane %v161, 4
    %v206 = vadd.f32 %v161, %v205
    %v207 = vrot.slane %v206, 2
    %v208 = vadd.f32 %v206, %v207
    %v209 = vrot.slane %v208, 1
    %v210 = vadd.f32 %v208, %v209
    %v211 = vrot.slane %v162, 4
    %v212 = vadd.f32 %v162, %v211
    %v213 = vrot.slane %v212, 2
    %v214 = vadd.f32 %v212, %v213
    %v215 = vrot.slane %v214, 1
    %v216 = vadd.f32 %v214, %v215
    %v217 = vrot.slane %v163, 4
    %v218 = vadd.f32 %v163, %v217
    %v219 = vrot.slane %v218, 2
    %v220 = vadd.f32 %v218, %v219
    %v221 = vrot.slane %v220, 1
    %v222 = vadd.f32 %v220, %v221
    %v223 = vrot.slane %v164, 4
    %v224 = vadd.f32 %v164, %v223
    %v225 = vrot.slane %v224, 2
    %v226 = vadd.f32 %v224, %v225
    %v227 = vrot.slane %v226, 1
    %v228 = vadd.f32 %v226, %v227
    %v229 = vrot.slane %v165, 4
    %v230 = vadd.f32 %v165, %v229
    %v231 = vrot.slane %v230, 2
    %v232 = vadd.f32 %v230, %v231
    %v233 = vrot.slane %v232, 1
    %v234 = vadd.f32 %v232, %v233
    %v235 = vsel %vm197, %v166, 0.0
    %v236 = vrot.slane %v235, 4
    %v237 = vadd.f32 %v235, %v236
    %v238 = vrot.slane %v237, 2
    %v239 = vadd.f32 %v237, %v238
    %v240 = vrot.slane %v239, 1
    %v241 = vadd.f32 %v239, %v240
    %v242 = vrcp.pop 8.0
    %v243 = vmul.f32 8.0, %v242
    %v244 = vsub.f32 1.0, %v243
    %v245 = vmul.f32 %v242, %v244
    %v246 = vadd.f32 %v242, %v245
    %vm247 = vweird.f32 %v242
    %v248 = vsel %vm247, %v242, %v246
    %v249 = vmul.f32 %v172, %v248
    %v250 = vmul.f32 %v178, %v248
    %v251 = vmul.f32 %v184, %v248
    %v252 = vmul.f32 %v190, %v248
    %v253 = vmul.f32 %v196, %v248
    %v254 = vmul.f32 %v204, %v248
    %v255 = vmul.f32 %v210, %v248
    %v256 = vmul.f32 %v216, %v248
    %v257 = vmul.f32 %v222, %v248
    %v258 = vmul.f32 %v228, %v248
    %v259 = vmul.f32 %v234, %v248
    %v260 = vmul.f32 %v241, %v248
    %v261 = vpack.c.bf16 %v249, %v249
    %v262 = vpack.c.bf16 %v250, %v250
    %v263 = vpack.c.bf16 %v251, %v251
    %v264 = vpack.c.bf16 %v252, %v252
    %v265 = vpack.c.bf16 %v253, %v253
    %v266 = vpack.c.bf16 %v254, %v254
    %v267 = vpack.c.bf16 %v255, %v255
    %v268 = vpack.c.bf16 %v256, %v256
    %v269 = vpack.c.bf16 %v257, %v257
    %v270 = vpack.c.bf16 %v258, %v258
    %v271 = vpack.c.bf16 %v259, %v259
    %v272 = vpack.c.bf16 %v260, %v260
    %v273 = vld [vmem:[%s1] sm:$0xff]
    %v274 = vld [vmem:[%s1 + $0x8] sm:$0xff]
    %v275 = vld [vmem:[%s1 + $0x10] sm:$0xff]
    %v276 = vld [vmem:[%s1 + $0x18] sm:$0xff]
    %v277 = vld [vmem:[%s1 + $0x20] sm:$0xff]
    %v278 = vld [vmem:[%s1 + $0x28] sm:$0xff]
    %v279 = vld [vmem:[%s1 + $0x30] sm:$0xff]
    %v280 = vld [vmem:[%s1 + $0x38] sm:$0xff]
    %v281 = vld [vmem:[%s1 + $0x40] sm:$0xff]
    %v282 = vld [vmem:[%s1 + $0x48] sm:$0xff]
    %v283 = vld [vmem:[%s1 + $0x50] sm:$0xff]
    %v284 = vld [vmem:[%s1 + $0x58] sm:$0xff]
    %v285 = vrot.slane %v273, 4
    %v286 = vadd.f32 %v273, %v285
    %v287 = vrot.slane %v286, 2
    %v288 = vadd.f32 %v286, %v287
    %v289 = vrot.slane %v288, 1
    %v290 = vadd.f32 %v288, %v289
    %v291 = vrot.slane %v274, 4
    %v292 = vadd.f32 %v274, %v291
    %v293 = vrot.slane %v292, 2
    %v294 = vadd.f32 %v292, %v293
    %v295 = vrot.slane %v294, 1
    %v296 = vadd.f32 %v294, %v295
    %v297 = vrot.slane %v275, 4
    %v298 = vadd.f32 %v275, %v297
    %v299 = vrot.slane %v298, 2
    %v300 = vadd.f32 %v298, %v299
    %v301 = vrot.slane %v300, 1
    %v302 = vadd.f32 %v300, %v301
    %v303 = vrot.slane %v276, 4
    %v304 = vadd.f32 %v276, %v303
    %v305 = vrot.slane %v304, 2
    %v306 = vadd.f32 %v304, %v305
    %v307 = vrot.slane %v306, 1
    %v308 = vadd.f32 %v306, %v307
    %v309 = vrot.slane %v277, 4
    %v310 = vadd.f32 %v277, %v309
    %v311 = vrot.slane %v310, 2
    %v312 = vadd.f32 %v310, %v311
    %v313 = vrot.slane %v312, 1
    %v314 = vadd.f32 %v312, %v313
    %v315 = vsel %vm197, %v278, 0.0
    %v316 = vrot.slane %v315, 4
    %v317 = vadd.f32 %v315, %v316
    %v318 = vrot.slane %v317, 2
    %v319 = vadd.f32 %v317, %v318
    %v320 = vrot.slane %v319, 1
    %v321 = vadd.f32 %v319, %v320
    %v322 = vrot.slane %v279, 4
    %v323 = vadd.f32 %v279, %v322
    %v324 = vrot.slane %v323, 2
    %v325 = vadd.f32 %v323, %v324
    %v326 = vrot.slane %v325, 1
    %v327 = vadd.f32 %v325, %v326
    %v328 = vrot.slane %v280, 4
    %v329 = vadd.f32 %v280, %v328
    %v330 = vrot.slane %v329, 2
    %v331 = vadd.f32 %v329, %v330
    %v332 = vrot.slane %v331, 1
    %v333 = vadd.f32 %v331, %v332
    %v334 = vrot.slane %v281, 4
    %v335 = vadd.f32 %v281, %v334
    %v336 = vrot.slane %v335, 2
    %v337 = vadd.f32 %v335, %v336
    %v338 = vrot.slane %v337, 1
    %v339 = vadd.f32 %v337, %v338
    %v340 = vrot.slane %v282, 4
    %v341 = vadd.f32 %v282, %v340
    %v342 = vrot.slane %v341, 2
    %v343 = vadd.f32 %v341, %v342
    %v344 = vrot.slane %v343, 1
    %v345 = vadd.f32 %v343, %v344
    %v346 = vrot.slane %v283, 4
    %v347 = vadd.f32 %v283, %v346
    %v348 = vrot.slane %v347, 2
    %v349 = vadd.f32 %v347, %v348
    %v350 = vrot.slane %v349, 1
    %v351 = vadd.f32 %v349, %v350
    %v352 = vsel %vm197, %v284, 0.0
    %v353 = vrot.slane %v352, 4
    %v354 = vadd.f32 %v352, %v353
    %v355 = vrot.slane %v354, 2
    %v356 = vadd.f32 %v354, %v355
    %v357 = vrot.slane %v356, 1
    %v358 = vadd.f32 %v356, %v357
    %v359 = vmul.f32 %v290, %v248
    %v360 = vmul.f32 %v296, %v248
    %v361 = vmul.f32 %v302, %v248
    %v362 = vmul.f32 %v308, %v248
    %v363 = vmul.f32 %v314, %v248
    %v364 = vmul.f32 %v321, %v248
    %v365 = vmul.f32 %v327, %v248
    %v366 = vmul.f32 %v333, %v248
    %v367 = vmul.f32 %v339, %v248
    %v368 = vmul.f32 %v345, %v248
    %v369 = vmul.f32 %v351, %v248
    %v370 = vmul.f32 %v358, %v248
    %v371 = vpack.c.bf16 %v359, %v359
    %v372 = vpack.c.bf16 %v360, %v360
    %v373 = vpack.c.bf16 %v361, %v361
    %v374 = vpack.c.bf16 %v362, %v362
    %v375 = vpack.c.bf16 %v363, %v363
    %v376 = vpack.c.bf16 %v364, %v364
    %v377 = vpack.c.bf16 %v365, %v365
    %v378 = vpack.c.bf16 %v366, %v366
    %v379 = vpack.c.bf16 %v367, %v367
    %v380 = vpack.c.bf16 %v368, %v368
    %v381 = vpack.c.bf16 %v369, %v369
    %v382 = vpack.c.bf16 %v370, %v370
    %v383 = vld [vmem:[#allocation2] sm:$0xff]
    %v384 = vld [vmem:[#allocation2 + $0x8] sm:$0xff]
    %v385 = vld [vmem:[#allocation2 + $0x10] sm:$0xff]
    %v386 = vld [vmem:[#allocation2 + $0x18] sm:$0xff]
    %v387 = vld [vmem:[#allocation2 + $0x20] sm:$0xff]
    %v388 = vld [vmem:[#allocation2 + $0x28] sm:$0xff]
    %v389 = vld [vmem:[#allocation2 + $0x30] sm:$0xff]
    %v390 = vld [vmem:[#allocation2 + $0x38] sm:$0xff]
    %v391 = vld [vmem:[#allocation2 + $0x40] sm:$0xff]
    %v392 = vld [vmem:[#allocation2 + $0x48] sm:$0xff]
    %v393 = vld [vmem:[#allocation2 + $0x50] sm:$0xff]
    %v394 = vld [vmem:[#allocation2 + $0x58] sm:$0xff]
    %v395 = vld [vmem:[#allocation2 + $0x60] sm:$0xff]
    %v396 = vld [vmem:[#allocation2 + $0x68] sm:$0xff]
    %v397 = vld [vmem:[#allocation2 + $0x70] sm:$0xff]
    %v398 = vld [vmem:[#allocation2 + $0x78] sm:$0xff]
    %v399 = vld [vmem:[#allocation2 + $0x80] sm:$0xff]
    %v400 = vld [vmem:[#allocation2 + $0x88] sm:$0xff]
    %v401 = vld [vmem:[#allocation2 + $0x90] sm:$0xff]
    %v402 = vld [vmem:[#allocation2 + $0x98] sm:$0xff]
    %v403 = vld [vmem:[#allocation2 + $0xa0] sm:$0xff]
    %v404 = vld [vmem:[#allocation2 + $0xa8] sm:$0xff]
    %v405 = vld [vmem:[#allocation2 + $0xb0] sm:$0xff]
    %v406 = vld [vmem:[#allocation2 + $0xb8] sm:$0xff]
    %v407 = vld [vmem:[#allocation2 + $0xc0] sm:$0xff]
    %v408 = vld [vmem:[#allocation2 + $0xc8] sm:$0xff]
    %v409 = vld [vmem:[#allocation2 + $0xd0] sm:$0xff]
    %v410 = vld [vmem:[#allocation2 + $0xd8] sm:$0xff]
    %v411 = vld [vmem:[#allocation2 + $0xe0] sm:$0xff]
    %v412 = vld [vmem:[#allocation2 + $0xe8] sm:$0xff]
    %v413 = vld [vmem:[#allocation2 + $0xf0] sm:$0xff]
    %v414 = vld [vmem:[#allocation2 + $0xf8] sm:$0xff]
    %v415 = vld [vmem:[#allocation2 + $0x100] sm:$0xff]
    %v416 = vld [vmem:[#allocation2 + $0x108] sm:$0xff]
    %v417 = vld [vmem:[#allocation2 + $0x110] sm:$0xff]
    %v418 = vld [vmem:[#allocation2 + $0x118] sm:$0xff]
    %v419 = vld [vmem:[#allocation2 + $0x120] sm:$0xff]
    %v420 = vld [vmem:[#allocation2 + $0x128] sm:$0xff]
    %v421 = vld [vmem:[#allocation2 + $0x130] sm:$0xff]
    %v422 = vld [vmem:[#allocation2 + $0x138] sm:$0xff]
    %v423 = vld [vmem:[#allocation2 + $0x140] sm:$0xff]
    %v424 = vld [vmem:[#allocation2 + $0x148] sm:$0xff]
    %v425 = vld [vmem:[#allocation2 + $0x150] sm:$0xff]
    %v426 = vld [vmem:[#allocation2 + $0x158] sm:$0xff]
    %v427 = vld [vmem:[#allocation2 + $0x160] sm:$0xff]
    %v428 = vld [vmem:[#allocation2 + $0x168] sm:$0xff]
    %v429 = vld [vmem:[#allocation2 + $0x170] sm:$0xff]
    %v430 = vld [vmem:[#allocation2 + $0x178] sm:$0xff]
    %v431 = vld [vmem:[#allocation2 + $0x180] sm:$0xff]
    %v432 = vld [vmem:[#allocation2 + $0x188] sm:$0xff]
    %v433 = vld [vmem:[#allocation2 + $0x190] sm:$0xff]
    %v434 = vld [vmem:[#allocation2 + $0x198] sm:$0xff]
    %v435 = vld [vmem:[#allocation2 + $0x1a0] sm:$0xff]
    %v436 = vld [vmem:[#allocation2 + $0x1a8] sm:$0xff]
    %v437 = vld [vmem:[#allocation2 + $0x1b0] sm:$0xff]
    %v438 = vld [vmem:[#allocation2 + $0x1b8] sm:$0xff]
    %v439 = vld [vmem:[#allocation2 + $0x1c0] sm:$0xff]
    %v440 = vld [vmem:[#allocation2 + $0x1c8] sm:$0xff]
    %v441 = vld [vmem:[#allocation2 + $0x1d0] sm:$0xff]
    %v442 = vld [vmem:[#allocation2 + $0x1d8] sm:$0xff]
    %v443 = vld [vmem:[#allocation2 + $0x1e0] sm:$0xff]
    %v444 = vld [vmem:[#allocation2 + $0x1e8] sm:$0xff]
    %v445 = vld [vmem:[#allocation2 + $0x1f0] sm:$0xff]
    %v446 = vld [vmem:[#allocation2 + $0x1f8] sm:$0xff]
    %v447 = vld [vmem:[#allocation2 + $0x200] sm:$0xff]
    %v448 = vld [vmem:[#allocation2 + $0x208] sm:$0xff]
    %v449 = vld [vmem:[#allocation2 + $0x210] sm:$0xff]
    %v450 = vld [vmem:[#allocation2 + $0x218] sm:$0xff]
    %v451 = vld [vmem:[#allocation2 + $0x220] sm:$0xff]
    %v452 = vld [vmem:[#allocation2 + $0x228] sm:$0xff]
    %v453 = vld [vmem:[#allocation2 + $0x230] sm:$0xff]
    %v454 = vld [vmem:[#allocation2 + $0x238] sm:$0xff]
    %v455 = vld [vmem:[#allocation2 + $0x240] sm:$0xff]
    %v456 = vld [vmem:[#allocation2 + $0x248] sm:$0xff]
    %v457 = vld [vmem:[#allocation2 + $0x250] sm:$0xff]
    %v458 = vld [vmem:[#allocation2 + $0x258] sm:$0xff]
    %v459 = vld [vmem:[#allocation2 + $0x260] sm:$0xff]
    %v460 = vld [vmem:[#allocation2 + $0x268] sm:$0xff]
    %v461 = vld [vmem:[#allocation2 + $0x270] sm:$0xff]
    %v462 = vld [vmem:[#allocation2 + $0x278] sm:$0xff]
    %v463 = vld [vmem:[#allocation2 + $0x280] sm:$0xff]
    %v464 = vld [vmem:[#allocation2 + $0x288] sm:$0xff]
    %v465 = vld [vmem:[#allocation2 + $0x290] sm:$0xff]
    %v466 = vld [vmem:[#allocation2 + $0x298] sm:$0xff]
    %v467 = vld [vmem:[#allocation2 + $0x2a0] sm:$0xff]
    %v468 = vld [vmem:[#allocation2 + $0x2a8] sm:$0xff]
    %v469 = vld [vmem:[#allocation2 + $0x2b0] sm:$0xff]
    %v470 = vld [vmem:[#allocation2 + $0x2b8] sm:$0xff]
    %v471 = vld [vmem:[#allocation2 + $0x2c0] sm:$0xff]
    %v472 = vld [vmem:[#allocation2 + $0x2c8] sm:$0xff]
    %v473 = vld [vmem:[#allocation2 + $0x2d0] sm:$0xff]
    %v474 = vld [vmem:[#allocation2 + $0x2d8] sm:$0xff]
    %v475 = vld [vmem:[#allocation2 + $0x2e0] sm:$0xff]
    %v476 = vld [vmem:[#allocation2 + $0x2e8] sm:$0xff]
    %v477 = vld [vmem:[#allocation2 + $0x2f0] sm:$0xff]
    %v478 = vld [vmem:[#allocation2 + $0x2f8] sm:$0xff]
    %v479 = vld [vmem:[#allocation2 + $0x300] sm:$0xff]
    %v480 = vld [vmem:[#allocation2 + $0x308] sm:$0xff]
    %v481 = vld [vmem:[#allocation2 + $0x310] sm:$0xff]
    %v482 = vld [vmem:[#allocation2 + $0x318] sm:$0xff]
    %v483 = vld [vmem:[#allocation2 + $0x320] sm:$0xff]
    %v484 = vld [vmem:[#allocation2 + $0x328] sm:$0xff]
    %v485 = vld [vmem:[#allocation2 + $0x330] sm:$0xff]
    %v486 = vld [vmem:[#allocation2 + $0x338] sm:$0xff]
    %v487 = vld [vmem:[#allocation2 + $0x340] sm:$0xff]
    %v488 = vld [vmem:[#allocation2 + $0x348] sm:$0xff]
    %v489 = vld [vmem:[#allocation2 + $0x350] sm:$0xff]
    %v490 = vld [vmem:[#allocation2 + $0x358] sm:$0xff]
    %v491 = vld [vmem:[#allocation2 + $0x360] sm:$0xff]
    %v492 = vld [vmem:[#allocation2 + $0x368] sm:$0xff]
    %v493 = vld [vmem:[#allocation2 + $0x370] sm:$0xff]
    %v494 = vld [vmem:[#allocation2 + $0x378] sm:$0xff]
    %v495 = vld [vmem:[#allocation2 + $0x380] sm:$0xff]
    %v496 = vld [vmem:[#allocation2 + $0x388] sm:$0xff]
    %v497 = vld [vmem:[#allocation2 + $0x390] sm:$0xff]
    %v498 = vld [vmem:[#allocation2 + $0x398] sm:$0xff]
    %v499 = vld [vmem:[#allocation2 + $0x3a0] sm:$0xff]
    %v500 = vld [vmem:[#allocation2 + $0x3a8] sm:$0xff]
    %v501 = vld [vmem:[#allocation2 + $0x3b0] sm:$0xff]
    %v502 = vld [vmem:[#allocation2 + $0x3b8] sm:$0xff]
    %v503 = vld [vmem:[#allocation2 + $0x3c0] sm:$0xff]
    %v504 = vld [vmem:[#allocation2 + $0x3c8] sm:$0xff]
    %v505 = vld [vmem:[#allocation2 + $0x3d0] sm:$0xff]
    %v506 = vld [vmem:[#allocation2 + $0x3d8] sm:$0xff]
    %v507 = vld [vmem:[#allocation2 + $0x3e0] sm:$0xff]
    %v508 = vld [vmem:[#allocation2 + $0x3e8] sm:$0xff]
    %v509 = vld [vmem:[#allocation2 + $0x3f0] sm:$0xff]
    %v510 = vld [vmem:[#allocation2 + $0x3f8] sm:$0xff]
    %v511 = vld [vmem:[#allocation2 + $0x400] sm:$0xff]
    %v512 = vld [vmem:[#allocation2 + $0x408] sm:$0xff]
    %v513 = vld [vmem:[#allocation2 + $0x410] sm:$0xff]
    %v514 = vld [vmem:[#allocation2 + $0x418] sm:$0xff]
    %v515 = vld [vmem:[#allocation2 + $0x420] sm:$0xff]
    %v516 = vld [vmem:[#allocation2 + $0x428] sm:$0xff]
    %v517 = vld [vmem:[#allocation2 + $0x430] sm:$0xff]
    %v518 = vld [vmem:[#allocation2 + $0x438] sm:$0xff]
    %v519 = vld [vmem:[#allocation2 + $0x440] sm:$0xff]
    %v520 = vld [vmem:[#allocation2 + $0x448] sm:$0xff]
    %v521 = vld [vmem:[#allocation2 + $0x450] sm:$0xff]
    %v522 = vld [vmem:[#allocation2 + $0x458] sm:$0xff]
    %v523 = vld [vmem:[#allocation2 + $0x460] sm:$0xff]
    %v524 = vld [vmem:[#allocation2 + $0x468] sm:$0xff]
    %v525 = vld [vmem:[#allocation2 + $0x470] sm:$0xff]
    %v526 = vld [vmem:[#allocation2 + $0x478] sm:$0xff]
    %v527 = vld [vmem:[#allocation2 + $0x480] sm:$0xff]
    %v528 = vld [vmem:[#allocation2 + $0x488] sm:$0xff]
    %v529 = vld [vmem:[#allocation2 + $0x490] sm:$0xff]
    %v530 = vld [vmem:[#allocation2 + $0x498] sm:$0xff]
    %v531 = vld [vmem:[#allocation2 + $0x4a0] sm:$0xff]
    %v532 = vld [vmem:[#allocation2 + $0x4a8] sm:$0xff]
    %v533 = vld [vmem:[#allocation2 + $0x4b0] sm:$0xff]
    %v534 = vld [vmem:[#allocation2 + $0x4b8] sm:$0xff]
    %v535 = vld [vmem:[#allocation2 + $0x4c0] sm:$0xff]
    %v536 = vld [vmem:[#allocation2 + $0x4c8] sm:$0xff]
    %v537 = vld [vmem:[#allocation2 + $0x4d0] sm:$0xff]
    %v538 = vld [vmem:[#allocation2 + $0x4d8] sm:$0xff]
    %v539 = vld [vmem:[#allocation2 + $0x4e0] sm:$0xff]
    %v540 = vld [vmem:[#allocation2 + $0x4e8] sm:$0xff]
    %v541 = vld [vmem:[#allocation2 + $0x4f0] sm:$0xff]
    %v542 = vld [vmem:[#allocation2 + $0x4f8] sm:$0xff]
    %v543 = vld [vmem:[#allocation2 + $0x500] sm:$0xff]
    %v544 = vld [vmem:[#allocation2 + $0x508] sm:$0xff]
    %v545 = vld [vmem:[#allocation5] sm:$0xff]
    %v546 = vld [vmem:[#allocation5 + $0x8] sm:$0xff]
    %v547 = vld [vmem:[#allocation5 + $0x10] sm:$0xff]
    %v548 = vld [vmem:[#allocation5 + $0x18] sm:$0xff]
    %v549 = vld [vmem:[#allocation5 + $0x20] sm:$0xff]
    %v550 = vld [vmem:[#allocation5 + $0x28] sm:$0xff]
    %v551 = vld [vmem:[#allocation5 + $0x30] sm:$0xff]
    %v552 = vld [vmem:[#allocation5 + $0x38] sm:$0xff]
    %v553 = vld [vmem:[#allocation5 + $0x40] sm:$0xff]
    %v554 = vld [vmem:[#allocation5 + $0x48] sm:$0xff]
    %v555 = vld [vmem:[#allocation5 + $0x50] sm:$0xff]
    %v556 = vld [vmem:[#allocation5 + $0x58] sm:$0xff]
    %v557 = vld [vmem:[#allocation5 + $0x60] sm:$0xff]
    %v558 = vld [vmem:[#allocation5 + $0x68] sm:$0xff]
    %v559 = vld [vmem:[#allocation5 + $0x70] sm:$0xff]
    %v560 = vld [vmem:[#allocation5 + $0x78] sm:$0xff]
    %v561 = vld [vmem:[#allocation5 + $0x80] sm:$0xff]
    %v562 = vld [vmem:[#allocation5 + $0x88] sm:$0xff]
    %v563 = vld [vmem:[#allocation5 + $0x90] sm:$0xff]
    %v564 = vld [vmem:[#allocation5 + $0x98] sm:$0xff]
    %v565 = vld [vmem:[#allocation5 + $0xa0] sm:$0xff]
    %v566 = vld [vmem:[#allocation5 + $0xa8] sm:$0xff]
    %v567 = vld [vmem:[#allocation5 + $0xb0] sm:$0xff]
    %v568 = vld [vmem:[#allocation5 + $0xb8] sm:$0xff]
    %v569 = vld [vmem:[#allocation5 + $0xc0] sm:$0xff]
    %v570 = vld [vmem:[#allocation5 + $0xc8] sm:$0xff]
    %v571 = vld [vmem:[#allocation5 + $0xd0] sm:$0xff]
    %v572 = vld [vmem:[#allocation5 + $0xd8] sm:$0xff]
    %v573 = vld [vmem:[#allocation5 + $0xe0] sm:$0xff]
    %v574 = vld [vmem:[#allocation5 + $0xe8] sm:$0xff]
    %v575 = vld [vmem:[#allocation5 + $0xf0] sm:$0xff]
    %v576 = vld [vmem:[#allocation5 + $0xf8] sm:$0xff]
    %v577 = vld [vmem:[#allocation5 + $0x100] sm:$0xff]
    %v578 = vld [vmem:[#allocation5 + $0x108] sm:$0xff]
    %v579 = vld [vmem:[#allocation5 + $0x110] sm:$0xff]
    %v580 = vld [vmem:[#allocation5 + $0x118] sm:$0xff]
    %v581 = vld [vmem:[#allocation5 + $0x120] sm:$0xff]
    %v582 = vld [vmem:[#allocation5 + $0x128] sm:$0xff]
    %v583 = vld [vmem:[#allocation5 + $0x130] sm:$0xff]
    %v584 = vld [vmem:[#allocation5 + $0x138] sm:$0xff]
    %v585 = vld [vmem:[#allocation5 + $0x140] sm:$0xff]
    %v586 = vld [vmem:[#allocation5 + $0x148] sm:$0xff]
    %v587 = vld [vmem:[#allocation5 + $0x150] sm:$0xff]
    %v588 = vld [vmem:[#allocation5 + $0x158] sm:$0xff]
    %v589 = vld [vmem:[#allocation5 + $0x160] sm:$0xff]
    %v590 = vld [vmem:[#allocation5 + $0x168] sm:$0xff]
    %v591 = vld [vmem:[#allocation5 + $0x170] sm:$0xff]
    %v592 = vld [vmem:[#allocation5 + $0x178] sm:$0xff]
    %v593 = vld [vmem:[#allocation5 + $0x180] sm:$0xff]
    %v594 = vld [vmem:[#allocation5 + $0x188] sm:$0xff]
    %v595 = vld [vmem:[#allocation5 + $0x190] sm:$0xff]
    %v596 = vld [vmem:[#allocation5 + $0x198] sm:$0xff]
    %v597 = vld [vmem:[#allocation5 + $0x1a0] sm:$0xff]
    %v598 = vld [vmem:[#allocation5 + $0x1a8] sm:$0xff]
    %v599 = vld [vmem:[#allocation5 + $0x1b0] sm:$0xff]
    %v600 = vld [vmem:[#allocation5 + $0x1b8] sm:$0xff]
    %v601 = vld [vmem:[#allocation5 + $0x1c0] sm:$0xff]
    %v602 = vld [vmem:[#allocation5 + $0x1c8] sm:$0xff]
    %v603 = vld [vmem:[#allocation5 + $0x1d0] sm:$0xff]
    %v604 = vld [vmem:[#allocation5 + $0x1d8] sm:$0xff]
    %v605 = vld [vmem:[#allocation5 + $0x1e0] sm:$0xff]
    %v606 = vld [vmem:[#allocation5 + $0x1e8] sm:$0xff]
    %v607 = vld [vmem:[#allocation5 + $0x1f0] sm:$0xff]
    %v608 = vld [vmem:[#allocation5 + $0x1f8] sm:$0xff]
    %v609 = vld [vmem:[#allocation5 + $0x200] sm:$0xff]
    %v610 = vld [vmem:[#allocation5 + $0x208] sm:$0xff]
    %v611 = vld [vmem:[#allocation5 + $0x210] sm:$0xff]
    %v612 = vld [vmem:[#allocation5 + $0x218] sm:$0xff]
    %v613 = vld [vmem:[#allocation5 + $0x220] sm:$0xff]
    %v614 = vld [vmem:[#allocation5 + $0x228] sm:$0xff]
    %v615 = vld [vmem:[#allocation5 + $0x230] sm:$0xff]
    %v616 = vld [vmem:[#allocation5 + $0x238] sm:$0xff]
    %v617 = vld [vmem:[#allocation5 + $0x240] sm:$0xff]
    %v618 = vld [vmem:[#allocation5 + $0x248] sm:$0xff]
    %v619 = vld [vmem:[#allocation5 + $0x250] sm:$0xff]
    %v620 = vld [vmem:[#allocation5 + $0x258] sm:$0xff]
    %v621 = vld [vmem:[#allocation5 + $0x260] sm:$0xff]
    %v622 = vld [vmem:[#allocation5 + $0x268] sm:$0xff]
    %v623 = vld [vmem:[#allocation5 + $0x270] sm:$0xff]
    %v624 = vld [vmem:[#allocation5 + $0x278] sm:$0xff]
    %v625 = vld [vmem:[#allocation5 + $0x280] sm:$0xff]
    %v626 = vld [vmem:[#allocation5 + $0x288] sm:$0xff]
    %v627 = vld [vmem:[#allocation5 + $0x290] sm:$0xff]
    %v628 = vld [vmem:[#allocation5 + $0x298] sm:$0xff]
    %v629 = vld [vmem:[#allocation5 + $0x2a0] sm:$0xff]
    %v630 = vld [vmem:[#allocation5 + $0x2a8] sm:$0xff]
    %v631 = vld [vmem:[#allocation5 + $0x2b0] sm:$0xff]
    %v632 = vld [vmem:[#allocation5 + $0x2b8] sm:$0xff]
    %v633 = vld [vmem:[#allocation5 + $0x2c0] sm:$0xff]
    %v634 = vld [vmem:[#allocation5 + $0x2c8] sm:$0xff]
    %v635 = vld [vmem:[#allocation5 + $0x2d0] sm:$0xff]
    %v636 = vld [vmem:[#allocation5 + $0x2d8] sm:$0xff]
    %v637 = vld [vmem:[#allocation5 + $0x2e0] sm:$0xff]
    %v638 = vld [vmem:[#allocation5 + $0x2e8] sm:$0xff]
    %v639 = vld [vmem:[#allocation5 + $0x2f0] sm:$0xff]
    %v640 = vld [vmem:[#allocation5 + $0x2f8] sm:$0xff]
    %v641 = vld [vmem:[#allocation5 + $0x300] sm:$0xff]
    %v642 = vld [vmem:[#allocation5 + $0x308] sm:$0xff]
    %v643 = vld [vmem:[#allocation5 + $0x310] sm:$0xff]
    %v644 = vld [vmem:[#allocation5 + $0x318] sm:$0xff]
    %v645 = vld [vmem:[#allocation5 + $0x320] sm:$0xff]
    %v646 = vld [vmem:[#allocation5 + $0x328] sm:$0xff]
    %v647 = vld [vmem:[#allocation5 + $0x330] sm:$0xff]
    %v648 = vld [vmem:[#allocation5 + $0x338] sm:$0xff]
    %v649 = vld [vmem:[#allocation5 + $0x340] sm:$0xff]
    %v650 = vld [vmem:[#allocation5 + $0x348] sm:$0xff]
    %v651 = vld [vmem:[#allocation5 + $0x350] sm:$0xff]
    %v652 = vld [vmem:[#allocation5 + $0x358] sm:$0xff]
    %v653 = vld [vmem:[#allocation5 + $0x360] sm:$0xff]
    %v654 = vld [vmem:[#allocation5 + $0x368] sm:$0xff]
    %v655 = vld [vmem:[#allocation5 + $0x370] sm:$0xff]
    %v656 = vld [vmem:[#allocation5 + $0x378] sm:$0xff]
    %v657 = vld [vmem:[#allocation5 + $0x380] sm:$0xff]
    %v658 = vld [vmem:[#allocation5 + $0x388] sm:$0xff]
    %v659 = vld [vmem:[#allocation5 + $0x390] sm:$0xff]
    %v660 = vld [vmem:[#allocation5 + $0x398] sm:$0xff]
    %v661 = vld [vmem:[#allocation5 + $0x3a0] sm:$0xff]
    %v662 = vld [vmem:[#allocation5 + $0x3a8] sm:$0xff]
    %v663 = vld [vmem:[#allocation5 + $0x3b0] sm:$0xff]
    %v664 = vld [vmem:[#allocation5 + $0x3b8] sm:$0xff]
    %v665 = vld [vmem:[#allocation5 + $0x3c0] sm:$0xff]
    %v666 = vld [vmem:[#allocation5 + $0x3c8] sm:$0xff]
    %v667 = vld [vmem:[#allocation5 + $0x3d0] sm:$0xff]
    %v668 = vld [vmem:[#allocation5 + $0x3d8] sm:$0xff]
    %v669 = vld [vmem:[#allocation5 + $0x3e0] sm:$0xff]
    %v670 = vld [vmem:[#allocation5 + $0x3e8] sm:$0xff]
    %v671 = vld [vmem:[#allocation5 + $0x3f0] sm:$0xff]
    %v672 = vld [vmem:[#allocation5 + $0x3f8] sm:$0xff]
    %v673 = vld [vmem:[#allocation5 + $0x400] sm:$0xff]
    %v674 = vld [vmem:[#allocation5 + $0x408] sm:$0xff]
    %v675 = vld [vmem:[#allocation5 + $0x410] sm:$0xff]
    %v676 = vld [vmem:[#allocation5 + $0x418] sm:$0xff]
    %v677 = vld [vmem:[#allocation5 + $0x420] sm:$0xff]
    %v678 = vld [vmem:[#allocation5 + $0x428] sm:$0xff]
    %v679 = vld [vmem:[#allocation5 + $0x430] sm:$0xff]
    %v680 = vld [vmem:[#allocation5 + $0x438] sm:$0xff]
    %v681 = vld [vmem:[#allocation5 + $0x440] sm:$0xff]
    %v682 = vld [vmem:[#allocation5 + $0x448] sm:$0xff]
    %v683 = vld [vmem:[#allocation5 + $0x450] sm:$0xff]
    %v684 = vld [vmem:[#allocation5 + $0x458] sm:$0xff]
    %v685 = vld [vmem:[#allocation5 + $0x460] sm:$0xff]
    %v686 = vld [vmem:[#allocation5 + $0x468] sm:$0xff]
    %v687 = vld [vmem:[#allocation5 + $0x470] sm:$0xff]
    %v688 = vld [vmem:[#allocation5 + $0x478] sm:$0xff]
    %v689 = vld [vmem:[#allocation5 + $0x480] sm:$0xff]
    %v690 = vld [vmem:[#allocation5 + $0x488] sm:$0xff]
    %v691 = vld [vmem:[#allocation5 + $0x490] sm:$0xff]
    %v692 = vld [vmem:[#allocation5 + $0x498] sm:$0xff]
    %v693 = vld [vmem:[#allocation5 + $0x4a0] sm:$0xff]
    %v694 = vld [vmem:[#allocation5 + $0x4a8] sm:$0xff]
    %v695 = vld [vmem:[#allocation5 + $0x4b0] sm:$0xff]
    %v696 = vld [vmem:[#allocation5 + $0x4b8] sm:$0xff]
    %v697 = vld [vmem:[#allocation5 + $0x4c0] sm:$0xff]
    %v698 = vld [vmem:[#allocation5 + $0x4c8] sm:$0xff]
    %v699 = vld [vmem:[#allocation5 + $0x4d0] sm:$0xff]
    %v700 = vld [vmem:[#allocation5 + $0x4d8] sm:$0xff]
    %v701 = vld [vmem:[#allocation5 + $0x4e0] sm:$0xff]
    %v702 = vld [vmem:[#allocation5 + $0x4e8] sm:$0xff]
    %v703 = vld [vmem:[#allocation5 + $0x4f0] sm:$0xff]
    %v704 = vld [vmem:[#allocation5 + $0x4f8] sm:$0xff]
    %v705 = vld [vmem:[#allocation5 + $0x500] sm:$0xff]
    %v706 = vld [vmem:[#allocation5 + $0x508] sm:$0xff]
    %v719 = vunpack.c.l.b16 %v371
    %v720 = vunpack.c.l.b16 %v372
    %v721 = vunpack.c.l.b16 %v373
    %v722 = vunpack.c.l.b16 %v374
    %v723 = vunpack.c.l.b16 %v375
    %v724 = vunpack.c.l.b16 %v376
    %v725 = vunpack.c.l.b16 %v377
    %v726 = vunpack.c.l.b16 %v378
    %v727 = vunpack.c.l.b16 %v379
    %v728 = vunpack.c.l.b16 %v380
    %v729 = vunpack.c.l.b16 %v381
    %v730 = vunpack.c.l.b16 %v382
    %vm731 = vcmask 1041409
    %v732 = vsel %vm731, %v725, %v719
    %v733 = vsel %vm731, %v726, %v720
    %v734 = vsel %vm731, %v727, %v721
    %v735 = vsel %vm731, %v728, %v722
    %v736 = vsel %vm731, %v729, %v723
    %v737 = vsel %vm731, %v730, %v724
    %v738 = vpack.c.b16 %v732, %v732
    %v739 = vpack.c.b16 %v733, %v733
    %v740 = vpack.c.b16 %v734, %v734
    %v741 = vpack.c.b16 %v735, %v735
    %v742 = vpack.c.b16 %v736, %v736
    %v743 = vpack.c.b16 %v737, %v737
    %v911 = vunpack.c.l.b16 %v545
    %v912 = vunpack.c.h.b16 %v545
    %v913 = vunpack.c.l.b16 %v546
    %v914 = vunpack.c.h.b16 %v546
    %v915 = vunpack.c.l.b16 %v547
    %v916 = vunpack.c.h.b16 %v547
    %v917 = vunpack.c.l.b16 %v548
    %v918 = vunpack.c.h.b16 %v548
    %v919 = vunpack.c.l.b16 %v549
    %v920 = vunpack.c.h.b16 %v549
    %v921 = vunpack.c.l.b16 %v550
    %v922 = vunpack.c.h.b16 %v550
    %v923 = vunpack.c.l.b16 %v551
    %v924 = vunpack.c.h.b16 %v551
    %v925 = vunpack.c.l.b16 %v552
    %v926 = vunpack.c.h.b16 %v552
    %v927 = vunpack.c.l.b16 %v553
    %v928 = vunpack.c.h.b16 %v553
    %v929 = vunpack.c.l.b16 %v554
    %v930 = vunpack.c.h.b16 %v554
    %v931 = vunpack.c.l.b16 %v555
    %v932 = vunpack.c.h.b16 %v555
    %v933 = vunpack.c.l.b16 %v556
    %v934 = vunpack.c.h.b16 %v556
    %v935 = vunpack.c.l.b16 %v557
    %v936 = vunpack.c.h.b16 %v557
    %v937 = vunpack.c.l.b16 %v558
    %v938 = vunpack.c.h.b16 %v558
    %v939 = vunpack.c.l.b16 %v559
    %v940 = vunpack.c.h.b16 %v559
    %v941 = vunpack.c.l.b16 %v560
    %v942 = vunpack.c.h.b16 %v560
    %v943 = vunpack.c.l.b16 %v561
    %v944 = vunpack.c.h.b16 %v561
    %v945 = vunpack.c.l.b16 %v562
    %v946 = vunpack.c.h.b16 %v562
    %v947 = vunpack.c.l.b16 %v563
    %v948 = vunpack.c.h.b16 %v563
    %v949 = vunpack.c.l.b16 %v564
    %v950 = vunpack.c.h.b16 %v564
    %v951 = vunpack.c.l.b16 %v565
    %v952 = vunpack.c.h.b16 %v565
    %v953 = vunpack.c.l.b16 %v566
    %v954 = vunpack.c.h.b16 %v566
    %v955 = vunpack.c.l.b16 %v567
    %v956 = vunpack.c.h.b16 %v567
    %v957 = vunpack.c.l.b16 %v568
    %v958 = vunpack.c.h.b16 %v568
    %v959 = vunpack.c.l.b16 %v569
    %v960 = vunpack.c.h.b16 %v569
    %v961 = vunpack.c.l.b16 %v570
    %v962 = vunpack.c.h.b16 %v570
    %v963 = vunpack.c.l.b16 %v571
    %v964 = vunpack.c.h.b16 %v571
    %v965 = vunpack.c.l.b16 %v572
    %v966 = vunpack.c.h.b16 %v572
    %v967 = vunpack.c.l.b16 %v573
    %v968 = vunpack.c.h.b16 %v573
    %v969 = vunpack.c.l.b16 %v574
    %v970 = vunpack.c.h.b16 %v574
    %v971 = vunpack.c.l.b16 %v575
    %v972 = vunpack.c.h.b16 %v575
    %v973 = vunpack.c.l.b16 %v576
    %v974 = vunpack.c.h.b16 %v576
    %v975 = vunpack.c.l.b16 %v577
    %v976 = vunpack.c.h.b16 %v577
    %v977 = vunpack.c.l.b16 %v578
    %v978 = vunpack.c.h.b16 %v578
    %v979 = vunpack.c.l.b16 %v579
    %v980 = vunpack.c.h.b16 %v579
    %v981 = vunpack.c.l.b16 %v580
    %v982 = vunpack.c.h.b16 %v580
    %v983 = vunpack.c.l.b16 %v581
    %v984 = vunpack.c.h.b16 %v581
    %v985 = vunpack.c.l.b16 %v582
    %v986 = vunpack.c.h.b16 %v582
    %v987 = vunpack.c.l.b16 %v583
    %v988 = vunpack.c.h.b16 %v583
    %v989 = vunpack.c.l.b16 %v584
    %v990 = vunpack.c.h.b16 %v584
    %v991 = vunpack.c.l.b16 %v585
    %v992 = vunpack.c.h.b16 %v585
    %v993 = vunpack.c.l.b16 %v586
    %v994 = vunpack.c.h.b16 %v586
    %v995 = vunpack.c.l.b16 %v587
    %v996 = vunpack.c.h.b16 %v587
    %v997 = vunpack.c.l.b16 %v588
    %v998 = vunpack.c.h.b16 %v588
    %v999 = vunpack.c.l.b16 %v589
    %v1000 = vunpack.c.h.b16 %v589
    %v1001 = vunpack.c.l.b16 %v590
    %v1002 = vunpack.c.h.b16 %v590
    %v1003 = vunpack.c.l.b16 %v591
    %v1004 = vunpack.c.h.b16 %v591
    %v1005 = vunpack.c.l.b16 %v592
    %v1006 = vunpack.c.h.b16 %v592
    %v1007 = vunpack.c.l.b16 %v593
    %v1008 = vunpack.c.h.b16 %v593
    %v1009 = vunpack.c.l.b16 %v594
    %v1010 = vunpack.c.h.b16 %v594
    %v1011 = vunpack.c.l.b16 %v595
    %v1012 = vunpack.c.h.b16 %v595
    %v1013 = vunpack.c.l.b16 %v596
    %v1014 = vunpack.c.h.b16 %v596
    %v1015 = vunpack.c.l.b16 %v597
    %v1016 = vunpack.c.h.b16 %v597
    %v1017 = vunpack.c.l.b16 %v598
    %v1018 = vunpack.c.h.b16 %v598
    %v1019 = vunpack.c.l.b16 %v599
    %v1020 = vunpack.c.h.b16 %v599
    %v1021 = vunpack.c.l.b16 %v600
    %v1022 = vunpack.c.h.b16 %v600
    %v1023 = vunpack.c.l.b16 %v601
    %v1024 = vunpack.c.h.b16 %v601
    %v1025 = vunpack.c.l.b16 %v602
    %v1026 = vunpack.c.h.b16 %v602
    %v1027 = vunpack.c.l.b16 %v603
    %v1028 = vunpack.c.h.b16 %v603
    %v1029 = vunpack.c.l.b16 %v604
    %v1030 = vunpack.c.h.b16 %v604
    %v1031 = vunpack.c.l.b16 %v605
    %v1032 = vunpack.c.h.b16 %v605
    %v1033 = vunpack.c.l.b16 %v606
    %v1034 = vunpack.c.h.b16 %v606
    %v1035 = vunpack.c.l.b16 %v607
    %v1036 = vunpack.c.h.b16 %v607
    %v1037 = vunpack.c.l.b16 %v608
    %v1038 = vunpack.c.h.b16 %v608
    %v1039 = vunpack.c.l.b16 %v609
    %v1040 = vunpack.c.h.b16 %v609
    %v1041 = vunpack.c.l.b16 %v610
    %v1042 = vunpack.c.h.b16 %v610
    %v1043 = vunpack.c.l.b16 %v611
    %v1044 = vunpack.c.h.b16 %v611
    %v1045 = vunpack.c.l.b16 %v612
    %v1046 = vunpack.c.h.b16 %v612
    %v1047 = vunpack.c.l.b16 %v613
    %v1048 = vunpack.c.h.b16 %v613
    %v1049 = vunpack.c.l.b16 %v614
    %v1050 = vunpack.c.h.b16 %v614
    %v1051 = vunpack.c.l.b16 %v615
    %v1052 = vunpack.c.h.b16 %v615
    %v1053 = vunpack.c.l.b16 %v616
    %v1054 = vunpack.c.h.b16 %v616
    %v1055 = vunpack.c.l.b16 %v617
    %v1056 = vunpack.c.h.b16 %v617
    %v1057 = vunpack.c.l.b16 %v618
    %v1058 = vunpack.c.h.b16 %v618
    %v1059 = vunpack.c.l.b16 %v619
    %v1060 = vunpack.c.h.b16 %v619
    %v1061 = vunpack.c.l.b16 %v620
    %v1062 = vunpack.c.h.b16 %v620
    %v1063 = vunpack.c.l.b16 %v621
    %v1064 = vunpack.c.h.b16 %v621
    %v1065 = vunpack.c.l.b16 %v622
    %v1066 = vunpack.c.h.b16 %v622
    %v1067 = vunpack.c.l.b16 %v623
    %v1068 = vunpack.c.h.b16 %v623
    %v1069 = vunpack.c.l.b16 %v624
    %v1070 = vunpack.c.h.b16 %v624
    %v1071 = vunpack.c.l.b16 %v625
    %v1072 = vunpack.c.h.b16 %v625
    %v1073 = vunpack.c.l.b16 %v626
    %v1074 = vunpack.c.h.b16 %v626
    %v1075 = vunpack.c.l.b16 %v627
    %v1076 = vunpack.c.h.b16 %v627
    %v1077 = vunpack.c.l.b16 %v628
    %v1078 = vunpack.c.h.b16 %v628
    %v1079 = vunpack.c.l.b16 %v629
    %v1080 = vunpack.c.h.b16 %v629
    %v1081 = vunpack.c.l.b16 %v630
    %v1082 = vunpack.c.h.b16 %v630
    %v1083 = vunpack.c.l.b16 %v631
    %v1084 = vunpack.c.h.b16 %v631
    %v1085 = vunpack.c.l.b16 %v632
    %v1086 = vunpack.c.h.b16 %v632
    %v1087 = vunpack.c.l.b16 %v633
    %v1088 = vunpack.c.h.b16 %v633
    %v1089 = vunpack.c.l.b16 %v634
    %v1090 = vunpack.c.h.b16 %v634
    %v1091 = vunpack.c.l.b16 %v635
    %v1092 = vunpack.c.h.b16 %v635
    %v1093 = vunpack.c.l.b16 %v636
    %v1094 = vunpack.c.h.b16 %v636
    %v1095 = vunpack.c.l.b16 %v637
    %v1096 = vunpack.c.h.b16 %v637
    %v1097 = vunpack.c.l.b16 %v638
    %v1098 = vunpack.c.h.b16 %v638
    %v1099 = vunpack.c.l.b16 %v639
    %v1100 = vunpack.c.h.b16 %v639
    %v1101 = vunpack.c.l.b16 %v640
    %v1102 = vunpack.c.h.b16 %v640
    %v1103 = vunpack.c.l.b16 %v641
    %v1104 = vunpack.c.h.b16 %v641
    %v1105 = vunpack.c.l.b16 %v642
    %v1106 = vunpack.c.h.b16 %v642
    %v1107 = vunpack.c.l.b16 %v643
    %v1108 = vunpack.c.h.b16 %v643
    %v1109 = vunpack.c.l.b16 %v644
    %v1110 = vunpack.c.h.b16 %v644
    %v1111 = vunpack.c.l.b16 %v645
    %v1112 = vunpack.c.h.b16 %v645
    %v1113 = vunpack.c.l.b16 %v646
    %v1114 = vunpack.c.h.b16 %v646
    %v1115 = vunpack.c.l.b16 %v647
    %v1116 = vunpack.c.h.b16 %v647
    %v1117 = vunpack.c.l.b16 %v648
    %v1118 = vunpack.c.h.b16 %v648
    %v1119 = vunpack.c.l.b16 %v649
    %v1120 = vunpack.c.h.b16 %v649
    %v1121 = vunpack.c.l.b16 %v650
    %v1122 = vunpack.c.h.b16 %v650
    %v1123 = vunpack.c.l.b16 %v651
    %v1124 = vunpack.c.h.b16 %v651
    %v1125 = vunpack.c.l.b16 %v652
    %v1126 = vunpack.c.h.b16 %v652
    %v1127 = vunpack.c.l.b16 %v653
    %v1128 = vunpack.c.h.b16 %v653
    %v1129 = vunpack.c.l.b16 %v654
    %v1130 = vunpack.c.h.b16 %v654
    %v1131 = vunpack.c.l.b16 %v655
    %v1132 = vunpack.c.h.b16 %v655
    %v1133 = vunpack.c.l.b16 %v656
    %v1134 = vunpack.c.h.b16 %v656
    %v1135 = vunpack.c.l.b16 %v657
    %v1136 = vunpack.c.h.b16 %v657
    %v1137 = vunpack.c.l.b16 %v658
    %v1138 = vunpack.c.h.b16 %v658
    %v1139 = vunpack.c.l.b16 %v659
    %v1140 = vunpack.c.h.b16 %v659
    %v1141 = vunpack.c.l.b16 %v660
    %v1142 = vunpack.c.h.b16 %v660
    %v1143 = vunpack.c.l.b16 %v661
    %v1144 = vunpack.c.h.b16 %v661
    %v1145 = vunpack.c.l.b16 %v662
    %v1146 = vunpack.c.h.b16 %v662
    %v1147 = vunpack.c.l.b16 %v663
    %v1148 = vunpack.c.h.b16 %v663
    %v1149 = vunpack.c.l.b16 %v664
    %v1150 = vunpack.c.h.b16 %v664
    %v1151 = vunpack.c.l.b16 %v665
    %v1152 = vunpack.c.h.b16 %v665
    %v1153 = vunpack.c.l.b16 %v666
    %v1154 = vunpack.c.h.b16 %v666
    %v1155 = vunpack.c.l.b16 %v667
    %v1156 = vunpack.c.h.b16 %v667
    %v1157 = vunpack.c.l.b16 %v668
    %v1158 = vunpack.c.h.b16 %v668
    %v1159 = vunpack.c.l.b16 %v669
    %v1160 = vunpack.c.h.b16 %v669
    %v1161 = vunpack.c.l.b16 %v670
    %v1162 = vunpack.c.h.b16 %v670
    %v1163 = vunpack.c.l.b16 %v671
    %v1164 = vunpack.c.h.b16 %v671
    %v1165 = vunpack.c.l.b16 %v672
    %v1166 = vunpack.c.h.b16 %v672
    %v1167 = vunpack.c.l.b16 %v673
    %v1168 = vunpack.c.h.b16 %v673
    %v1169 = vunpack.c.l.b16 %v674
    %v1170 = vunpack.c.h.b16 %v674
    %v1171 = vunpack.c.l.b16 %v675
    %v1172 = vunpack.c.h.b16 %v675
    %v1173 = vunpack.c.l.b16 %v676
    %v1174 = vunpack.c.h.b16 %v676
    %v1175 = vunpack.c.l.b16 %v677
    %v1176 = vunpack.c.h.b16 %v677
    %v1177 = vunpack.c.l.b16 %v678
    %v1178 = vunpack.c.h.b16 %v678
    %v1179 = vunpack.c.l.b16 %v679
    %v1180 = vunpack.c.h.b16 %v679
    %v1181 = vunpack.c.l.b16 %v680
    %v1182 = vunpack.c.h.b16 %v680
    %v1183 = vunpack.c.l.b16 %v681
    %v1184 = vunpack.c.h.b16 %v681
    %v1185 = vunpack.c.l.b16 %v682
    %v1186 = vunpack.c.h.b16 %v682
    %v1187 = vunpack.c.l.b16 %v683
    %v1188 = vunpack.c.h.b16 %v683
    %v1189 = vunpack.c.l.b16 %v684
    %v1190 = vunpack.c.h.b16 %v684
    %v1191 = vunpack.c.l.b16 %v685
    %v1192 = vunpack.c.h.b16 %v685
    %v1193 = vunpack.c.l.b16 %v686
    %v1194 = vunpack.c.h.b16 %v686
    %v1195 = vunpack.c.l.b16 %v687
    %v1196 = vunpack.c.h.b16 %v687
    %v1197 = vunpack.c.l.b16 %v688
    %v1198 = vunpack.c.h.b16 %v688
    %v1199 = vunpack.c.l.b16 %v689
    %v1200 = vunpack.c.h.b16 %v689
    %v1201 = vunpack.c.l.b16 %v690
    %v1202 = vunpack.c.h.b16 %v690
    %v1203 = vunpack.c.l.b16 %v691
    %v1204 = vunpack.c.h.b16 %v691
    %v1205 = vunpack.c.l.b16 %v692
    %v1206 = vunpack.c.h.b16 %v692
    %v1207 = vunpack.c.l.b16 %v693
    %v1208 = vunpack.c.h.b16 %v693
    %v1209 = vunpack.c.l.b16 %v694
    %v1210 = vunpack.c.h.b16 %v694
    %v1211 = vunpack.c.l.b16 %v695
    %v1212 = vunpack.c.h.b16 %v695
    %v1213 = vunpack.c.l.b16 %v696
    %v1214 = vunpack.c.h.b16 %v696
    %v1215 = vunpack.c.l.b16 %v697
    %v1216 = vunpack.c.h.b16 %v697
    %v1217 = vunpack.c.l.b16 %v698
    %v1218 = vunpack.c.h.b16 %v698
    %v1219 = vunpack.c.l.b16 %v699
    %v1220 = vunpack.c.h.b16 %v699
    %v1221 = vunpack.c.l.b16 %v700
    %v1222 = vunpack.c.h.b16 %v700
    %v1223 = vunpack.c.l.b16 %v701
    %v1224 = vunpack.c.h.b16 %v701
    %v1225 = vunpack.c.l.b16 %v702
    %v1226 = vunpack.c.h.b16 %v702
    %v1227 = vunpack.c.l.b16 %v703
    %v1228 = vunpack.c.h.b16 %v703
    %v1229 = vunpack.c.l.b16 %v704
    %v1230 = vunpack.c.h.b16 %v704
    %v1231 = vunpack.c.l.b16 %v705
    %v1232 = vunpack.c.h.b16 %v705
    %v1233 = vunpack.c.l.b16 %v706
    %v1234 = vunpack.c.h.b16 %v706
    %v1235 = vpack.c.b16 %v915, %v911
    %v1236 = vpack.c.b16 %v916, %v912
    %v1237 = vpack.c.b16 %v917, %v913
    %v1238 = vpack.c.b16 %v918, %v914
    %v1239 = vpack.c.b16 %v923, %v919
    %v1240 = vpack.c.b16 %v924, %v920
    %v1241 = vpack.c.b16 %v925, %v921
    %v1242 = vpack.c.b16 %v926, %v922
    %v1243 = vpack.c.b16 %v931, %v927
    %v1244 = vpack.c.b16 %v932, %v928
    %v1245 = vpack.c.b16 %v933, %v929
    %v1246 = vpack.c.b16 %v934, %v930
    %v1247 = vpack.c.b16 %v939, %v935
    %v1248 = vpack.c.b16 %v940, %v936
    %v1249 = vpack.c.b16 %v941, %v937
    %v1250 = vpack.c.b16 %v942, %v938
    %v1251 = vpack.c.b16 %v947, %v943
    %v1252 = vpack.c.b16 %v948, %v944
    %v1253 = vpack.c.b16 %v949, %v945
    %v1254 = vpack.c.b16 %v950, %v946
    %v1255 = vpack.c.b16 %v955, %v951
    %v1256 = vpack.c.b16 %v956, %v952
    %v1257 = vpack.c.b16 %v957, %v953
    %v1258 = vpack.c.b16 %v958, %v954
    %v1259 = vpack.c.b16 %v963, %v959
    %v1260 = vpack.c.b16 %v964, %v960
    %v1261 = vpack.c.b16 %v965, %v961
    %v1262 = vpack.c.b16 %v966, %v962
    %v1263 = vpack.c.b16 %v971, %v967
    %v1264 = vpack.c.b16 %v972, %v968
    %v1265 = vpack.c.b16 %v973, %v969
    %v1266 = vpack.c.b16 %v974, %v970
    %v1267 = vpack.c.b16 %v979, %v975
    %v1268 = vpack.c.b16 %v980, %v976
    %v1269 = vpack.c.b16 %v981, %v977
    %v1270 = vpack.c.b16 %v982, %v978
    %v1271 = vpack.c.b16 %v987, %v983
    %v1272 = vpack.c.b16 %v988, %v984
    %v1273 = vpack.c.b16 %v989, %v985
    %v1274 = vpack.c.b16 %v990, %v986
    %v1275 = vpack.c.b16 %v995, %v991
    %v1276 = vpack.c.b16 %v996, %v992
    %v1277 = vpack.c.b16 %v997, %v993
    %v1278 = vpack.c.b16 %v998, %v994
    %v1279 = vpack.c.b16 %v1003, %v999
    %v1280 = vpack.c.b16 %v1004, %v1000
    %v1281 = vpack.c.b16 %v1005, %v1001
    %v1282 = vpack.c.b16 %v1006, %v1002
    %v1283 = vpack.c.b16 %v1011, %v1007
    %v1284 = vpack.c.b16 %v1012, %v1008
    %v1285 = vpack.c.b16 %v1013, %v1009
    %v1286 = vpack.c.b16 %v1014, %v1010
    %v1287 = vpack.c.b16 %v1019, %v1015
    %v1288 = vpack.c.b16 %v1020, %v1016
    %v1289 = vpack.c.b16 %v1021, %v1017
    %v1290 = vpack.c.b16 %v1022, %v1018
    %v1291 = vpack.c.b16 %v1027, %v1023
    %v1292 = vpack.c.b16 %v1028, %v1024
    %v1293 = vpack.c.b16 %v1029, %v1025
    %v1294 = vpack.c.b16 %v1030, %v1026
    %v1295 = vpack.c.b16 %v1035, %v1031
    %v1296 = vpack.c.b16 %v1036, %v1032
    %v1297 = vpack.c.b16 %v1037, %v1033
    %v1298 = vpack.c.b16 %v1038, %v1034
    %v1299 = vpack.c.b16 %v1043, %v1039
    %v1300 = vpack.c.b16 %v1044, %v1040
    %v1301 = vpack.c.b16 %v1045, %v1041
    %v1302 = vpack.c.b16 %v1046, %v1042
    %v1303 = vpack.c.b16 %v1051, %v1047
    %v1304 = vpack.c.b16 %v1052, %v1048
    %v1305 = vpack.c.b16 %v1053, %v1049
    %v1306 = vpack.c.b16 %v1054, %v1050
    %v1307 = vpack.c.b16 %v1059, %v1055
    %v1308 = vpack.c.b16 %v1060, %v1056
    %v1309 = vpack.c.b16 %v1061, %v1057
    %v1310 = vpack.c.b16 %v1062, %v1058
    %v1311 = vpack.c.b16 %v1067, %v1063
    %v1312 = vpack.c.b16 %v1068, %v1064
    %v1313 = vpack.c.b16 %v1069, %v1065
    %v1314 = vpack.c.b16 %v1070, %v1066
    %v1315 = vpack.c.b16 %v1075, %v1071
    %v1316 = vpack.c.b16 %v1076, %v1072
    %v1317 = vpack.c.b16 %v1077, %v1073
    %v1318 = vpack.c.b16 %v1078, %v1074
    %v1319 = vpack.c.b16 %v1083, %v1079
    %v1320 = vpack.c.b16 %v1084, %v1080
    %v1321 = vpack.c.b16 %v1085, %v1081
    %v1322 = vpack.c.b16 %v1086, %v1082
    %v1323 = vpack.c.b16 %v1091, %v1087
    %v1324 = vpack.c.b16 %v1092, %v1088
    %v1325 = vpack.c.b16 %v1093, %v1089
    %v1326 = vpack.c.b16 %v1094, %v1090
    %v1327 = vpack.c.b16 %v1099, %v1095
    %v1328 = vpack.c.b16 %v1100, %v1096
    %v1329 = vpack.c.b16 %v1101, %v1097
    %v1330 = vpack.c.b16 %v1102, %v1098
    %v1331 = vpack.c.b16 %v1107, %v1103
    %v1332 = vpack.c.b16 %v1108, %v1104
    %v1333 = vpack.c.b16 %v1109, %v1105
    %v1334 = vpack.c.b16 %v1110, %v1106
    %v1335 = vpack.c.b16 %v1115, %v1111
    %v1336 = vpack.c.b16 %v1116, %v1112
    %v1337 = vpack.c.b16 %v1117, %v1113
    %v1338 = vpack.c.b16 %v1118, %v1114
    %v1339 = vpack.c.b16 %v1123, %v1119
    %v1340 = vpack.c.b16 %v1124, %v1120
    %v1341 = vpack.c.b16 %v1125, %v1121
    %v1342 = vpack.c.b16 %v1126, %v1122
    %v1343 = vpack.c.b16 %v1131, %v1127
    %v1344 = vpack.c.b16 %v1132, %v1128
    %v1345 = vpack.c.b16 %v1133, %v1129
    %v1346 = vpack.c.b16 %v1134, %v1130
    %v1347 = vpack.c.b16 %v1139, %v1135
    %v1348 = vpack.c.b16 %v1140, %v1136
    %v1349 = vpack.c.b16 %v1141, %v1137
    %v1350 = vpack.c.b16 %v1142, %v1138
    %v1351 = vpack.c.b16 %v1147, %v1143
    %v1352 = vpack.c.b16 %v1148, %v1144
    %v1353 = vpack.c.b16 %v1149, %v1145
    %v1354 = vpack.c.b16 %v1150, %v1146
    %v1355 = vpack.c.b16 %v1155, %v1151
    %v1356 = vpack.c.b16 %v1156, %v1152
    %v1357 = vpack.c.b16 %v1157, %v1153
    %v1358 = vpack.c.b16 %v1158, %v1154
    %v1359 = vpack.c.b16 %v1163, %v1159
    %v1360 = vpack.c.b16 %v1164, %v1160
    %v1361 = vpack.c.b16 %v1165, %v1161
    %v1362 = vpack.c.b16 %v1166, %v1162
    %v1363 = vpack.c.b16 %v1171, %v1167
    %v1364 = vpack.c.b16 %v1172, %v1168
    %v1365 = vpack.c.b16 %v1173, %v1169
    %v1366 = vpack.c.b16 %v1174, %v1170
    %v1367 = vpack.c.b16 %v1179, %v1175
    %v1368 = vpack.c.b16 %v1180, %v1176
    %v1369 = vpack.c.b16 %v1181, %v1177
    %v1370 = vpack.c.b16 %v1182, %v1178
    %v1371 = vpack.c.b16 %v1187, %v1183
    %v1372 = vpack.c.b16 %v1188, %v1184
    %v1373 = vpack.c.b16 %v1189, %v1185
    %v1374 = vpack.c.b16 %v1190, %v1186
    %v1375 = vpack.c.b16 %v1195, %v1191
    %v1376 = vpack.c.b16 %v1196, %v1192
    %v1377 = vpack.c.b16 %v1197, %v1193
    %v1378 = vpack.c.b16 %v1198, %v1194
    %v1379 = vpack.c.b16 %v1203, %v1199
    %v1380 = vpack.c.b16 %v1204, %v1200
    %v1381 = vpack.c.b16 %v1205, %v1201
    %v1382 = vpack.c.b16 %v1206, %v1202
    %v1383 = vpack.c.b16 %v1211, %v1207
    %v1384 = vpack.c.b16 %v1212, %v1208
    %v1385 = vpack.c.b16 %v1213, %v1209
    %v1386 = vpack.c.b16 %v1214, %v1210
    %v1387 = vpack.c.b16 %v1219, %v1215
    %v1388 = vpack.c.b16 %v1220, %v1216
    %v1389 = vpack.c.b16 %v1221, %v1217
    %v1390 = vpack.c.b16 %v1222, %v1218
    %v1391 = vpack.c.b16 %v1227, %v1223
    %v1392 = vpack.c.b16 %v1228, %v1224
    %v1393 = vpack.c.b16 %v1229, %v1225
    %v1394 = vpack.c.b16 %v1230, %v1226
    %v1395 = vpack.c.b16 %v1231, %v1231
    %v1396 = vpack.c.b16 %v1232, %v1232
    %v1397 = vpack.c.b16 %v1233, %v1233
    %v1398 = vpack.c.b16 %v1234, %v1234
    %v1560 = vsel %vm197, %v743, 0
    %vm1562 = vcmask 1043456
    %v1564 = vsel %vm1562, %v1395, 0
    %v1567 = vsel %vm1562, %v1396, 0
    %v1570 = vsel %vm1562, %v1397, 0
    %v1573 = vsel %vm1562, %v1398, 0
    %1575 = vmatpush.bf16.msra.mxu0 %v1263
    %1576 = vmatpush.bf16.msra.mxu0 %v1259
    %1577 = vmatpush.bf16.msra.mxu0 %v1255
    %1578 = vmatpush.bf16.msra.mxu0 %v1251
    %1579 = vmatpush.bf16.msra.mxu0 %v1247
    %1580 = vmatpush.bf16.msra.mxu0 %v1243
    %1581 = vmatpush.bf16.msra.mxu0 %v1239
    %1582 = vmatpush.bf16.msra.mxu0 %v1235
    %1583 = vmatmul.bf16.gmra.mxu0 %v738
    %v1584 = vpop.f32.mrf.mxu0
    %v1585 = vadd.f32 0.0, %v1584
    %v1586 = vpop.f32.mrf.mxu0
    %1587 = vdwg.mxu0
    %1588 = vmatpush.bf16.msra.mxu0 %v1295
    %1589 = vmatpush.bf16.msra.mxu0 %v1291
    %1590 = vmatpush.bf16.msra.mxu0 %v1287
    %1591 = vmatpush.bf16.msra.mxu0 %v1283
    %1592 = vmatpush.bf16.msra.mxu0 %v1279
    %1593 = vmatpush.bf16.msra.mxu0 %v1275
    %1594 = vmatpush.bf16.msra.mxu0 %v1271
    %1595 = vmatpush.bf16.msra.mxu0 %v1267
    %1596 = vmatmul.bf16.gmra.mxu0 %v739
    %v1597 = vpop.f32.mrf.mxu0
    %v1598 = vadd.f32 %v1585, %v1597
    %v1599 = vpop.f32.mrf.mxu0
    %1600 = vdwg.mxu0
    %1601 = vmatpush.bf16.msra.mxu0 %v1327
    %1602 = vmatpush.bf16.msra.mxu0 %v1323
    %1603 = vmatpush.bf16.msra.mxu0 %v1319
    %1604 = vmatpush.bf16.msra.mxu0 %v1315
    %1605 = vmatpush.bf16.msra.mxu0 %v1311
    %1606 = vmatpush.bf16.msra.mxu0 %v1307
    %1607 = vmatpush.bf16.msra.mxu0 %v1303
    %1608 = vmatpush.bf16.msra.mxu0 %v1299
    %1609 = vmatmul.bf16.gmra.mxu0 %v740
    %v1610 = vpop.f32.mrf.mxu0
    %v1611 = vadd.f32 %v1598, %v1610
    %v1612 = vpop.f32.mrf.mxu0
    %1613 = vdwg.mxu0
    %1614 = vmatpush.bf16.msra.mxu0 %v1359
    %1615 = vmatpush.bf16.msra.mxu0 %v1355
    %1616 = vmatpush.bf16.msra.mxu0 %v1351
    %1617 = vmatpush.bf16.msra.mxu0 %v1347
    %1618 = vmatpush.bf16.msra.mxu0 %v1343
    %1619 = vmatpush.bf16.msra.mxu0 %v1339
    %1620 = vmatpush.bf16.msra.mxu0 %v1335
    %1621 = vmatpush.bf16.msra.mxu0 %v1331
    %1622 = vmatmul.bf16.gmra.mxu0 %v741
    %v1623 = vpop.f32.mrf.mxu0
    %v1624 = vadd.f32 %v1611, %v1623
    %v1625 = vpop.f32.mrf.mxu0
    %1626 = vdwg.mxu0
    %1627 = vmatpush.bf16.msra.mxu0 %v1391
    %1628 = vmatpush.bf16.msra.mxu0 %v1387
    %1629 = vmatpush.bf16.msra.mxu0 %v1383
    %1630 = vmatpush.bf16.msra.mxu0 %v1379
    %1631 = vmatpush.bf16.msra.mxu0 %v1375
    %1632 = vmatpush.bf16.msra.mxu0 %v1371
    %1633 = vmatpush.bf16.msra.mxu0 %v1367
    %1634 = vmatpush.bf16.msra.mxu0 %v1363
    %1635 = vmatmul.bf16.gmra.mxu0 %v742
    %v1636 = vpop.f32.mrf.mxu0
    %v1637 = vadd.f32 %v1624, %v1636
    %v1638 = vpop.f32.mrf.mxu0
    %1639 = vdwg.mxu0
    %1640 = vmatpush.bf16.msra.mxu0 0
    %1641 = vmatpush.bf16.msra.mxu0 0
    %1642 = vmatpush.bf16.msra.mxu0 0
    %1643 = vmatpush.bf16.msra.mxu0 0
    %1644 = vmatpush.bf16.msra.mxu0 0
    %1645 = vmatpush.bf16.msra.mxu0 0
    %1646 = vmatpush.bf16.msra.mxu0 0
    %1647 = vmatpush.bf16.msra.mxu0 %v1564
    %1648 = vmatmul.bf16.gmra.mxu0 %v1560
    %v1649 = vpop.f32.mrf.mxu0
    %v1650 = vadd.f32 %v1637, %v1649
    %v1651 = vpop.f32.mrf.mxu0
    %1652 = vdwg.mxu0
    %1653 = vmatpush.bf16.msra.mxu0 %v1264
    %1654 = vmatpush.bf16.msra.mxu0 %v1260
    %1655 = vmatpush.bf16.msra.mxu0 %v1256
    %1656 = vmatpush.bf16.msra.mxu0 %v1252
    %1657 = vmatpush.bf16.msra.mxu0 %v1248
    %1658 = vmatpush.bf16.msra.mxu0 %v1244
    %1659 = vmatpush.bf16.msra.mxu0 %v1240
    %1660 = vmatpush.bf16.msra.mxu0 %v1236
    %1661 = vmatmul.bf16.gmra.mxu0 %v738
    %v1662 = vpop.f32.mrf.mxu0
    %v1663 = vadd.f32 0.0, %v1662
    %v1664 = vpop.f32.mrf.mxu0
    %1665 = vdwg.mxu0
    %1666 = vmatpush.bf16.msra.mxu0 %v1296
    %1667 = vmatpush.bf16.msra.mxu0 %v1292
    %1668 = vmatpush.bf16.msra.mxu0 %v1288
    %1669 = vmatpush.bf16.msra.mxu0 %v1284
    %1670 = vmatpush.bf16.msra.mxu0 %v1280
    %1671 = vmatpush.bf16.msra.mxu0 %v1276
    %1672 = vmatpush.bf16.msra.mxu0 %v1272
    %1673 = vmatpush.bf16.msra.mxu0 %v1268
    %1674 = vmatmul.bf16.gmra.mxu0 %v739
    %v1675 = vpop.f32.mrf.mxu0
    %v1676 = vadd.f32 %v1663, %v1675
    %v1677 = vpop.f32.mrf.mxu0
    %1678 = vdwg.mxu0
    %1679 = vmatpush.bf16.msra.mxu0 %v1328
    %1680 = vmatpush.bf16.msra.mxu0 %v1324
    %1681 = vmatpush.bf16.msra.mxu0 %v1320
    %1682 = vmatpush.bf16.msra.mxu0 %v1316
    %1683 = vmatpush.bf16.msra.mxu0 %v1312
    %1684 = vmatpush.bf16.msra.mxu0 %v1308
    %1685 = vmatpush.bf16.msra.mxu0 %v1304
    %1686 = vmatpush.bf16.msra.mxu0 %v1300
    %1687 = vmatmul.bf16.gmra.mxu0 %v740
    %v1688 = vpop.f32.mrf.mxu0
    %v1689 = vadd.f32 %v1676, %v1688
    %v1690 = vpop.f32.mrf.mxu0
    %1691 = vdwg.mxu0
    %1692 = vmatpush.bf16.msra.mxu0 %v1360
    %1693 = vmatpush.bf16.msra.mxu0 %v1356
    %1694 = vmatpush.bf16.msra.mxu0 %v1352
    %1695 = vmatpush.bf16.msra.mxu0 %v1348
    %1696 = vmatpush.bf16.msra.mxu0 %v1344
    %1697 = vmatpush.bf16.msra.mxu0 %v1340
    %1698 = vmatpush.bf16.msra.mxu0 %v1336
    %1699 = vmatpush.bf16.msra.mxu0 %v1332
    %1700 = vmatmul.bf16.gmra.mxu0 %v741
    %v1701 = vpop.f32.mrf.mxu0
    %v1702 = vadd.f32 %v1689, %v1701
    %v1703 = vpop.f32.mrf.mxu0
    %1704 = vdwg.mxu0
    %1705 = vmatpush.bf16.msra.mxu0 %v1392
    %1706 = vmatpush.bf16.msra.mxu0 %v1388
    %1707 = vmatpush.bf16.msra.mxu0 %v1384
    %1708 = vmatpush.bf16.msra.mxu0 %v1380
    %1709 = vmatpush.bf16.msra.mxu0 %v1376
    %1710 = vmatpush.bf16.msra.mxu0 %v1372
    %1711 = vmatpush.bf16.msra.mxu0 %v1368
    %1712 = vmatpush.bf16.msra.mxu0 %v1364
    %1713 = vmatmul.bf16.gmra.mxu0 %v742
    %v1714 = vpop.f32.mrf.mxu0
    %v1715 = vadd.f32 %v1702, %v1714
    %v1716 = vpop.f32.mrf.mxu0
    %1717 = vdwg.mxu0
    %1718 = vmatpush.bf16.msra.mxu0 0
    %1719 = vmatpush.bf16.msra.mxu0 0
    %1720 = vmatpush.bf16.msra.mxu0 0
    %1721 = vmatpush.bf16.msra.mxu0 0
    %1722 = vmatpush.bf16.msra.mxu0 0
    %1723 = vmatpush.bf16.msra.mxu0 0
    %1724 = vmatpush.bf16.msra.mxu0 0
    %1725 = vmatpush.bf16.msra.mxu0 %v1567
    %1726 = vmatmul.bf16.gmra.mxu0 %v1560
    %v1727 = vpop.f32.mrf.mxu0
    %v1728 = vadd.f32 %v1715, %v1727
    %v1729 = vpop.f32.mrf.mxu0
    %1730 = vdwg.mxu0
    %1731 = vmatpush.bf16.msra.mxu0 %v1265
    %1732 = vmatpush.bf16.msra.mxu0 %v1261
    %1733 = vmatpush.bf16.msra.mxu0 %v1257
    %1734 = vmatpush.bf16.msra.mxu0 %v1253
    %1735 = vmatpush.bf16.msra.mxu0 %v1249
    %1736 = vmatpush.bf16.msra.mxu0 %v1245
    %1737 = vmatpush.bf16.msra.mxu0 %v1241
    %1738 = vmatpush.bf16.msra.mxu0 %v1237
    %1739 = vmatmul.bf16.gmra.mxu0 %v738
    %v1740 = vpop.f32.mrf.mxu0
    %v1741 = vadd.f32 0.0, %v1740
    %v1742 = vpop.f32.mrf.mxu0
    %1743 = vdwg.mxu0
    %1744 = vmatpush.bf16.msra.mxu0 %v1297
    %1745 = vmatpush.bf16.msra.mxu0 %v1293
    %1746 = vmatpush.bf16.msra.mxu0 %v1289
    %1747 = vmatpush.bf16.msra.mxu0 %v1285
    %1748 = vmatpush.bf16.msra.mxu0 %v1281
    %1749 = vmatpush.bf16.msra.mxu0 %v1277
    %1750 = vmatpush.bf16.msra.mxu0 %v1273
    %1751 = vmatpush.bf16.msra.mxu0 %v1269
    %1752 = vmatmul.bf16.gmra.mxu0 %v739
    %v1753 = vpop.f32.mrf.mxu0
    %v1754 = vadd.f32 %v1741, %v1753
    %v1755 = vpop.f32.mrf.mxu0
    %1756 = vdwg.mxu0
    %1757 = vmatpush.bf16.msra.mxu0 %v1329
    %1758 = vmatpush.bf16.msra.mxu0 %v1325
    %1759 = vmatpush.bf16.msra.mxu0 %v1321
    %1760 = vmatpush.bf16.msra.mxu0 %v1317
    %1761 = vmatpush.bf16.msra.mxu0 %v1313
    %1762 = vmatpush.bf16.msra.mxu0 %v1309
    %1763 = vmatpush.bf16.msra.mxu0 %v1305
    %1764 = vmatpush.bf16.msra.mxu0 %v1301
    %1765 = vmatmul.bf16.gmra.mxu0 %v740
    %v1766 = vpop.f32.mrf.mxu0
    %v1767 = vadd.f32 %v1754, %v1766
    %v1768 = vpop.f32.mrf.mxu0
    %1769 = vdwg.mxu0
    %1770 = vmatpush.bf16.msra.mxu0 %v1361
    %1771 = vmatpush.bf16.msra.mxu0 %v1357
    %1772 = vmatpush.bf16.msra.mxu0 %v1353
    %1773 = vmatpush.bf16.msra.mxu0 %v1349
    %1774 = vmatpush.bf16.msra.mxu0 %v1345
    %1775 = vmatpush.bf16.msra.mxu0 %v1341
    %1776 = vmatpush.bf16.msra.mxu0 %v1337
    %1777 = vmatpush.bf16.msra.mxu0 %v1333
    %1778 = vmatmul.bf16.gmra.mxu0 %v741
    %v1779 = vpop.f32.mrf.mxu0
    %v1780 = vadd.f32 %v1767, %v1779
    %v1781 = vpop.f32.mrf.mxu0
    %1782 = vdwg.mxu0
    %1783 = vmatpush.bf16.msra.mxu0 %v1393
    %1784 = vmatpush.bf16.msra.mxu0 %v1389
    %1785 = vmatpush.bf16.msra.mxu0 %v1385
    %1786 = vmatpush.bf16.msra.mxu0 %v1381
    %1787 = vmatpush.bf16.msra.mxu0 %v1377
    %1788 = vmatpush.bf16.msra.mxu0 %v1373
    %1789 = vmatpush.bf16.msra.mxu0 %v1369
    %1790 = vmatpush.bf16.msra.mxu0 %v1365
    %1791 = vmatmul.bf16.gmra.mxu0 %v742
    %v1792 = vpop.f32.mrf.mxu0
    %v1793 = vadd.f32 %v1780, %v1792
    %v1794 = vpop.f32.mrf.mxu0
    %1795 = vdwg.mxu0
    %1796 = vmatpush.bf16.msra.mxu0 0
    %1797 = vmatpush.bf16.msra.mxu0 0
    %1798 = vmatpush.bf16.msra.mxu0 0
    %1799 = vmatpush.bf16.msra.mxu0 0
    %1800 = vmatpush.bf16.msra.mxu0 0
    %1801 = vmatpush.bf16.msra.mxu0 0
    %1802 = vmatpush.bf16.msra.mxu0 0
    %1803 = vmatpush.bf16.msra.mxu0 %v1570
    %1804 = vmatmul.bf16.gmra.mxu0 %v1560
    %v1805 = vpop.f32.mrf.mxu0
    %v1806 = vadd.f32 %v1793, %v1805
    %v1807 = vpop.f32.mrf.mxu0
    %1808 = vdwg.mxu0
    %1809 = vmatpush.bf16.msra.mxu0 %v1266
    %1810 = vmatpush.bf16.msra.mxu0 %v1262
    %1811 = vmatpush.bf16.msra.mxu0 %v1258
    %1812 = vmatpush.bf16.msra.mxu0 %v1254
    %1813 = vmatpush.bf16.msra.mxu0 %v1250
    %1814 = vmatpush.bf16.msra.mxu0 %v1246
    %1815 = vmatpush.bf16.msra.mxu0 %v1242
    %1816 = vmatpush.bf16.msra.mxu0 %v1238
    %1817 = vmatmul.bf16.gmra.mxu0 %v738
    %v1818 = vpop.f32.mrf.mxu0
    %v1819 = vadd.f32 0.0, %v1818
    %v1820 = vpop.f32.mrf.mxu0
    %1821 = vdwg.mxu0
    %1822 = vmatpush.bf16.msra.mxu0 %v1298
    %1823 = vmatpush.bf16.msra.mxu0 %v1294
    %1824 = vmatpush.bf16.msra.mxu0 %v1290
    %1825 = vmatpush.bf16.msra.mxu0 %v1286
    %1826 = vmatpush.bf16.msra.mxu0 %v1282
    %1827 = vmatpush.bf16.msra.mxu0 %v1278
    %1828 = vmatpush.bf16.msra.mxu0 %v1274
    %1829 = vmatpush.bf16.msra.mxu0 %v1270
    %1830 = vmatmul.bf16.gmra.mxu0 %v739
    %v1831 = vpop.f32.mrf.mxu0
    %v1832 = vadd.f32 %v1819, %v1831
    %v1833 = vpop.f32.mrf.mxu0
    %1834 = vdwg.mxu0
    %1835 = vmatpush.bf16.msra.mxu0 %v1330
    %1836 = vmatpush.bf16.msra.mxu0 %v1326
    %1837 = vmatpush.bf16.msra.mxu0 %v1322
    %1838 = vmatpush.bf16.msra.mxu0 %v1318
    %1839 = vmatpush.bf16.msra.mxu0 %v1314
    %1840 = vmatpush.bf16.msra.mxu0 %v1310
    %1841 = vmatpush.bf16.msra.mxu0 %v1306
    %1842 = vmatpush.bf16.msra.mxu0 %v1302
    %1843 = vmatmul.bf16.gmra.mxu0 %v740
    %v1844 = vpop.f32.mrf.mxu0
    %v1845 = vadd.f32 %v1832, %v1844
    %v1846 = vpop.f32.mrf.mxu0
    %1847 = vdwg.mxu0
    %1848 = vmatpush.bf16.msra.mxu0 %v1362
    %1849 = vmatpush.bf16.msra.mxu0 %v1358
    %1850 = vmatpush.bf16.msra.mxu0 %v1354
    %1851 = vmatpush.bf16.msra.mxu0 %v1350
    %1852 = vmatpush.bf16.msra.mxu0 %v1346
    %1853 = vmatpush.bf16.msra.mxu0 %v1342
    %1854 = vmatpush.bf16.msra.mxu0 %v1338
    %1855 = vmatpush.bf16.msra.mxu0 %v1334
    %1856 = vmatmul.bf16.gmra.mxu0 %v741
    %v1857 = vpop.f32.mrf.mxu0
    %v1858 = vadd.f32 %v1845, %v1857
    %v1859 = vpop.f32.mrf.mxu0
    %1860 = vdwg.mxu0
    %1861 = vmatpush.bf16.msra.mxu0 %v1394
    %1862 = vmatpush.bf16.msra.mxu0 %v1390
    %1863 = vmatpush.bf16.msra.mxu0 %v1386
    %1864 = vmatpush.bf16.msra.mxu0 %v1382
    %1865 = vmatpush.bf16.msra.mxu0 %v1378
    %1866 = vmatpush.bf16.msra.mxu0 %v1374
    %1867 = vmatpush.bf16.msra.mxu0 %v1370
    %1868 = vmatpush.bf16.msra.mxu0 %v1366
    %1869 = vmatmul.bf16.gmra.mxu0 %v742
    %v1870 = vpop.f32.mrf.mxu0
    %v1871 = vadd.f32 %v1858, %v1870
    %v1872 = vpop.f32.mrf.mxu0
    %1873 = vdwg.mxu0
    %1874 = vmatpush.bf16.msra.mxu0 0
    %1875 = vmatpush.bf16.msra.mxu0 0
    %1876 = vmatpush.bf16.msra.mxu0 0
    %1877 = vmatpush.bf16.msra.mxu0 0
    %1878 = vmatpush.bf16.msra.mxu0 0
    %1879 = vmatpush.bf16.msra.mxu0 0
    %1880 = vmatpush.bf16.msra.mxu0 0
    %1881 = vmatpush.bf16.msra.mxu0 %v1573
    %1882 = vmatmul.bf16.gmra.mxu0 %v1560
    %v1883 = vpop.f32.mrf.mxu0
    %v1884 = vadd.f32 %v1871, %v1883
    %v1885 = vpop.f32.mrf.mxu0
    %1886 = vdwg.mxu0
    %v1899 = vunpack.c.l.b16 %v261
    %v1900 = vunpack.c.l.b16 %v262
    %v1901 = vunpack.c.l.b16 %v263
    %v1902 = vunpack.c.l.b16 %v264
    %v1903 = vunpack.c.l.b16 %v265
    %v1904 = vunpack.c.l.b16 %v266
    %v1905 = vunpack.c.l.b16 %v267
    %v1906 = vunpack.c.l.b16 %v268
    %v1907 = vunpack.c.l.b16 %v269
    %v1908 = vunpack.c.l.b16 %v270
    %v1909 = vunpack.c.l.b16 %v271
    %v1910 = vunpack.c.l.b16 %v272
    %v1911 = vsel %vm731, %v1905, %v1899
    %v1912 = vsel %vm731, %v1906, %v1900
    %v1913 = vsel %vm731, %v1907, %v1901
    %v1914 = vsel %vm731, %v1908, %v1902
    %v1915 = vsel %vm731, %v1909, %v1903
    %v1916 = vsel %vm731, %v1910, %v1904
    %v1917 = vpack.c.b16 %v1911, %v1911
    %v1918 = vpack.c.b16 %v1912, %v1912
    %v1919 = vpack.c.b16 %v1913, %v1913
    %v1920 = vpack.c.b16 %v1914, %v1914
    %v1921 = vpack.c.b16 %v1915, %v1915
    %v1922 = vpack.c.b16 %v1916, %v1916
    %v2090 = vunpack.c.l.b16 %v383
    %v2091 = vunpack.c.h.b16 %v383
    %v2092 = vunpack.c.l.b16 %v384
    %v2093 = vunpack.c.h.b16 %v384
    %v2094 = vunpack.c.l.b16 %v385
    %v2095 = vunpack.c.h.b16 %v385
    %v2096 = vunpack.c.l.b16 %v386
    %v2097 = vunpack.c.h.b16 %v386
    %v2098 = vunpack.c.l.b16 %v387
    %v2099 = vunpack.c.h.b16 %v387
    %v2100 = vunpack.c.l.b16 %v388
    %v2101 = vunpack.c.h.b16 %v388
    %v2102 = vunpack.c.l.b16 %v389
    %v2103 = vunpack.c.h.b16 %v389
    %v2104 = vunpack.c.l.b16 %v390
    %v2105 = vunpack.c.h.b16 %v390
    %v2106 = vunpack.c.l.b16 %v391
    %v2107 = vunpack.c.h.b16 %v391
    %v2108 = vunpack.c.l.b16 %v392
    %v2109 = vunpack.c.h.b16 %v392
    %v2110 = vunpack.c.l.b16 %v393
    %v2111 = vunpack.c.h.b16 %v393
    %v2112 = vunpack.c.l.b16 %v394
    %v2113 = vunpack.c.h.b16 %v394
    %v2114 = vunpack.c.l.b16 %v395
    %v2115 = vunpack.c.h.b16 %v395
    %v2116 = vunpack.c.l.b16 %v396
    %v2117 = vunpack.c.h.b16 %v396
    %v2118 = vunpack.c.l.b16 %v397
    %v2119 = vunpack.c.h.b16 %v397
    %v2120 = vunpack.c.l.b16 %v398
    %v2121 = vunpack.c.h.b16 %v398
    %v2122 = vunpack.c.l.b16 %v399
    %v2123 = vunpack.c.h.b16 %v399
    %v2124 = vunpack.c.l.b16 %v400
    %v2125 = vunpack.c.h.b16 %v400
    %v2126 = vunpack.c.l.b16 %v401
    %v2127 = vunpack.c.h.b16 %v401
    %v2128 = vunpack.c.l.b16 %v402
    %v2129 = vunpack.c.h.b16 %v402
    %v2130 = vunpack.c.l.b16 %v403
    %v2131 = vunpack.c.h.b16 %v403
    %v2132 = vunpack.c.l.b16 %v404
    %v2133 = vunpack.c.h.b16 %v404
    %v2134 = vunpack.c.l.b16 %v405
    %v2135 = vunpack.c.h.b16 %v405
    %v2136 = vunpack.c.l.b16 %v406
    %v2137 = vunpack.c.h.b16 %v406
    %v2138 = vunpack.c.l.b16 %v407
    %v2139 = vunpack.c.h.b16 %v407
    %v2140 = vunpack.c.l.b16 %v408
    %v2141 = vunpack.c.h.b16 %v408
    %v2142 = vunpack.c.l.b16 %v409
    %v2143 = vunpack.c.h.b16 %v409
    %v2144 = vunpack.c.l.b16 %v410
    %v2145 = vunpack.c.h.b16 %v410
    %v2146 = vunpack.c.l.b16 %v411
    %v2147 = vunpack.c.h.b16 %v411
    %v2148 = vunpack.c.l.b16 %v412
    %v2149 = vunpack.c.h.b16 %v412
    %v2150 = vunpack.c.l.b16 %v413
    %v2151 = vunpack.c.h.b16 %v413
    %v2152 = vunpack.c.l.b16 %v414
    %v2153 = vunpack.c.h.b16 %v414
    %v2154 = vunpack.c.l.b16 %v415
    %v2155 = vunpack.c.h.b16 %v415
    %v2156 = vunpack.c.l.b16 %v416
    %v2157 = vunpack.c.h.b16 %v416
    %v2158 = vunpack.c.l.b16 %v417
    %v2159 = vunpack.c.h.b16 %v417
    %v2160 = vunpack.c.l.b16 %v418
    %v2161 = vunpack.c.h.b16 %v418
    %v2162 = vunpack.c.l.b16 %v419
    %v2163 = vunpack.c.h.b16 %v419
    %v2164 = vunpack.c.l.b16 %v420
    %v2165 = vunpack.c.h.b16 %v420
    %v2166 = vunpack.c.l.b16 %v421
    %v2167 = vunpack.c.h.b16 %v421
    %v2168 = vunpack.c.l.b16 %v422
    %v2169 = vunpack.c.h.b16 %v422
    %v2170 = vunpack.c.l.b16 %v423
    %v2171 = vunpack.c.h.b16 %v423
    %v2172 = vunpack.c.l.b16 %v424
    %v2173 = vunpack.c.h.b16 %v424
    %v2174 = vunpack.c.l.b16 %v425
    %v2175 = vunpack.c.h.b16 %v425
    %v2176 = vunpack.c.l.b16 %v426
    %v2177 = vunpack.c.h.b16 %v426
    %v2178 = vunpack.c.l.b16 %v427
    %v2179 = vunpack.c.h.b16 %v427
    %v2180 = vunpack.c.l.b16 %v428
    %v2181 = vunpack.c.h.b16 %v428
    %v2182 = vunpack.c.l.b16 %v429
    %v2183 = vunpack.c.h.b16 %v429
    %v2184 = vunpack.c.l.b16 %v430
    %v2185 = vunpack.c.h.b16 %v430
    %v2186 = vunpack.c.l.b16 %v431
    %v2187 = vunpack.c.h.b16 %v431
    %v2188 = vunpack.c.l.b16 %v432
    %v2189 = vunpack.c.h.b16 %v432
    %v2190 = vunpack.c.l.b16 %v433
    %v2191 = vunpack.c.h.b16 %v433
    %v2192 = vunpack.c.l.b16 %v434
    %v2193 = vunpack.c.h.b16 %v434
    %v2194 = vunpack.c.l.b16 %v435
    %v2195 = vunpack.c.h.b16 %v435
    %v2196 = vunpack.c.l.b16 %v436
    %v2197 = vunpack.c.h.b16 %v436
    %v2198 = vunpack.c.l.b16 %v437
    %v2199 = vunpack.c.h.b16 %v437
    %v2200 = vunpack.c.l.b16 %v438
    %v2201 = vunpack.c.h.b16 %v438
    %v2202 = vunpack.c.l.b16 %v439
    %v2203 = vunpack.c.h.b16 %v439
    %v2204 = vunpack.c.l.b16 %v440
    %v2205 = vunpack.c.h.b16 %v440
    %v2206 = vunpack.c.l.b16 %v441
    %v2207 = vunpack.c.h.b16 %v441
    %v2208 = vunpack.c.l.b16 %v442
    %v2209 = vunpack.c.h.b16 %v442
    %v2210 = vunpack.c.l.b16 %v443
    %v2211 = vunpack.c.h.b16 %v443
    %v2212 = vunpack.c.l.b16 %v444
    %v2213 = vunpack.c.h.b16 %v444
    %v2214 = vunpack.c.l.b16 %v445
    %v2215 = vunpack.c.h.b16 %v445
    %v2216 = vunpack.c.l.b16 %v446
    %v2217 = vunpack.c.h.b16 %v446
    %v2218 = vunpack.c.l.b16 %v447
    %v2219 = vunpack.c.h.b16 %v447
    %v2220 = vunpack.c.l.b16 %v448
    %v2221 = vunpack.c.h.b16 %v448
    %v2222 = vunpack.c.l.b16 %v449
    %v2223 = vunpack.c.h.b16 %v449
    %v2224 = vunpack.c.l.b16 %v450
    %v2225 = vunpack.c.h.b16 %v450
    %v2226 = vunpack.c.l.b16 %v451
    %v2227 = vunpack.c.h.b16 %v451
    %v2228 = vunpack.c.l.b16 %v452
    %v2229 = vunpack.c.h.b16 %v452
    %v2230 = vunpack.c.l.b16 %v453
    %v2231 = vunpack.c.h.b16 %v453
    %v2232 = vunpack.c.l.b16 %v454
    %v2233 = vunpack.c.h.b16 %v454
    %v2234 = vunpack.c.l.b16 %v455
    %v2235 = vunpack.c.h.b16 %v455
    %v2236 = vunpack.c.l.b16 %v456
    %v2237 = vunpack.c.h.b16 %v456
    %v2238 = vunpack.c.l.b16 %v457
    %v2239 = vunpack.c.h.b16 %v457
    %v2240 = vunpack.c.l.b16 %v458
    %v2241 = vunpack.c.h.b16 %v458
    %v2242 = vunpack.c.l.b16 %v459
    %v2243 = vunpack.c.h.b16 %v459
    %v2244 = vunpack.c.l.b16 %v460
    %v2245 = vunpack.c.h.b16 %v460
    %v2246 = vunpack.c.l.b16 %v461
    %v2247 = vunpack.c.h.b16 %v461
    %v2248 = vunpack.c.l.b16 %v462
    %v2249 = vunpack.c.h.b16 %v462
    %v2250 = vunpack.c.l.b16 %v463
    %v2251 = vunpack.c.h.b16 %v463
    %v2252 = vunpack.c.l.b16 %v464
    %v2253 = vunpack.c.h.b16 %v464
    %v2254 = vunpack.c.l.b16 %v465
    %v2255 = vunpack.c.h.b16 %v465
    %v2256 = vunpack.c.l.b16 %v466
    %v2257 = vunpack.c.h.b16 %v466
    %v2258 = vunpack.c.l.b16 %v467
    %v2259 = vunpack.c.h.b16 %v467
    %v2260 = vunpack.c.l.b16 %v468
    %v2261 = vunpack.c.h.b16 %v468
    %v2262 = vunpack.c.l.b16 %v469
    %v2263 = vunpack.c.h.b16 %v469
    %v2264 = vunpack.c.l.b16 %v470
    %v2265 = vunpack.c.h.b16 %v470
    %v2266 = vunpack.c.l.b16 %v471
    %v2267 = vunpack.c.h.b16 %v471
    %v2268 = vunpack.c.l.b16 %v472
    %v2269 = vunpack.c.h.b16 %v472
    %v2270 = vunpack.c.l.b16 %v473
    %v2271 = vunpack.c.h.b16 %v473
    %v2272 = vunpack.c.l.b16 %v474
    %v2273 = vunpack.c.h.b16 %v474
    %v2274 = vunpack.c.l.b16 %v475
    %v2275 = vunpack.c.h.b16 %v475
    %v2276 = vunpack.c.l.b16 %v476
    %v2277 = vunpack.c.h.b16 %v476
    %v2278 = vunpack.c.l.b16 %v477
    %v2279 = vunpack.c.h.b16 %v477
    %v2280 = vunpack.c.l.b16 %v478
    %v2281 = vunpack.c.h.b16 %v478
    %v2282 = vunpack.c.l.b16 %v479
    %v2283 = vunpack.c.h.b16 %v479
    %v2284 = vunpack.c.l.b16 %v480
    %v2285 = vunpack.c.h.b16 %v480
    %v2286 = vunpack.c.l.b16 %v481
    %v2287 = vunpack.c.h.b16 %v481
    %v2288 = vunpack.c.l.b16 %v482
    %v2289 = vunpack.c.h.b16 %v482
    %v2290 = vunpack.c.l.b16 %v483
    %v2291 = vunpack.c.h.b16 %v483
    %v2292 = vunpack.c.l.b16 %v484
    %v2293 = vunpack.c.h.b16 %v484
    %v2294 = vunpack.c.l.b16 %v485
    %v2295 = vunpack.c.h.b16 %v485
    %v2296 = vunpack.c.l.b16 %v486
    %v2297 = vunpack.c.h.b16 %v486
    %v2298 = vunpack.c.l.b16 %v487
    %v2299 = vunpack.c.h.b16 %v487
    %v2300 = vunpack.c.l.b16 %v488
    %v2301 = vunpack.c.h.b16 %v488
    %v2302 = vunpack.c.l.b16 %v489
    %v2303 = vunpack.c.h.b16 %v489
    %v2304 = vunpack.c.l.b16 %v490
    %v2305 = vunpack.c.h.b16 %v490
    %v2306 = vunpack.c.l.b16 %v491
    %v2307 = vunpack.c.h.b16 %v491
    %v2308 = vunpack.c.l.b16 %v492
    %v2309 = vunpack.c.h.b16 %v492
    %v2310 = vunpack.c.l.b16 %v493
    %v2311 = vunpack.c.h.b16 %v493
    %v2312 = vunpack.c.l.b16 %v494
    %v2313 = vunpack.c.h.b16 %v494
    %v2314 = vunpack.c.l.b16 %v495
    %v2315 = vunpack.c.h.b16 %v495
    %v2316 = vunpack.c.l.b16 %v496
    %v2317 = vunpack.c.h.b16 %v496
    %v2318 = vunpack.c.l.b16 %v497
    %v2319 = vunpack.c.h.b16 %v497
    %v2320 = vunpack.c.l.b16 %v498
    %v2321 = vunpack.c.h.b16 %v498
    %v2322 = vunpack.c.l.b16 %v499
    %v2323 = vunpack.c.h.b16 %v499
    %v2324 = vunpack.c.l.b16 %v500
    %v2325 = vunpack.c.h.b16 %v500
    %v2326 = vunpack.c.l.b16 %v501
    %v2327 = vunpack.c.h.b16 %v501
    %v2328 = vunpack.c.l.b16 %v502
    %v2329 = vunpack.c.h.b16 %v502
    %v2330 = vunpack.c.l.b16 %v503
    %v2331 = vunpack.c.h.b16 %v503
    %v2332 = vunpack.c.l.b16 %v504
    %v2333 = vunpack.c.h.b16 %v504
    %v2334 = vunpack.c.l.b16 %v505
    %v2335 = vunpack.c.h.b16 %v505
    %v2336 = vunpack.c.l.b16 %v506
    %v2337 = vunpack.c.h.b16 %v506
    %v2338 = vunpack.c.l.b16 %v507
    %v2339 = vunpack.c.h.b16 %v507
    %v2340 = vunpack.c.l.b16 %v508
    %v2341 = vunpack.c.h.b16 %v508
    %v2342 = vunpack.c.l.b16 %v509
    %v2343 = vunpack.c.h.b16 %v509
    %v2344 = vunpack.c.l.b16 %v510
    %v2345 = vunpack.c.h.b16 %v510
    %v2346 = vunpack.c.l.b16 %v511
    %v2347 = vunpack.c.h.b16 %v511
    %v2348 = vunpack.c.l.b16 %v512
    %v2349 = vunpack.c.h.b16 %v512
    %v2350 = vunpack.c.l.b16 %v513
    %v2351 = vunpack.c.h.b16 %v513
    %v2352 = vunpack.c.l.b16 %v514
    %v2353 = vunpack.c.h.b16 %v514
    %v2354 = vunpack.c.l.b16 %v515
    %v2355 = vunpack.c.h.b16 %v515
    %v2356 = vunpack.c.l.b16 %v516
    %v2357 = vunpack.c.h.b16 %v516
    %v2358 = vunpack.c.l.b16 %v517
    %v2359 = vunpack.c.h.b16 %v517
    %v2360 = vunpack.c.l.b16 %v518
    %v2361 = vunpack.c.h.b16 %v518
    %v2362 = vunpack.c.l.b16 %v519
    %v2363 = vunpack.c.h.b16 %v519
    %v2364 = vunpack.c.l.b16 %v520
    %v2365 = vunpack.c.h.b16 %v520
    %v2366 = vunpack.c.l.b16 %v521
    %v2367 = vunpack.c.h.b16 %v521
    %v2368 = vunpack.c.l.b16 %v522
    %v2369 = vunpack.c.h.b16 %v522
    %v2370 = vunpack.c.l.b16 %v523
    %v2371 = vunpack.c.h.b16 %v523
    %v2372 = vunpack.c.l.b16 %v524
    %v2373 = vunpack.c.h.b16 %v524
    %v2374 = vunpack.c.l.b16 %v525
    %v2375 = vunpack.c.h.b16 %v525
    %v2376 = vunpack.c.l.b16 %v526
    %v2377 = vunpack.c.h.b16 %v526
    %v2378 = vunpack.c.l.b16 %v527
    %v2379 = vunpack.c.h.b16 %v527
    %v2380 = vunpack.c.l.b16 %v528
    %v2381 = vunpack.c.h.b16 %v528
    %v2382 = vunpack.c.l.b16 %v529
    %v2383 = vunpack.c.h.b16 %v529
    %v2384 = vunpack.c.l.b16 %v530
    %v2385 = vunpack.c.h.b16 %v530
    %v2386 = vunpack.c.l.b16 %v531
    %v2387 = vunpack.c.h.b16 %v531
    %v2388 = vunpack.c.l.b16 %v532
    %v2389 = vunpack.c.h.b16 %v532
    %v2390 = vunpack.c.l.b16 %v533
    %v2391 = vunpack.c.h.b16 %v533
    %v2392 = vunpack.c.l.b16 %v534
    %v2393 = vunpack.c.h.b16 %v534
    %v2394 = vunpack.c.l.b16 %v535
    %v2395 = vunpack.c.h.b16 %v535
    %v2396 = vunpack.c.l.b16 %v536
    %v2397 = vunpack.c.h.b16 %v536
    %v2398 = vunpack.c.l.b16 %v537
    %v2399 = vunpack.c.h.b16 %v537
    %v2400 = vunpack.c.l.b16 %v538
    %v2401 = vunpack.c.h.b16 %v538
    %v2402 = vunpack.c.l.b16 %v539
    %v2403 = vunpack.c.h.b16 %v539
    %v2404 = vunpack.c.l.b16 %v540
    %v2405 = vunpack.c.h.b16 %v540
    %v2406 = vunpack.c.l.b16 %v541
    %v2407 = vunpack.c.h.b16 %v541
    %v2408 = vunpack.c.l.b16 %v542
    %v2409 = vunpack.c.h.b16 %v542
    %v2410 = vunpack.c.l.b16 %v543
    %v2411 = vunpack.c.h.b16 %v543
    %v2412 = vunpack.c.l.b16 %v544
    %v2413 = vunpack.c.h.b16 %v544
    %v2414 = vpack.c.b16 %v2094, %v2090
    %v2415 = vpack.c.b16 %v2095, %v2091
    %v2416 = vpack.c.b16 %v2096, %v2092
    %v2417 = vpack.c.b16 %v2097, %v2093
    %v2418 = vpack.c.b16 %v2102, %v2098
    %v2419 = vpack.c.b16 %v2103, %v2099
    %v2420 = vpack.c.b16 %v2104, %v2100
    %v2421 = vpack.c.b16 %v2105, %v2101
    %v2422 = vpack.c.b16 %v2110, %v2106
    %v2423 = vpack.c.b16 %v2111, %v2107
    %v2424 = vpack.c.b16 %v2112, %v2108
    %v2425 = vpack.c.b16 %v2113, %v2109
    %v2426 = vpack.c.b16 %v2118, %v2114
    %v2427 = vpack.c.b16 %v2119, %v2115
    %v2428 = vpack.c.b16 %v2120, %v2116
    %v2429 = vpack.c.b16 %v2121, %v2117
    %v2430 = vpack.c.b16 %v2126, %v2122
    %v2431 = vpack.c.b16 %v2127, %v2123
    %v2432 = vpack.c.b16 %v2128, %v2124
    %v2433 = vpack.c.b16 %v2129, %v2125
    %v2434 = vpack.c.b16 %v2134, %v2130
    %v2435 = vpack.c.b16 %v2135, %v2131
    %v2436 = vpack.c.b16 %v2136, %v2132
    %v2437 = vpack.c.b16 %v2137, %v2133
    %v2438 = vpack.c.b16 %v2142, %v2138
    %v2439 = vpack.c.b16 %v2143, %v2139
    %v2440 = vpack.c.b16 %v2144, %v2140
    %v2441 = vpack.c.b16 %v2145, %v2141
    %v2442 = vpack.c.b16 %v2150, %v2146
    %v2443 = vpack.c.b16 %v2151, %v2147
    %v2444 = vpack.c.b16 %v2152, %v2148
    %v2445 = vpack.c.b16 %v2153, %v2149
    %v2446 = vpack.c.b16 %v2158, %v2154
    %v2447 = vpack.c.b16 %v2159, %v2155
    %v2448 = vpack.c.b16 %v2160, %v2156
    %v2449 = vpack.c.b16 %v2161, %v2157
    %v2450 = vpack.c.b16 %v2166, %v2162
    %v2451 = vpack.c.b16 %v2167, %v2163
    %v2452 = vpack.c.b16 %v2168, %v2164
    %v2453 = vpack.c.b16 %v2169, %v2165
    %v2454 = vpack.c.b16 %v2174, %v2170
    %v2455 = vpack.c.b16 %v2175, %v2171
    %v2456 = vpack.c.b16 %v2176, %v2172
    %v2457 = vpack.c.b16 %v2177, %v2173
    %v2458 = vpack.c.b16 %v2182, %v2178
    %v2459 = vpack.c.b16 %v2183, %v2179
    %v2460 = vpack.c.b16 %v2184, %v2180
    %v2461 = vpack.c.b16 %v2185, %v2181
    %v2462 = vpack.c.b16 %v2190, %v2186
    %v2463 = vpack.c.b16 %v2191, %v2187
    %v2464 = vpack.c.b16 %v2192, %v2188
    %v2465 = vpack.c.b16 %v2193, %v2189
    %v2466 = vpack.c.b16 %v2198, %v2194
    %v2467 = vpack.c.b16 %v2199, %v2195
    %v2468 = vpack.c.b16 %v2200, %v2196
    %v2469 = vpack.c.b16 %v2201, %v2197
    %v2470 = vpack.c.b16 %v2206, %v2202
    %v2471 = vpack.c.b16 %v2207, %v2203
    %v2472 = vpack.c.b16 %v2208, %v2204
    %v2473 = vpack.c.b16 %v2209, %v2205
    %v2474 = vpack.c.b16 %v2214, %v2210
    %v2475 = vpack.c.b16 %v2215, %v2211
    %v2476 = vpack.c.b16 %v2216, %v2212
    %v2477 = vpack.c.b16 %v2217, %v2213
    %v2478 = vpack.c.b16 %v2222, %v2218
    %v2479 = vpack.c.b16 %v2223, %v2219
    %v2480 = vpack.c.b16 %v2224, %v2220
    %v2481 = vpack.c.b16 %v2225, %v2221
    %v2482 = vpack.c.b16 %v2230, %v2226
    %v2483 = vpack.c.b16 %v2231, %v2227
    %v2484 = vpack.c.b16 %v2232, %v2228
    %v2485 = vpack.c.b16 %v2233, %v2229
    %v2486 = vpack.c.b16 %v2238, %v2234
    %v2487 = vpack.c.b16 %v2239, %v2235
    %v2488 = vpack.c.b16 %v2240, %v2236
    %v2489 = vpack.c.b16 %v2241, %v2237
    %v2490 = vpack.c.b16 %v2246, %v2242
    %v2491 = vpack.c.b16 %v2247, %v2243
    %v2492 = vpack.c.b16 %v2248, %v2244
    %v2493 = vpack.c.b16 %v2249, %v2245
    %v2494 = vpack.c.b16 %v2254, %v2250
    %v2495 = vpack.c.b16 %v2255, %v2251
    %v2496 = vpack.c.b16 %v2256, %v2252
    %v2497 = vpack.c.b16 %v2257, %v2253
    %v2498 = vpack.c.b16 %v2262, %v2258
    %v2499 = vpack.c.b16 %v2263, %v2259
    %v2500 = vpack.c.b16 %v2264, %v2260
    %v2501 = vpack.c.b16 %v2265, %v2261
    %v2502 = vpack.c.b16 %v2270, %v2266
    %v2503 = vpack.c.b16 %v2271, %v2267
    %v2504 = vpack.c.b16 %v2272, %v2268
    %v2505 = vpack.c.b16 %v2273, %v2269
    %v2506 = vpack.c.b16 %v2278, %v2274
    %v2507 = vpack.c.b16 %v2279, %v2275
    %v2508 = vpack.c.b16 %v2280, %v2276
    %v2509 = vpack.c.b16 %v2281, %v2277
    %v2510 = vpack.c.b16 %v2286, %v2282
    %v2511 = vpack.c.b16 %v2287, %v2283
    %v2512 = vpack.c.b16 %v2288, %v2284
    %v2513 = vpack.c.b16 %v2289, %v2285
    %v2514 = vpack.c.b16 %v2294, %v2290
    %v2515 = vpack.c.b16 %v2295, %v2291
    %v2516 = vpack.c.b16 %v2296, %v2292
    %v2517 = vpack.c.b16 %v2297, %v2293
    %v2518 = vpack.c.b16 %v2302, %v2298
    %v2519 = vpack.c.b16 %v2303, %v2299
    %v2520 = vpack.c.b16 %v2304, %v2300
    %v2521 = vpack.c.b16 %v2305, %v2301
    %v2522 = vpack.c.b16 %v2310, %v2306
    %v2523 = vpack.c.b16 %v2311, %v2307
    %v2524 = vpack.c.b16 %v2312, %v2308
    %v2525 = vpack.c.b16 %v2313, %v2309
    %v2526 = vpack.c.b16 %v2318, %v2314
    %v2527 = vpack.c.b16 %v2319, %v2315
    %v2528 = vpack.c.b16 %v2320, %v2316
    %v2529 = vpack.c.b16 %v2321, %v2317
    %v2530 = vpack.c.b16 %v2326, %v2322
    %v2531 = vpack.c.b16 %v2327, %v2323
    %v2532 = vpack.c.b16 %v2328, %v2324
    %v2533 = vpack.c.b16 %v2329, %v2325
    %v2534 = vpack.c.b16 %v2334, %v2330
    %v2535 = vpack.c.b16 %v2335, %v2331
    %v2536 = vpack.c.b16 %v2336, %v2332
    %v2537 = vpack.c.b16 %v2337, %v2333
    %v2538 = vpack.c.b16 %v2342, %v2338
    %v2539 = vpack.c.b16 %v2343, %v2339
    %v2540 = vpack.c.b16 %v2344, %v2340
    %v2541 = vpack.c.b16 %v2345, %v2341
    %v2542 = vpack.c.b16 %v2350, %v2346
    %v2543 = vpack.c.b16 %v2351, %v2347
    %v2544 = vpack.c.b16 %v2352, %v2348
    %v2545 = vpack.c.b16 %v2353, %v2349
    %v2546 = vpack.c.b16 %v2358, %v2354
    %v2547 = vpack.c.b16 %v2359, %v2355
    %v2548 = vpack.c.b16 %v2360, %v2356
    %v2549 = vpack.c.b16 %v2361, %v2357
    %v2550 = vpack.c.b16 %v2366, %v2362
    %v2551 = vpack.c.b16 %v2367, %v2363
    %v2552 = vpack.c.b16 %v2368, %v2364
    %v2553 = vpack.c.b16 %v2369, %v2365
    %v2554 = vpack.c.b16 %v2374, %v2370
    %v2555 = vpack.c.b16 %v2375, %v2371
    %v2556 = vpack.c.b16 %v2376, %v2372
    %v2557 = vpack.c.b16 %v2377, %v2373
    %v2558 = vpack.c.b16 %v2382, %v2378
    %v2559 = vpack.c.b16 %v2383, %v2379
    %v2560 = vpack.c.b16 %v2384, %v2380
    %v2561 = vpack.c.b16 %v2385, %v2381
    %v2562 = vpack.c.b16 %v2390, %v2386
    %v2563 = vpack.c.b16 %v2391, %v2387
    %v2564 = vpack.c.b16 %v2392, %v2388
    %v2565 = vpack.c.b16 %v2393, %v2389
    %v2566 = vpack.c.b16 %v2398, %v2394
    %v2567 = vpack.c.b16 %v2399, %v2395
    %v2568 = vpack.c.b16 %v2400, %v2396
    %v2569 = vpack.c.b16 %v2401, %v2397
    %v2570 = vpack.c.b16 %v2406, %v2402
    %v2571 = vpack.c.b16 %v2407, %v2403
    %v2572 = vpack.c.b16 %v2408, %v2404
    %v2573 = vpack.c.b16 %v2409, %v2405
    %v2574 = vpack.c.b16 %v2410, %v2410
    %v2575 = vpack.c.b16 %v2411, %v2411
    %v2576 = vpack.c.b16 %v2412, %v2412
    %v2577 = vpack.c.b16 %v2413, %v2413
    %v2739 = vsel %vm197, %v1922, 0
    %v2742 = vsel %vm1562, %v2574, 0
    %v2745 = vsel %vm1562, %v2575, 0
    %v2748 = vsel %vm1562, %v2576, 0
    %v2751 = vsel %vm1562, %v2577, 0
    %2753 = vmatpush.bf16.msra.mxu0 %v2442
    %2754 = vmatpush.bf16.msra.mxu0 %v2438
    %2755 = vmatpush.bf16.msra.mxu0 %v2434
    %2756 = vmatpush.bf16.msra.mxu0 %v2430
    %2757 = vmatpush.bf16.msra.mxu0 %v2426
    %2758 = vmatpush.bf16.msra.mxu0 %v2422
    %2759 = vmatpush.bf16.msra.mxu0 %v2418
    %2760 = vmatpush.bf16.msra.mxu0 %v2414
    %2761 = vmatmul.bf16.gmra.mxu0 %v1917
    %v2762 = vpop.f32.mrf.mxu0
    %v2763 = vadd.f32 %v1650, %v2762
    %v2764 = vpop.f32.mrf.mxu0
    %2765 = vdwg.mxu0
    %2766 = vmatpush.bf16.msra.mxu0 %v2474
    %2767 = vmatpush.bf16.msra.mxu0 %v2470
    %2768 = vmatpush.bf16.msra.mxu0 %v2466
    %2769 = vmatpush.bf16.msra.mxu0 %v2462
    %2770 = vmatpush.bf16.msra.mxu0 %v2458
    %2771 = vmatpush.bf16.msra.mxu0 %v2454
    %2772 = vmatpush.bf16.msra.mxu0 %v2450
    %2773 = vmatpush.bf16.msra.mxu0 %v2446
    %2774 = vmatmul.bf16.gmra.mxu0 %v1918
    %v2775 = vpop.f32.mrf.mxu0
    %v2776 = vadd.f32 %v2763, %v2775
    %v2777 = vpop.f32.mrf.mxu0
    %2778 = vdwg.mxu0
    %2779 = vmatpush.bf16.msra.mxu0 %v2506
    %2780 = vmatpush.bf16.msra.mxu0 %v2502
    %2781 = vmatpush.bf16.msra.mxu0 %v2498
    %2782 = vmatpush.bf16.msra.mxu0 %v2494
    %2783 = vmatpush.bf16.msra.mxu0 %v2490
    %2784 = vmatpush.bf16.msra.mxu0 %v2486
    %2785 = vmatpush.bf16.msra.mxu0 %v2482
    %2786 = vmatpush.bf16.msra.mxu0 %v2478
    %2787 = vmatmul.bf16.gmra.mxu0 %v1919
    %v2788 = vpop.f32.mrf.mxu0
    %v2789 = vadd.f32 %v2776, %v2788
    %v2790 = vpop.f32.mrf.mxu0
    %2791 = vdwg.mxu0
    %2792 = vmatpush.bf16.msra.mxu0 %v2538
    %2793 = vmatpush.bf16.msra.mxu0 %v2534
    %2794 = vmatpush.bf16.msra.mxu0 %v2530
    %2795 = vmatpush.bf16.msra.mxu0 %v2526
    %2796 = vmatpush.bf16.msra.mxu0 %v2522
    %2797 = vmatpush.bf16.msra.mxu0 %v2518
    %2798 = vmatpush.bf16.msra.mxu0 %v2514
    %2799 = vmatpush.bf16.msra.mxu0 %v2510
    %2800 = vmatmul.bf16.gmra.mxu0 %v1920
    %v2801 = vpop.f32.mrf.mxu0
    %v2802 = vadd.f32 %v2789, %v2801
    %v2803 = vpop.f32.mrf.mxu0
    %2804 = vdwg.mxu0
    %2805 = vmatpush.bf16.msra.mxu0 %v2570
    %2806 = vmatpush.bf16.msra.mxu0 %v2566
    %2807 = vmatpush.bf16.msra.mxu0 %v2562
    %2808 = vmatpush.bf16.msra.mxu0 %v2558
    %2809 = vmatpush.bf16.msra.mxu0 %v2554
    %2810 = vmatpush.bf16.msra.mxu0 %v2550
    %2811 = vmatpush.bf16.msra.mxu0 %v2546
    %2812 = vmatpush.bf16.msra.mxu0 %v2542
    %2813 = vmatmul.bf16.gmra.mxu0 %v1921
    %v2814 = vpop.f32.mrf.mxu0
    %v2815 = vadd.f32 %v2802, %v2814
    %v2816 = vpop.f32.mrf.mxu0
    %2817 = vdwg.mxu0
    %2818 = vmatpush.bf16.msra.mxu0 0
    %2819 = vmatpush.bf16.msra.mxu0 0
    %2820 = vmatpush.bf16.msra.mxu0 0
    %2821 = vmatpush.bf16.msra.mxu0 0
    %2822 = vmatpush.bf16.msra.mxu0 0
    %2823 = vmatpush.bf16.msra.mxu0 0
    %2824 = vmatpush.bf16.msra.mxu0 0
    %2825 = vmatpush.bf16.msra.mxu0 %v2742
    %2826 = vmatmul.bf16.gmra.mxu0 %v2739
    %v2827 = vpop.f32.mrf.mxu0
    %v2828 = vadd.f32 %v2815, %v2827
    %v2829 = vpop.f32.mrf.mxu0
    %2830 = vdwg.mxu0
    %2831 = vmatpush.bf16.msra.mxu0 %v2443
    %2832 = vmatpush.bf16.msra.mxu0 %v2439
    %2833 = vmatpush.bf16.msra.mxu0 %v2435
    %2834 = vmatpush.bf16.msra.mxu0 %v2431
    %2835 = vmatpush.bf16.msra.mxu0 %v2427
    %2836 = vmatpush.bf16.msra.mxu0 %v2423
    %2837 = vmatpush.bf16.msra.mxu0 %v2419
    %2838 = vmatpush.bf16.msra.mxu0 %v2415
    %2839 = vmatmul.bf16.gmra.mxu0 %v1917
    %v2840 = vpop.f32.mrf.mxu0
    %v2841 = vadd.f32 %v1728, %v2840
    %v2842 = vpop.f32.mrf.mxu0
    %2843 = vdwg.mxu0
    %2844 = vmatpush.bf16.msra.mxu0 %v2475
    %2845 = vmatpush.bf16.msra.mxu0 %v2471
    %2846 = vmatpush.bf16.msra.mxu0 %v2467
    %2847 = vmatpush.bf16.msra.mxu0 %v2463
    %2848 = vmatpush.bf16.msra.mxu0 %v2459
    %2849 = vmatpush.bf16.msra.mxu0 %v2455
    %2850 = vmatpush.bf16.msra.mxu0 %v2451
    %2851 = vmatpush.bf16.msra.mxu0 %v2447
    %2852 = vmatmul.bf16.gmra.mxu0 %v1918
    %v2853 = vpop.f32.mrf.mxu0
    %v2854 = vadd.f32 %v2841, %v2853
    %v2855 = vpop.f32.mrf.mxu0
    %2856 = vdwg.mxu0
    %2857 = vmatpush.bf16.msra.mxu0 %v2507
    %2858 = vmatpush.bf16.msra.mxu0 %v2503
    %2859 = vmatpush.bf16.msra.mxu0 %v2499
    %2860 = vmatpush.bf16.msra.mxu0 %v2495
    %2861 = vmatpush.bf16.msra.mxu0 %v2491
    %2862 = vmatpush.bf16.msra.mxu0 %v2487
    %2863 = vmatpush.bf16.msra.mxu0 %v2483
    %2864 = vmatpush.bf16.msra.mxu0 %v2479
    %2865 = vmatmul.bf16.gmra.mxu0 %v1919
    %v2866 = vpop.f32.mrf.mxu0
    %v2867 = vadd.f32 %v2854, %v2866
    %v2868 = vpop.f32.mrf.mxu0
    %2869 = vdwg.mxu0
    %2870 = vmatpush.bf16.msra.mxu0 %v2539
    %2871 = vmatpush.bf16.msra.mxu0 %v2535
    %2872 = vmatpush.bf16.msra.mxu0 %v2531
    %2873 = vmatpush.bf16.msra.mxu0 %v2527
    %2874 = vmatpush.bf16.msra.mxu0 %v2523
    %2875 = vmatpush.bf16.msra.mxu0 %v2519
    %2876 = vmatpush.bf16.msra.mxu0 %v2515
    %2877 = vmatpush.bf16.msra.mxu0 %v2511
    %2878 = vmatmul.bf16.gmra.mxu0 %v1920
    %v2879 = vpop.f32.mrf.mxu0
    %v2880 = vadd.f32 %v2867, %v2879
    %v2881 = vpop.f32.mrf.mxu0
    %2882 = vdwg.mxu0
    %2883 = vmatpush.bf16.msra.mxu0 %v2571
    %2884 = vmatpush.bf16.msra.mxu0 %v2567
    %2885 = vmatpush.bf16.msra.mxu0 %v2563
    %2886 = vmatpush.bf16.msra.mxu0 %v2559
    %2887 = vmatpush.bf16.msra.mxu0 %v2555
    %2888 = vmatpush.bf16.msra.mxu0 %v2551
    %2889 = vmatpush.bf16.msra.mxu0 %v2547
    %2890 = vmatpush.bf16.msra.mxu0 %v2543
    %2891 = vmatmul.bf16.gmra.mxu0 %v1921
    %v2892 = vpop.f32.mrf.mxu0
    %v2893 = vadd.f32 %v2880, %v2892
    %v2894 = vpop.f32.mrf.mxu0
    %2895 = vdwg.mxu0
    %2896 = vmatpush.bf16.msra.mxu0 0
    %2897 = vmatpush.bf16.msra.mxu0 0
    %2898 = vmatpush.bf16.msra.mxu0 0
    %2899 = vmatpush.bf16.msra.mxu0 0
    %2900 = vmatpush.bf16.msra.mxu0 0
    %2901 = vmatpush.bf16.msra.mxu0 0
    %2902 = vmatpush.bf16.msra.mxu0 0
    %2903 = vmatpush.bf16.msra.mxu0 %v2745
    %2904 = vmatmul.bf16.gmra.mxu0 %v2739
    %v2905 = vpop.f32.mrf.mxu0
    %v2906 = vadd.f32 %v2893, %v2905
    %v2907 = vpop.f32.mrf.mxu0
    %2908 = vdwg.mxu0
    %2909 = vmatpush.bf16.msra.mxu0 %v2444
    %2910 = vmatpush.bf16.msra.mxu0 %v2440
    %2911 = vmatpush.bf16.msra.mxu0 %v2436
    %2912 = vmatpush.bf16.msra.mxu0 %v2432
    %2913 = vmatpush.bf16.msra.mxu0 %v2428
    %2914 = vmatpush.bf16.msra.mxu0 %v2424
    %2915 = vmatpush.bf16.msra.mxu0 %v2420
    %2916 = vmatpush.bf16.msra.mxu0 %v2416
    %2917 = vmatmul.bf16.gmra.mxu0 %v1917
    %v2918 = vpop.f32.mrf.mxu0
    %v2919 = vadd.f32 %v1806, %v2918
    %v2920 = vpop.f32.mrf.mxu0
    %2921 = vdwg.mxu0
    %2922 = vmatpush.bf16.msra.mxu0 %v2476
    %2923 = vmatpush.bf16.msra.mxu0 %v2472
    %2924 = vmatpush.bf16.msra.mxu0 %v2468
    %2925 = vmatpush.bf16.msra.mxu0 %v2464
    %2926 = vmatpush.bf16.msra.mxu0 %v2460
    %2927 = vmatpush.bf16.msra.mxu0 %v2456
    %2928 = vmatpush.bf16.msra.mxu0 %v2452
    %2929 = vmatpush.bf16.msra.mxu0 %v2448
    %2930 = vmatmul.bf16.gmra.mxu0 %v1918
    %v2931 = vpop.f32.mrf.mxu0
    %v2932 = vadd.f32 %v2919, %v2931
    %v2933 = vpop.f32.mrf.mxu0
    %2934 = vdwg.mxu0
    %2935 = vmatpush.bf16.msra.mxu0 %v2508
    %2936 = vmatpush.bf16.msra.mxu0 %v2504
    %2937 = vmatpush.bf16.msra.mxu0 %v2500
    %2938 = vmatpush.bf16.msra.mxu0 %v2496
    %2939 = vmatpush.bf16.msra.mxu0 %v2492
    %2940 = vmatpush.bf16.msra.mxu0 %v2488
    %2941 = vmatpush.bf16.msra.mxu0 %v2484
    %2942 = vmatpush.bf16.msra.mxu0 %v2480
    %2943 = vmatmul.bf16.gmra.mxu0 %v1919
    %v2944 = vpop.f32.mrf.mxu0
    %v2945 = vadd.f32 %v2932, %v2944
    %v2946 = vpop.f32.mrf.mxu0
    %2947 = vdwg.mxu0
    %2948 = vmatpush.bf16.msra.mxu0 %v2540
    %2949 = vmatpush.bf16.msra.mxu0 %v2536
    %2950 = vmatpush.bf16.msra.mxu0 %v2532
    %2951 = vmatpush.bf16.msra.mxu0 %v2528
    %2952 = vmatpush.bf16.msra.mxu0 %v2524
    %2953 = vmatpush.bf16.msra.mxu0 %v2520
    %2954 = vmatpush.bf16.msra.mxu0 %v2516
    %2955 = vmatpush.bf16.msra.mxu0 %v2512
    %2956 = vmatmul.bf16.gmra.mxu0 %v1920
    %v2957 = vpop.f32.mrf.mxu0
    %v2958 = vadd.f32 %v2945, %v2957
    %v2959 = vpop.f32.mrf.mxu0
    %2960 = vdwg.mxu0
    %2961 = vmatpush.bf16.msra.mxu0 %v2572
    %2962 = vmatpush.bf16.msra.mxu0 %v2568
    %2963 = vmatpush.bf16.msra.mxu0 %v2564
    %2964 = vmatpush.bf16.msra.mxu0 %v2560
    %2965 = vmatpush.bf16.msra.mxu0 %v2556
    %2966 = vmatpush.bf16.msra.mxu0 %v2552
    %2967 = vmatpush.bf16.msra.mxu0 %v2548
    %2968 = vmatpush.bf16.msra.mxu0 %v2544
    %2969 = vmatmul.bf16.gmra.mxu0 %v1921
    %v2970 = vpop.f32.mrf.mxu0
    %v2971 = vadd.f32 %v2958, %v2970
    %v2972 = vpop.f32.mrf.mxu0
    %2973 = vdwg.mxu0
    %2974 = vmatpush.bf16.msra.mxu0 0
    %2975 = vmatpush.bf16.msra.mxu0 0
    %2976 = vmatpush.bf16.msra.mxu0 0
    %2977 = vmatpush.bf16.msra.mxu0 0
    %2978 = vmatpush.bf16.msra.mxu0 0
    %2979 = vmatpush.bf16.msra.mxu0 0
    %2980 = vmatpush.bf16.msra.mxu0 0
    %2981 = vmatpush.bf16.msra.mxu0 %v2748
    %2982 = vmatmul.bf16.gmra.mxu0 %v2739
    %v2983 = vpop.f32.mrf.mxu0
    %v2984 = vadd.f32 %v2971, %v2983
    %v2985 = vpop.f32.mrf.mxu0
    %2986 = vdwg.mxu0
    %2987 = vmatpush.bf16.msra.mxu0 %v2445
    %2988 = vmatpush.bf16.msra.mxu0 %v2441
    %2989 = vmatpush.bf16.msra.mxu0 %v2437
    %2990 = vmatpush.bf16.msra.mxu0 %v2433
    %2991 = vmatpush.bf16.msra.mxu0 %v2429
    %2992 = vmatpush.bf16.msra.mxu0 %v2425
    %2993 = vmatpush.bf16.msra.mxu0 %v2421
    %2994 = vmatpush.bf16.msra.mxu0 %v2417
    %2995 = vmatmul.bf16.gmra.mxu0 %v1917
    %v2996 = vpop.f32.mrf.mxu0
    %v2997 = vadd.f32 %v1884, %v2996
    %v2998 = vpop.f32.mrf.mxu0
    %2999 = vdwg.mxu0
    %3000 = vmatpush.bf16.msra.mxu0 %v2477
    %3001 = vmatpush.bf16.msra.mxu0 %v2473
    %3002 = vmatpush.bf16.msra.mxu0 %v2469
    %3003 = vmatpush.bf16.msra.mxu0 %v2465
    %3004 = vmatpush.bf16.msra.mxu0 %v2461
    %3005 = vmatpush.bf16.msra.mxu0 %v2457
    %3006 = vmatpush.bf16.msra.mxu0 %v2453
    %3007 = vmatpush.bf16.msra.mxu0 %v2449
    %3008 = vmatmul.bf16.gmra.mxu0 %v1918
    %v3009 = vpop.f32.mrf.mxu0
    %v3010 = vadd.f32 %v2997, %v3009
    %v3011 = vpop.f32.mrf.mxu0
    %3012 = vdwg.mxu0
    %3013 = vmatpush.bf16.msra.mxu0 %v2509
    %3014 = vmatpush.bf16.msra.mxu0 %v2505
    %3015 = vmatpush.bf16.msra.mxu0 %v2501
    %3016 = vmatpush.bf16.msra.mxu0 %v2497
    %3017 = vmatpush.bf16.msra.mxu0 %v2493
    %3018 = vmatpush.bf16.msra.mxu0 %v2489
    %3019 = vmatpush.bf16.msra.mxu0 %v2485
    %3020 = vmatpush.bf16.msra.mxu0 %v2481
    %3021 = vmatmul.bf16.gmra.mxu0 %v1919
    %v3022 = vpop.f32.mrf.mxu0
    %v3023 = vadd.f32 %v3010, %v3022
    %v3024 = vpop.f32.mrf.mxu0
    %3025 = vdwg.mxu0
    %3026 = vmatpush.bf16.msra.mxu0 %v2541
    %3027 = vmatpush.bf16.msra.mxu0 %v2537
    %3028 = vmatpush.bf16.msra.mxu0 %v2533
    %3029 = vmatpush.bf16.msra.mxu0 %v2529
    %3030 = vmatpush.bf16.msra.mxu0 %v2525
    %3031 = vmatpush.bf16.msra.mxu0 %v2521
    %3032 = vmatpush.bf16.msra.mxu0 %v2517
    %3033 = vmatpush.bf16.msra.mxu0 %v2513
    %3034 = vmatmul.bf16.gmra.mxu0 %v1920
    %v3035 = vpop.f32.mrf.mxu0
    %v3036 = vadd.f32 %v3023, %v3035
    %v3037 = vpop.f32.mrf.mxu0
    %3038 = vdwg.mxu0
    %3039 = vmatpush.bf16.msra.mxu0 %v2573
    %3040 = vmatpush.bf16.msra.mxu0 %v2569
    %3041 = vmatpush.bf16.msra.mxu0 %v2565
    %3042 = vmatpush.bf16.msra.mxu0 %v2561
    %3043 = vmatpush.bf16.msra.mxu0 %v2557
    %3044 = vmatpush.bf16.msra.mxu0 %v2553
    %3045 = vmatpush.bf16.msra.mxu0 %v2549
    %3046 = vmatpush.bf16.msra.mxu0 %v2545
    %3047 = vmatmul.bf16.gmra.mxu0 %v1921
    %v3048 = vpop.f32.mrf.mxu0
    %v3049 = vadd.f32 %v3036, %v3048
    %v3050 = vpop.f32.mrf.mxu0
    %3051 = vdwg.mxu0
    %3052 = vmatpush.bf16.msra.mxu0 0
    %3053 = vmatpush.bf16.msra.mxu0 0
    %3054 = vmatpush.bf16.msra.mxu0 0
    %3055 = vmatpush.bf16.msra.mxu0 0
    %3056 = vmatpush.bf16.msra.mxu0 0
    %3057 = vmatpush.bf16.msra.mxu0 0
    %3058 = vmatpush.bf16.msra.mxu0 0
    %3059 = vmatpush.bf16.msra.mxu0 %v2751
    %3060 = vmatmul.bf16.gmra.mxu0 %v2739
    %v3061 = vpop.f32.mrf.mxu0
    %v3062 = vadd.f32 %v3049, %v3061
    %v3063 = vpop.f32.mrf.mxu0
    %3064 = vdwg.mxu0
    %v3065 = vld [vmem:[%s4] sm:$0xf]
    %v3067 = vperm.slane %v3065, 0
    %v3068 = vperm.slane %v3065, 1
    %v3069 = vperm.slane %v3065, 2
    %v3070 = vperm.slane %v3065, 3
    %v3075 = vadd.f32 %v2828, %v3067
    %v3076 = vadd.f32 %v2906, %v3068
    %v3077 = vadd.f32 %v2984, %v3069
    %v3078 = vadd.f32 %v3062, %v3070
    %vm3079 = vcmp.gt.f32.partialorder %v3075, 0.0
    %vm3080 = vcmp.gt.f32.partialorder %v3076, 0.0
    %vm3081 = vcmp.gt.f32.partialorder %v3077, 0.0
    %vm3082 = vcmp.gt.f32.partialorder %v3078, 0.0
    %v3083 = vmul.f32 %v3075, 0.01
    %v3084 = vmul.f32 %v3076, 0.01
    %v3085 = vmul.f32 %v3077, 0.01
    %v3086 = vmul.f32 %v3078, 0.01
    %v3087 = vsel %vm3079, %v3075, %v3083
    %v3088 = vsel %vm3080, %v3076, %v3084
    %v3089 = vsel %vm3081, %v3077, %v3085
    %v3090 = vsel %vm3082, %v3078, %v3086
    %v3091 = vpack.c.bf16 %v3087, %v3087
    %v3092 = vpack.c.bf16 %v3088, %v3088
    %v3093 = vpack.c.bf16 %v3089, %v3089
    %v3094 = vpack.c.bf16 %v3090, %v3090
    %v3095 = vld [vmem:[#allocation7] sm:$0xff]
    %v3096 = vld [vmem:[#allocation7 + $0x8] sm:$0xff]
    %v3097 = vld [vmem:[#allocation7 + $0x10] sm:$0xff]
    %v3098 = vld [vmem:[#allocation7 + $0x18] sm:$0xff]
    %v3099 = vld [vmem:[#allocation7 + $0x20] sm:$0xff]
    %v3100 = vld [vmem:[#allocation7 + $0x28] sm:$0xff]
    %v3101 = vld [vmem:[#allocation7 + $0x30] sm:$0xff]
    %v3102 = vld [vmem:[#allocation7 + $0x38] sm:$0xff]
    %v3103 = vld [vmem:[#allocation7 + $0x40] sm:$0xff]
    %v3104 = vld [vmem:[#allocation7 + $0x48] sm:$0xff]
    %v3105 = vld [vmem:[#allocation7 + $0x50] sm:$0xff]
    %v3106 = vld [vmem:[#allocation7 + $0x58] sm:$0xff]
    %v3107 = vld [vmem:[#allocation7 + $0x60] sm:$0xff]
    %v3108 = vld [vmem:[#allocation7 + $0x68] sm:$0xff]
    %v3109 = vld [vmem:[#allocation7 + $0x70] sm:$0xff]
    %v3110 = vld [vmem:[#allocation7 + $0x78] sm:$0xff]
    %v3111 = vld [vmem:[#allocation7 + $0x80] sm:$0xff]
    %v3112 = vld [vmem:[#allocation7 + $0x88] sm:$0xff]
    %v3113 = vld [vmem:[#allocation7 + $0x90] sm:$0xff]
    %v3114 = vld [vmem:[#allocation7 + $0x98] sm:$0xff]
    %v3115 = vld [vmem:[#allocation7 + $0xa0] sm:$0xff]
    %v3116 = vld [vmem:[#allocation7 + $0xa8] sm:$0xff]
    %v3117 = vld [vmem:[#allocation7 + $0xb0] sm:$0xff]
    %v3118 = vld [vmem:[#allocation7 + $0xb8] sm:$0xff]
    %v3119 = vld [vmem:[#allocation7 + $0xc0] sm:$0xff]
    %v3120 = vld [vmem:[#allocation7 + $0xc8] sm:$0xff]
    %v3121 = vld [vmem:[#allocation7 + $0xd0] sm:$0xff]
    %v3122 = vld [vmem:[#allocation7 + $0xd8] sm:$0xff]
    %v3123 = vld [vmem:[#allocation7 + $0xe0] sm:$0xff]
    %v3124 = vld [vmem:[#allocation7 + $0xe8] sm:$0xff]
    %v3125 = vld [vmem:[#allocation7 + $0xf0] sm:$0xff]
    %v3126 = vld [vmem:[#allocation7 + $0xf8] sm:$0xff]
    %v3127 = vld [vmem:[#allocation7 + $0x100] sm:$0xff]
    %v3128 = vld [vmem:[#allocation7 + $0x108] sm:$0xff]
    %v3129 = vld [vmem:[#allocation7 + $0x110] sm:$0xff]
    %v3130 = vld [vmem:[#allocation7 + $0x118] sm:$0xff]
    %v3131 = vld [vmem:[#allocation7 + $0x120] sm:$0xff]
    %v3132 = vld [vmem:[#allocation7 + $0x128] sm:$0xff]
    %v3133 = vld [vmem:[#allocation7 + $0x130] sm:$0xff]
    %v3134 = vld [vmem:[#allocation7 + $0x138] sm:$0xff]
    %v3135 = vld [vmem:[#allocation7 + $0x140] sm:$0xff]
    %v3136 = vld [vmem:[#allocation7 + $0x148] sm:$0xff]
    %v3137 = vld [vmem:[#allocation7 + $0x150] sm:$0xff]
    %v3138 = vld [vmem:[#allocation7 + $0x158] sm:$0xff]
    %v3139 = vld [vmem:[#allocation7 + $0x160] sm:$0xff]
    %v3140 = vld [vmem:[#allocation7 + $0x168] sm:$0xff]
    %v3141 = vld [vmem:[#allocation7 + $0x170] sm:$0xff]
    %v3142 = vld [vmem:[#allocation7 + $0x178] sm:$0xff]
    %v3143 = vld [vmem:[#allocation7 + $0x180] sm:$0xff]
    %v3144 = vld [vmem:[#allocation7 + $0x188] sm:$0xff]
    %v3145 = vld [vmem:[#allocation7 + $0x190] sm:$0xff]
    %v3146 = vld [vmem:[#allocation7 + $0x198] sm:$0xff]
    %v3147 = vld [vmem:[#allocation7 + $0x1a0] sm:$0xff]
    %v3148 = vld [vmem:[#allocation7 + $0x1a8] sm:$0xff]
    %v3149 = vld [vmem:[#allocation7 + $0x1b0] sm:$0xff]
    %v3150 = vld [vmem:[#allocation7 + $0x1b8] sm:$0xff]
    %v3151 = vld [vmem:[#allocation7 + $0x1c0] sm:$0xff]
    %v3152 = vld [vmem:[#allocation7 + $0x1c8] sm:$0xff]
    %v3153 = vld [vmem:[#allocation7 + $0x1d0] sm:$0xff]
    %v3154 = vld [vmem:[#allocation7 + $0x1d8] sm:$0xff]
    %v3155 = vld [vmem:[#allocation7 + $0x1e0] sm:$0xff]
    %v3156 = vld [vmem:[#allocation7 + $0x1e8] sm:$0xff]
    %v3157 = vld [vmem:[#allocation7 + $0x1f0] sm:$0xff]
    %v3158 = vld [vmem:[#allocation7 + $0x1f8] sm:$0xff]
    %v3159 = vld [vmem:[#allocation7 + $0x200] sm:$0xff]
    %v3160 = vld [vmem:[#allocation7 + $0x208] sm:$0xff]
    %v3161 = vld [vmem:[#allocation7 + $0x210] sm:$0xff]
    %v3162 = vld [vmem:[#allocation7 + $0x218] sm:$0xff]
    %v3163 = vld [vmem:[#allocation7 + $0x220] sm:$0xff]
    %v3164 = vld [vmem:[#allocation7 + $0x228] sm:$0xff]
    %v3165 = vld [vmem:[#allocation7 + $0x230] sm:$0xff]
    %v3166 = vld [vmem:[#allocation7 + $0x238] sm:$0xff]
    %v3167 = vld [vmem:[#allocation7 + $0x240] sm:$0xff]
    %v3168 = vld [vmem:[#allocation7 + $0x248] sm:$0xff]
    %v3169 = vld [vmem:[#allocation7 + $0x250] sm:$0xff]
    %v3170 = vld [vmem:[#allocation7 + $0x258] sm:$0xff]
    %v3171 = vld [vmem:[#allocation7 + $0x260] sm:$0xff]
    %v3172 = vld [vmem:[#allocation7 + $0x268] sm:$0xff]
    %v3173 = vld [vmem:[#allocation7 + $0x270] sm:$0xff]
    %v3174 = vld [vmem:[#allocation7 + $0x278] sm:$0xff]
    %v3175 = vld [vmem:[#allocation7 + $0x280] sm:$0xff]
    %v3176 = vld [vmem:[#allocation7 + $0x288] sm:$0xff]
    %v3177 = vld [vmem:[#allocation7 + $0x290] sm:$0xff]
    %v3178 = vld [vmem:[#allocation7 + $0x298] sm:$0xff]
    %v3179 = vld [vmem:[#allocation7 + $0x2a0] sm:$0xff]
    %v3180 = vld [vmem:[#allocation7 + $0x2a8] sm:$0xff]
    %v3181 = vld [vmem:[#allocation7 + $0x2b0] sm:$0xff]
    %v3182 = vld [vmem:[#allocation7 + $0x2b8] sm:$0xff]
    %v3183 = vld [vmem:[#allocation7 + $0x2c0] sm:$0xff]
    %v3184 = vld [vmem:[#allocation7 + $0x2c8] sm:$0xff]
    %v3185 = vld [vmem:[#allocation7 + $0x2d0] sm:$0xff]
    %v3186 = vld [vmem:[#allocation7 + $0x2d8] sm:$0xff]
    %v3187 = vld [vmem:[#allocation7 + $0x2e0] sm:$0xff]
    %v3188 = vld [vmem:[#allocation7 + $0x2e8] sm:$0xff]
    %v3189 = vld [vmem:[#allocation7 + $0x2f0] sm:$0xff]
    %v3190 = vld [vmem:[#allocation7 + $0x2f8] sm:$0xff]
    %v3191 = vld [vmem:[#allocation7 + $0x300] sm:$0xff]
    %v3192 = vld [vmem:[#allocation7 + $0x308] sm:$0xff]
    %v3193 = vld [vmem:[#allocation7 + $0x310] sm:$0xff]
    %v3194 = vld [vmem:[#allocation7 + $0x318] sm:$0xff]
    %v3195 = vld [vmem:[#allocation7 + $0x320] sm:$0xff]
    %v3196 = vld [vmem:[#allocation7 + $0x328] sm:$0xff]
    %v3197 = vld [vmem:[#allocation7 + $0x330] sm:$0xff]
    %v3198 = vld [vmem:[#allocation7 + $0x338] sm:$0xff]
    %v3199 = vld [vmem:[#allocation7 + $0x340] sm:$0xff]
    %v3200 = vld [vmem:[#allocation7 + $0x348] sm:$0xff]
    %v3201 = vld [vmem:[#allocation7 + $0x350] sm:$0xff]
    %v3202 = vld [vmem:[#allocation7 + $0x358] sm:$0xff]
    %v3203 = vld [vmem:[#allocation7 + $0x360] sm:$0xff]
    %v3204 = vld [vmem:[#allocation7 + $0x368] sm:$0xff]
    %v3205 = vld [vmem:[#allocation7 + $0x370] sm:$0xff]
    %v3206 = vld [vmem:[#allocation7 + $0x378] sm:$0xff]
    %v3207 = vld [vmem:[#allocation7 + $0x380] sm:$0xff]
    %v3208 = vld [vmem:[#allocation7 + $0x388] sm:$0xff]
    %v3209 = vld [vmem:[#allocation7 + $0x390] sm:$0xff]
    %v3210 = vld [vmem:[#allocation7 + $0x398] sm:$0xff]
    %v3211 = vld [vmem:[#allocation7 + $0x3a0] sm:$0xff]
    %v3212 = vld [vmem:[#allocation7 + $0x3a8] sm:$0xff]
    %v3213 = vld [vmem:[#allocation7 + $0x3b0] sm:$0xff]
    %v3214 = vld [vmem:[#allocation7 + $0x3b8] sm:$0xff]
    %v3215 = vld [vmem:[#allocation7 + $0x3c0] sm:$0xff]
    %v3216 = vld [vmem:[#allocation7 + $0x3c8] sm:$0xff]
    %v3217 = vld [vmem:[#allocation7 + $0x3d0] sm:$0xff]
    %v3218 = vld [vmem:[#allocation7 + $0x3d8] sm:$0xff]
    %v3219 = vld [vmem:[#allocation7 + $0x3e0] sm:$0xff]
    %v3220 = vld [vmem:[#allocation7 + $0x3e8] sm:$0xff]
    %v3221 = vld [vmem:[#allocation7 + $0x3f0] sm:$0xff]
    %v3222 = vld [vmem:[#allocation7 + $0x3f8] sm:$0xff]
    %v3223 = vld [vmem:[%s6] sm:$0xf]
    %v3225 = vperm.slane %v3223, 0
    %v3226 = vperm.slane %v3223, 1
    %v3227 = vperm.slane %v3223, 2
    %v3228 = vperm.slane %v3223, 3
    %v3361 = vunpack.c.l.b16 %v3095
    %v3362 = vunpack.c.h.b16 %v3095
    %v3363 = vunpack.c.l.b16 %v3096
    %v3364 = vunpack.c.h.b16 %v3096
    %v3365 = vunpack.c.l.b16 %v3097
    %v3366 = vunpack.c.h.b16 %v3097
    %v3367 = vunpack.c.l.b16 %v3098
    %v3368 = vunpack.c.h.b16 %v3098
    %v3369 = vunpack.c.l.b16 %v3099
    %v3370 = vunpack.c.h.b16 %v3099
    %v3371 = vunpack.c.l.b16 %v3100
    %v3372 = vunpack.c.h.b16 %v3100
    %v3373 = vunpack.c.l.b16 %v3101
    %v3374 = vunpack.c.h.b16 %v3101
    %v3375 = vunpack.c.l.b16 %v3102
    %v3376 = vunpack.c.h.b16 %v3102
    %v3377 = vunpack.c.l.b16 %v3103
    %v3378 = vunpack.c.h.b16 %v3103
    %v3379 = vunpack.c.l.b16 %v3104
    %v3380 = vunpack.c.h.b16 %v3104
    %v3381 = vunpack.c.l.b16 %v3105
    %v3382 = vunpack.c.h.b16 %v3105
    %v3383 = vunpack.c.l.b16 %v3106
    %v3384 = vunpack.c.h.b16 %v3106
    %v3385 = vunpack.c.l.b16 %v3107
    %v3386 = vunpack.c.h.b16 %v3107
    %v3387 = vunpack.c.l.b16 %v3108
    %v3388 = vunpack.c.h.b16 %v3108
    %v3389 = vunpack.c.l.b16 %v3109
    %v3390 = vunpack.c.h.b16 %v3109
    %v3391 = vunpack.c.l.b16 %v3110
    %v3392 = vunpack.c.h.b16 %v3110
    %v3393 = vunpack.c.l.b16 %v3111
    %v3394 = vunpack.c.h.b16 %v3111
    %v3395 = vunpack.c.l.b16 %v3112
    %v3396 = vunpack.c.h.b16 %v3112
    %v3397 = vunpack.c.l.b16 %v3113
    %v3398 = vunpack.c.h.b16 %v3113
    %v3399 = vunpack.c.l.b16 %v3114
    %v3400 = vunpack.c.h.b16 %v3114
    %v3401 = vunpack.c.l.b16 %v3115
    %v3402 = vunpack.c.h.b16 %v3115
    %v3403 = vunpack.c.l.b16 %v3116
    %v3404 = vunpack.c.h.b16 %v3116
    %v3405 = vunpack.c.l.b16 %v3117
    %v3406 = vunpack.c.h.b16 %v3117
    %v3407 = vunpack.c.l.b16 %v3118
    %v3408 = vunpack.c.h.b16 %v3118
    %v3409 = vunpack.c.l.b16 %v3119
    %v3410 = vunpack.c.h.b16 %v3119
    %v3411 = vunpack.c.l.b16 %v3120
    %v3412 = vunpack.c.h.b16 %v3120
    %v3413 = vunpack.c.l.b16 %v3121
    %v3414 = vunpack.c.h.b16 %v3121
    %v3415 = vunpack.c.l.b16 %v3122
    %v3416 = vunpack.c.h.b16 %v3122
    %v3417 = vunpack.c.l.b16 %v3123
    %v3418 = vunpack.c.h.b16 %v3123
    %v3419 = vunpack.c.l.b16 %v3124
    %v3420 = vunpack.c.h.b16 %v3124
    %v3421 = vunpack.c.l.b16 %v3125
    %v3422 = vunpack.c.h.b16 %v3125
    %v3423 = vunpack.c.l.b16 %v3126
    %v3424 = vunpack.c.h.b16 %v3126
    %v3425 = vunpack.c.l.b16 %v3127
    %v3426 = vunpack.c.h.b16 %v3127
    %v3427 = vunpack.c.l.b16 %v3128
    %v3428 = vunpack.c.h.b16 %v3128
    %v3429 = vunpack.c.l.b16 %v3129
    %v3430 = vunpack.c.h.b16 %v3129
    %v3431 = vunpack.c.l.b16 %v3130
    %v3432 = vunpack.c.h.b16 %v3130
    %v3433 = vunpack.c.l.b16 %v3131
    %v3434 = vunpack.c.h.b16 %v3131
    %v3435 = vunpack.c.l.b16 %v3132
    %v3436 = vunpack.c.h.b16 %v3132
    %v3437 = vunpack.c.l.b16 %v3133
    %v3438 = vunpack.c.h.b16 %v3133
    %v3439 = vunpack.c.l.b16 %v3134
    %v3440 = vunpack.c.h.b16 %v3134
    %v3441 = vunpack.c.l.b16 %v3135
    %v3442 = vunpack.c.h.b16 %v3135
    %v3443 = vunpack.c.l.b16 %v3136
    %v3444 = vunpack.c.h.b16 %v3136
    %v3445 = vunpack.c.l.b16 %v3137
    %v3446 = vunpack.c.h.b16 %v3137
    %v3447 = vunpack.c.l.b16 %v3138
    %v3448 = vunpack.c.h.b16 %v3138
    %v3449 = vunpack.c.l.b16 %v3139
    %v3450 = vunpack.c.h.b16 %v3139
    %v3451 = vunpack.c.l.b16 %v3140
    %v3452 = vunpack.c.h.b16 %v3140
    %v3453 = vunpack.c.l.b16 %v3141
    %v3454 = vunpack.c.h.b16 %v3141
    %v3455 = vunpack.c.l.b16 %v3142
    %v3456 = vunpack.c.h.b16 %v3142
    %v3457 = vunpack.c.l.b16 %v3143
    %v3458 = vunpack.c.h.b16 %v3143
    %v3459 = vunpack.c.l.b16 %v3144
    %v3460 = vunpack.c.h.b16 %v3144
    %v3461 = vunpack.c.l.b16 %v3145
    %v3462 = vunpack.c.h.b16 %v3145
    %v3463 = vunpack.c.l.b16 %v3146
    %v3464 = vunpack.c.h.b16 %v3146
    %v3465 = vunpack.c.l.b16 %v3147
    %v3466 = vunpack.c.h.b16 %v3147
    %v3467 = vunpack.c.l.b16 %v3148
    %v3468 = vunpack.c.h.b16 %v3148
    %v3469 = vunpack.c.l.b16 %v3149
    %v3470 = vunpack.c.h.b16 %v3149
    %v3471 = vunpack.c.l.b16 %v3150
    %v3472 = vunpack.c.h.b16 %v3150
    %v3473 = vunpack.c.l.b16 %v3151
    %v3474 = vunpack.c.h.b16 %v3151
    %v3475 = vunpack.c.l.b16 %v3152
    %v3476 = vunpack.c.h.b16 %v3152
    %v3477 = vunpack.c.l.b16 %v3153
    %v3478 = vunpack.c.h.b16 %v3153
    %v3479 = vunpack.c.l.b16 %v3154
    %v3480 = vunpack.c.h.b16 %v3154
    %v3481 = vunpack.c.l.b16 %v3155
    %v3482 = vunpack.c.h.b16 %v3155
    %v3483 = vunpack.c.l.b16 %v3156
    %v3484 = vunpack.c.h.b16 %v3156
    %v3485 = vunpack.c.l.b16 %v3157
    %v3486 = vunpack.c.h.b16 %v3157
    %v3487 = vunpack.c.l.b16 %v3158
    %v3488 = vunpack.c.h.b16 %v3158
    %v3489 = vunpack.c.l.b16 %v3159
    %v3490 = vunpack.c.h.b16 %v3159
    %v3491 = vunpack.c.l.b16 %v3160
    %v3492 = vunpack.c.h.b16 %v3160
    %v3493 = vunpack.c.l.b16 %v3161
    %v3494 = vunpack.c.h.b16 %v3161
    %v3495 = vunpack.c.l.b16 %v3162
    %v3496 = vunpack.c.h.b16 %v3162
    %v3497 = vunpack.c.l.b16 %v3163
    %v3498 = vunpack.c.h.b16 %v3163
    %v3499 = vunpack.c.l.b16 %v3164
    %v3500 = vunpack.c.h.b16 %v3164
    %v3501 = vunpack.c.l.b16 %v3165
    %v3502 = vunpack.c.h.b16 %v3165
    %v3503 = vunpack.c.l.b16 %v3166
    %v3504 = vunpack.c.h.b16 %v3166
    %v3505 = vunpack.c.l.b16 %v3167
    %v3506 = vunpack.c.h.b16 %v3167
    %v3507 = vunpack.c.l.b16 %v3168
    %v3508 = vunpack.c.h.b16 %v3168
    %v3509 = vunpack.c.l.b16 %v3169
    %v3510 = vunpack.c.h.b16 %v3169
    %v3511 = vunpack.c.l.b16 %v3170
    %v3512 = vunpack.c.h.b16 %v3170
    %v3513 = vunpack.c.l.b16 %v3171
    %v3514 = vunpack.c.h.b16 %v3171
    %v3515 = vunpack.c.l.b16 %v3172
    %v3516 = vunpack.c.h.b16 %v3172
    %v3517 = vunpack.c.l.b16 %v3173
    %v3518 = vunpack.c.h.b16 %v3173
    %v3519 = vunpack.c.l.b16 %v3174
    %v3520 = vunpack.c.h.b16 %v3174
    %v3521 = vunpack.c.l.b16 %v3175
    %v3522 = vunpack.c.h.b16 %v3175
    %v3523 = vunpack.c.l.b16 %v3176
    %v3524 = vunpack.c.h.b16 %v3176
    %v3525 = vunpack.c.l.b16 %v3177
    %v3526 = vunpack.c.h.b16 %v3177
    %v3527 = vunpack.c.l.b16 %v3178
    %v3528 = vunpack.c.h.b16 %v3178
    %v3529 = vunpack.c.l.b16 %v3179
    %v3530 = vunpack.c.h.b16 %v3179
    %v3531 = vunpack.c.l.b16 %v3180
    %v3532 = vunpack.c.h.b16 %v3180
    %v3533 = vunpack.c.l.b16 %v3181
    %v3534 = vunpack.c.h.b16 %v3181
    %v3535 = vunpack.c.l.b16 %v3182
    %v3536 = vunpack.c.h.b16 %v3182
    %v3537 = vunpack.c.l.b16 %v3183
    %v3538 = vunpack.c.h.b16 %v3183
    %v3539 = vunpack.c.l.b16 %v3184
    %v3540 = vunpack.c.h.b16 %v3184
    %v3541 = vunpack.c.l.b16 %v3185
    %v3542 = vunpack.c.h.b16 %v3185
    %v3543 = vunpack.c.l.b16 %v3186
    %v3544 = vunpack.c.h.b16 %v3186
    %v3545 = vunpack.c.l.b16 %v3187
    %v3546 = vunpack.c.h.b16 %v3187
    %v3547 = vunpack.c.l.b16 %v3188
    %v3548 = vunpack.c.h.b16 %v3188
    %v3549 = vunpack.c.l.b16 %v3189
    %v3550 = vunpack.c.h.b16 %v3189
    %v3551 = vunpack.c.l.b16 %v3190
    %v3552 = vunpack.c.h.b16 %v3190
    %v3553 = vunpack.c.l.b16 %v3191
    %v3554 = vunpack.c.h.b16 %v3191
    %v3555 = vunpack.c.l.b16 %v3192
    %v3556 = vunpack.c.h.b16 %v3192
    %v3557 = vunpack.c.l.b16 %v3193
    %v3558 = vunpack.c.h.b16 %v3193
    %v3559 = vunpack.c.l.b16 %v3194
    %v3560 = vunpack.c.h.b16 %v3194
    %v3561 = vunpack.c.l.b16 %v3195
    %v3562 = vunpack.c.h.b16 %v3195
    %v3563 = vunpack.c.l.b16 %v3196
    %v3564 = vunpack.c.h.b16 %v3196
    %v3565 = vunpack.c.l.b16 %v3197
    %v3566 = vunpack.c.h.b16 %v3197
    %v3567 = vunpack.c.l.b16 %v3198
    %v3568 = vunpack.c.h.b16 %v3198
    %v3569 = vunpack.c.l.b16 %v3199
    %v3570 = vunpack.c.h.b16 %v3199
    %v3571 = vunpack.c.l.b16 %v3200
    %v3572 = vunpack.c.h.b16 %v3200
    %v3573 = vunpack.c.l.b16 %v3201
    %v3574 = vunpack.c.h.b16 %v3201
    %v3575 = vunpack.c.l.b16 %v3202
    %v3576 = vunpack.c.h.b16 %v3202
    %v3577 = vunpack.c.l.b16 %v3203
    %v3578 = vunpack.c.h.b16 %v3203
    %v3579 = vunpack.c.l.b16 %v3204
    %v3580 = vunpack.c.h.b16 %v3204
    %v3581 = vunpack.c.l.b16 %v3205
    %v3582 = vunpack.c.h.b16 %v3205
    %v3583 = vunpack.c.l.b16 %v3206
    %v3584 = vunpack.c.h.b16 %v3206
    %v3585 = vunpack.c.l.b16 %v3207
    %v3586 = vunpack.c.h.b16 %v3207
    %v3587 = vunpack.c.l.b16 %v3208
    %v3588 = vunpack.c.h.b16 %v3208
    %v3589 = vunpack.c.l.b16 %v3209
    %v3590 = vunpack.c.h.b16 %v3209
    %v3591 = vunpack.c.l.b16 %v3210
    %v3592 = vunpack.c.h.b16 %v3210
    %v3593 = vunpack.c.l.b16 %v3211
    %v3594 = vunpack.c.h.b16 %v3211
    %v3595 = vunpack.c.l.b16 %v3212
    %v3596 = vunpack.c.h.b16 %v3212
    %v3597 = vunpack.c.l.b16 %v3213
    %v3598 = vunpack.c.h.b16 %v3213
    %v3599 = vunpack.c.l.b16 %v3214
    %v3600 = vunpack.c.h.b16 %v3214
    %v3601 = vunpack.c.l.b16 %v3215
    %v3602 = vunpack.c.h.b16 %v3215
    %v3603 = vunpack.c.l.b16 %v3216
    %v3604 = vunpack.c.h.b16 %v3216
    %v3605 = vunpack.c.l.b16 %v3217
    %v3606 = vunpack.c.h.b16 %v3217
    %v3607 = vunpack.c.l.b16 %v3218
    %v3608 = vunpack.c.h.b16 %v3218
    %v3609 = vunpack.c.l.b16 %v3219
    %v3610 = vunpack.c.h.b16 %v3219
    %v3611 = vunpack.c.l.b16 %v3220
    %v3612 = vunpack.c.h.b16 %v3220
    %v3613 = vunpack.c.l.b16 %v3221
    %v3614 = vunpack.c.h.b16 %v3221
    %v3615 = vunpack.c.l.b16 %v3222
    %v3616 = vunpack.c.h.b16 %v3222
    %v3617 = vpack.c.b16 %v3365, %v3361
    %v3618 = vpack.c.b16 %v3366, %v3362
    %v3619 = vpack.c.b16 %v3367, %v3363
    %v3620 = vpack.c.b16 %v3368, %v3364
    %v3621 = vpack.c.b16 %v3373, %v3369
    %v3622 = vpack.c.b16 %v3374, %v3370
    %v3623 = vpack.c.b16 %v3375, %v3371
    %v3624 = vpack.c.b16 %v3376, %v3372
    %v3625 = vpack.c.b16 %v3381, %v3377
    %v3626 = vpack.c.b16 %v3382, %v3378
    %v3627 = vpack.c.b16 %v3383, %v3379
    %v3628 = vpack.c.b16 %v3384, %v3380
    %v3629 = vpack.c.b16 %v3389, %v3385
    %v3630 = vpack.c.b16 %v3390, %v3386
    %v3631 = vpack.c.b16 %v3391, %v3387
    %v3632 = vpack.c.b16 %v3392, %v3388
    %v3633 = vpack.c.b16 %v3397, %v3393
    %v3634 = vpack.c.b16 %v3398, %v3394
    %v3635 = vpack.c.b16 %v3399, %v3395
    %v3636 = vpack.c.b16 %v3400, %v3396
    %v3637 = vpack.c.b16 %v3405, %v3401
    %v3638 = vpack.c.b16 %v3406, %v3402
    %v3639 = vpack.c.b16 %v3407, %v3403
    %v3640 = vpack.c.b16 %v3408, %v3404
    %v3641 = vpack.c.b16 %v3413, %v3409
    %v3642 = vpack.c.b16 %v3414, %v3410
    %v3643 = vpack.c.b16 %v3415, %v3411
    %v3644 = vpack.c.b16 %v3416, %v3412
    %v3645 = vpack.c.b16 %v3421, %v3417
    %v3646 = vpack.c.b16 %v3422, %v3418
    %v3647 = vpack.c.b16 %v3423, %v3419
    %v3648 = vpack.c.b16 %v3424, %v3420
    %v3649 = vpack.c.b16 %v3429, %v3425
    %v3650 = vpack.c.b16 %v3430, %v3426
    %v3651 = vpack.c.b16 %v3431, %v3427
    %v3652 = vpack.c.b16 %v3432, %v3428
    %v3653 = vpack.c.b16 %v3437, %v3433
    %v3654 = vpack.c.b16 %v3438, %v3434
    %v3655 = vpack.c.b16 %v3439, %v3435
    %v3656 = vpack.c.b16 %v3440, %v3436
    %v3657 = vpack.c.b16 %v3445, %v3441
    %v3658 = vpack.c.b16 %v3446, %v3442
    %v3659 = vpack.c.b16 %v3447, %v3443
    %v3660 = vpack.c.b16 %v3448, %v3444
    %v3661 = vpack.c.b16 %v3453, %v3449
    %v3662 = vpack.c.b16 %v3454, %v3450
    %v3663 = vpack.c.b16 %v3455, %v3451
    %v3664 = vpack.c.b16 %v3456, %v3452
    %v3665 = vpack.c.b16 %v3461, %v3457
    %v3666 = vpack.c.b16 %v3462, %v3458
    %v3667 = vpack.c.b16 %v3463, %v3459
    %v3668 = vpack.c.b16 %v3464, %v3460
    %v3669 = vpack.c.b16 %v3469, %v3465
    %v3670 = vpack.c.b16 %v3470, %v3466
    %v3671 = vpack.c.b16 %v3471, %v3467
    %v3672 = vpack.c.b16 %v3472, %v3468
    %v3673 = vpack.c.b16 %v3477, %v3473
    %v3674 = vpack.c.b16 %v3478, %v3474
    %v3675 = vpack.c.b16 %v3479, %v3475
    %v3676 = vpack.c.b16 %v3480, %v3476
    %v3677 = vpack.c.b16 %v3485, %v3481
    %v3678 = vpack.c.b16 %v3486, %v3482
    %v3679 = vpack.c.b16 %v3487, %v3483
    %v3680 = vpack.c.b16 %v3488, %v3484
    %v3681 = vpack.c.b16 %v3493, %v3489
    %v3682 = vpack.c.b16 %v3494, %v3490
    %v3683 = vpack.c.b16 %v3495, %v3491
    %v3684 = vpack.c.b16 %v3496, %v3492
    %v3685 = vpack.c.b16 %v3501, %v3497
    %v3686 = vpack.c.b16 %v3502, %v3498
    %v3687 = vpack.c.b16 %v3503, %v3499
    %v3688 = vpack.c.b16 %v3504, %v3500
    %v3689 = vpack.c.b16 %v3509, %v3505
    %v3690 = vpack.c.b16 %v3510, %v3506
    %v3691 = vpack.c.b16 %v3511, %v3507
    %v3692 = vpack.c.b16 %v3512, %v3508
    %v3693 = vpack.c.b16 %v3517, %v3513
    %v3694 = vpack.c.b16 %v3518, %v3514
    %v3695 = vpack.c.b16 %v3519, %v3515
    %v3696 = vpack.c.b16 %v3520, %v3516
    %v3697 = vpack.c.b16 %v3525, %v3521
    %v3698 = vpack.c.b16 %v3526, %v3522
    %v3699 = vpack.c.b16 %v3527, %v3523
    %v3700 = vpack.c.b16 %v3528, %v3524
    %v3701 = vpack.c.b16 %v3533, %v3529
    %v3702 = vpack.c.b16 %v3534, %v3530
    %v3703 = vpack.c.b16 %v3535, %v3531
    %v3704 = vpack.c.b16 %v3536, %v3532
    %v3705 = vpack.c.b16 %v3541, %v3537
    %v3706 = vpack.c.b16 %v3542, %v3538
    %v3707 = vpack.c.b16 %v3543, %v3539
    %v3708 = vpack.c.b16 %v3544, %v3540
    %v3709 = vpack.c.b16 %v3549, %v3545
    %v3710 = vpack.c.b16 %v3550, %v3546
    %v3711 = vpack.c.b16 %v3551, %v3547
    %v3712 = vpack.c.b16 %v3552, %v3548
    %v3713 = vpack.c.b16 %v3557, %v3553
    %v3714 = vpack.c.b16 %v3558, %v3554
    %v3715 = vpack.c.b16 %v3559, %v3555
    %v3716 = vpack.c.b16 %v3560, %v3556
    %v3717 = vpack.c.b16 %v3565, %v3561
    %v3718 = vpack.c.b16 %v3566, %v3562
    %v3719 = vpack.c.b16 %v3567, %v3563
    %v3720 = vpack.c.b16 %v3568, %v3564
    %v3721 = vpack.c.b16 %v3573, %v3569
    %v3722 = vpack.c.b16 %v3574, %v3570
    %v3723 = vpack.c.b16 %v3575, %v3571
    %v3724 = vpack.c.b16 %v3576, %v3572
    %v3725 = vpack.c.b16 %v3581, %v3577
    %v3726 = vpack.c.b16 %v3582, %v3578
    %v3727 = vpack.c.b16 %v3583, %v3579
    %v3728 = vpack.c.b16 %v3584, %v3580
    %v3729 = vpack.c.b16 %v3589, %v3585
    %v3730 = vpack.c.b16 %v3590, %v3586
    %v3731 = vpack.c.b16 %v3591, %v3587
    %v3732 = vpack.c.b16 %v3592, %v3588
    %v3733 = vpack.c.b16 %v3597, %v3593
    %v3734 = vpack.c.b16 %v3598, %v3594
    %v3735 = vpack.c.b16 %v3599, %v3595
    %v3736 = vpack.c.b16 %v3600, %v3596
    %v3737 = vpack.c.b16 %v3605, %v3601
    %v3738 = vpack.c.b16 %v3606, %v3602
    %v3739 = vpack.c.b16 %v3607, %v3603
    %v3740 = vpack.c.b16 %v3608, %v3604
    %v3741 = vpack.c.b16 %v3613, %v3609
    %v3742 = vpack.c.b16 %v3614, %v3610
    %v3743 = vpack.c.b16 %v3615, %v3611
    %v3744 = vpack.c.b16 %v3616, %v3612
    %3873 = vmatpush.bf16.msra.mxu0 %v3645
    %3874 = vmatpush.bf16.msra.mxu0 %v3641
    %3875 = vmatpush.bf16.msra.mxu0 %v3637
    %3876 = vmatpush.bf16.msra.mxu0 %v3633
    %3877 = vmatpush.bf16.msra.mxu0 %v3629
    %3878 = vmatpush.bf16.msra.mxu0 %v3625
    %3879 = vmatpush.bf16.msra.mxu0 %v3621
    %3880 = vmatpush.bf16.msra.mxu0 %v3617
    %3881 = vmatmul.bf16.gmra.mxu0 %v3091
    %v3882 = vpop.f32.mrf.mxu0
    %v3883 = vadd.f32 %v3225, %v3882
    %v3884 = vpop.f32.mrf.mxu0
    %3885 = vdwg.mxu0
    %3886 = vmatpush.bf16.msra.mxu0 %v3677
    %3887 = vmatpush.bf16.msra.mxu0 %v3673
    %3888 = vmatpush.bf16.msra.mxu0 %v3669
    %3889 = vmatpush.bf16.msra.mxu0 %v3665
    %3890 = vmatpush.bf16.msra.mxu0 %v3661
    %3891 = vmatpush.bf16.msra.mxu0 %v3657
    %3892 = vmatpush.bf16.msra.mxu0 %v3653
    %3893 = vmatpush.bf16.msra.mxu0 %v3649
    %3894 = vmatmul.bf16.gmra.mxu0 %v3092
    %v3895 = vpop.f32.mrf.mxu0
    %v3896 = vadd.f32 %v3883, %v3895
    %v3897 = vpop.f32.mrf.mxu0
    %3898 = vdwg.mxu0
    %3899 = vmatpush.bf16.msra.mxu0 %v3709
    %3900 = vmatpush.bf16.msra.mxu0 %v3705
    %3901 = vmatpush.bf16.msra.mxu0 %v3701
    %3902 = vmatpush.bf16.msra.mxu0 %v3697
    %3903 = vmatpush.bf16.msra.mxu0 %v3693
    %3904 = vmatpush.bf16.msra.mxu0 %v3689
    %3905 = vmatpush.bf16.msra.mxu0 %v3685
    %3906 = vmatpush.bf16.msra.mxu0 %v3681
    %3907 = vmatmul.bf16.gmra.mxu0 %v3093
    %v3908 = vpop.f32.mrf.mxu0
    %v3909 = vadd.f32 %v3896, %v3908
    %v3910 = vpop.f32.mrf.mxu0
    %3911 = vdwg.mxu0
    %3912 = vmatpush.bf16.msra.mxu0 %v3741
    %3913 = vmatpush.bf16.msra.mxu0 %v3737
    %3914 = vmatpush.bf16.msra.mxu0 %v3733
    %3915 = vmatpush.bf16.msra.mxu0 %v3729
    %3916 = vmatpush.bf16.msra.mxu0 %v3725
    %3917 = vmatpush.bf16.msra.mxu0 %v3721
    %3918 = vmatpush.bf16.msra.mxu0 %v3717
    %3919 = vmatpush.bf16.msra.mxu0 %v3713
    %3920 = vmatmul.bf16.gmra.mxu0 %v3094
    %v3921 = vpop.f32.mrf.mxu0
    %v3922 = vadd.f32 %v3909, %v3921
    %v3923 = vpop.f32.mrf.mxu0
    %3924 = vdwg.mxu0
    %3925 = vmatpush.bf16.msra.mxu0 %v3646
    %3926 = vmatpush.bf16.msra.mxu0 %v3642
    %3927 = vmatpush.bf16.msra.mxu0 %v3638
    %3928 = vmatpush.bf16.msra.mxu0 %v3634
    %3929 = vmatpush.bf16.msra.mxu0 %v3630
    %3930 = vmatpush.bf16.msra.mxu0 %v3626
    %3931 = vmatpush.bf16.msra.mxu0 %v3622
    %3932 = vmatpush.bf16.msra.mxu0 %v3618
    %3933 = vmatmul.bf16.gmra.mxu0 %v3091
    %v3934 = vpop.f32.mrf.mxu0
    %v3935 = vadd.f32 %v3226, %v3934
    %v3936 = vpop.f32.mrf.mxu0
    %3937 = vdwg.mxu0
    %3938 = vmatpush.bf16.msra.mxu0 %v3678
    %3939 = vmatpush.bf16.msra.mxu0 %v3674
    %3940 = vmatpush.bf16.msra.mxu0 %v3670
    %3941 = vmatpush.bf16.msra.mxu0 %v3666
    %3942 = vmatpush.bf16.msra.mxu0 %v3662
    %3943 = vmatpush.bf16.msra.mxu0 %v3658
    %3944 = vmatpush.bf16.msra.mxu0 %v3654
    %3945 = vmatpush.bf16.msra.mxu0 %v3650
    %3946 = vmatmul.bf16.gmra.mxu0 %v3092
    %v3947 = vpop.f32.mrf.mxu0
    %v3948 = vadd.f32 %v3935, %v3947
    %v3949 = vpop.f32.mrf.mxu0
    %3950 = vdwg.mxu0
    %3951 = vmatpush.bf16.msra.mxu0 %v3710
    %3952 = vmatpush.bf16.msra.mxu0 %v3706
    %3953 = vmatpush.bf16.msra.mxu0 %v3702
    %3954 = vmatpush.bf16.msra.mxu0 %v3698
    %3955 = vmatpush.bf16.msra.mxu0 %v3694
    %3956 = vmatpush.bf16.msra.mxu0 %v3690
    %3957 = vmatpush.bf16.msra.mxu0 %v3686
    %3958 = vmatpush.bf16.msra.mxu0 %v3682
    %3959 = vmatmul.bf16.gmra.mxu0 %v3093
    %v3960 = vpop.f32.mrf.mxu0
    %v3961 = vadd.f32 %v3948, %v3960
    %v3962 = vpop.f32.mrf.mxu0
    %3963 = vdwg.mxu0
    %3964 = vmatpush.bf16.msra.mxu0 %v3742
    %3965 = vmatpush.bf16.msra.mxu0 %v3738
    %3966 = vmatpush.bf16.msra.mxu0 %v3734
    %3967 = vmatpush.bf16.msra.mxu0 %v3730
    %3968 = vmatpush.bf16.msra.mxu0 %v3726
    %3969 = vmatpush.bf16.msra.mxu0 %v3722
    %3970 = vmatpush.bf16.msra.mxu0 %v3718
    %3971 = vmatpush.bf16.msra.mxu0 %v3714
    %3972 = vmatmul.bf16.gmra.mxu0 %v3094
    %v3973 = vpop.f32.mrf.mxu0
    %v3974 = vadd.f32 %v3961, %v3973
    %v3975 = vpop.f32.mrf.mxu0
    %3976 = vdwg.mxu0
    %3977 = vmatpush.bf16.msra.mxu0 %v3647
    %3978 = vmatpush.bf16.msra.mxu0 %v3643
    %3979 = vmatpush.bf16.msra.mxu0 %v3639
    %3980 = vmatpush.bf16.msra.mxu0 %v3635
    %3981 = vmatpush.bf16.msra.mxu0 %v3631
    %3982 = vmatpush.bf16.msra.mxu0 %v3627
    %3983 = vmatpush.bf16.msra.mxu0 %v3623
    %3984 = vmatpush.bf16.msra.mxu0 %v3619
    %3985 = vmatmul.bf16.gmra.mxu0 %v3091
    %v3986 = vpop.f32.mrf.mxu0
    %v3987 = vadd.f32 %v3227, %v3986
    %v3988 = vpop.f32.mrf.mxu0
    %3989 = vdwg.mxu0
    %3990 = vmatpush.bf16.msra.mxu0 %v3679
    %3991 = vmatpush.bf16.msra.mxu0 %v3675
    %3992 = vmatpush.bf16.msra.mxu0 %v3671
    %3993 = vmatpush.bf16.msra.mxu0 %v3667
    %3994 = vmatpush.bf16.msra.mxu0 %v3663
    %3995 = vmatpush.bf16.msra.mxu0 %v3659
    %3996 = vmatpush.bf16.msra.mxu0 %v3655
    %3997 = vmatpush.bf16.msra.mxu0 %v3651
    %3998 = vmatmul.bf16.gmra.mxu0 %v3092
    %v3999 = vpop.f32.mrf.mxu0
    %v4000 = vadd.f32 %v3987, %v3999
    %v4001 = vpop.f32.mrf.mxu0
    %4002 = vdwg.mxu0
    %4003 = vmatpush.bf16.msra.mxu0 %v3711
    %4004 = vmatpush.bf16.msra.mxu0 %v3707
    %4005 = vmatpush.bf16.msra.mxu0 %v3703
    %4006 = vmatpush.bf16.msra.mxu0 %v3699
    %4007 = vmatpush.bf16.msra.mxu0 %v3695
    %4008 = vmatpush.bf16.msra.mxu0 %v3691
    %4009 = vmatpush.bf16.msra.mxu0 %v3687
    %4010 = vmatpush.bf16.msra.mxu0 %v3683
    %4011 = vmatmul.bf16.gmra.mxu0 %v3093
    %v4012 = vpop.f32.mrf.mxu0
    %v4013 = vadd.f32 %v4000, %v4012
    %v4014 = vpop.f32.mrf.mxu0
    %4015 = vdwg.mxu0
    %4016 = vmatpush.bf16.msra.mxu0 %v3743
    %4017 = vmatpush.bf16.msra.mxu0 %v3739
    %4018 = vmatpush.bf16.msra.mxu0 %v3735
    %4019 = vmatpush.bf16.msra.mxu0 %v3731
    %4020 = vmatpush.bf16.msra.mxu0 %v3727
    %4021 = vmatpush.bf16.msra.mxu0 %v3723
    %4022 = vmatpush.bf16.msra.mxu0 %v3719
    %4023 = vmatpush.bf16.msra.mxu0 %v3715
    %4024 = vmatmul.bf16.gmra.mxu0 %v3094
    %v4025 = vpop.f32.mrf.mxu0
    %v4026 = vadd.f32 %v4013, %v4025
    %v4027 = vpop.f32.mrf.mxu0
    %4028 = vdwg.mxu0
    %4029 = vmatpush.bf16.msra.mxu0 %v3648
    %4030 = vmatpush.bf16.msra.mxu0 %v3644
    %4031 = vmatpush.bf16.msra.mxu0 %v3640
    %4032 = vmatpush.bf16.msra.mxu0 %v3636
    %4033 = vmatpush.bf16.msra.mxu0 %v3632
    %4034 = vmatpush.bf16.msra.mxu0 %v3628
    %4035 = vmatpush.bf16.msra.mxu0 %v3624
    %4036 = vmatpush.bf16.msra.mxu0 %v3620
    %4037 = vmatmul.bf16.gmra.mxu0 %v3091
    %v4038 = vpop.f32.mrf.mxu0
    %v4039 = vadd.f32 %v3228, %v4038
    %v4040 = vpop.f32.mrf.mxu0
    %4041 = vdwg.mxu0
    %4042 = vmatpush.bf16.msra.mxu0 %v3680
    %4043 = vmatpush.bf16.msra.mxu0 %v3676
    %4044 = vmatpush.bf16.msra.mxu0 %v3672
    %4045 = vmatpush.bf16.msra.mxu0 %v3668
    %4046 = vmatpush.bf16.msra.mxu0 %v3664
    %4047 = vmatpush.bf16.msra.mxu0 %v3660
    %4048 = vmatpush.bf16.msra.mxu0 %v3656
    %4049 = vmatpush.bf16.msra.mxu0 %v3652
    %4050 = vmatmul.bf16.gmra.mxu0 %v3092
    %v4051 = vpop.f32.mrf.mxu0
    %v4052 = vadd.f32 %v4039, %v4051
    %v4053 = vpop.f32.mrf.mxu0
    %4054 = vdwg.mxu0
    %4055 = vmatpush.bf16.msra.mxu0 %v3712
    %4056 = vmatpush.bf16.msra.mxu0 %v3708
    %4057 = vmatpush.bf16.msra.mxu0 %v3704
    %4058 = vmatpush.bf16.msra.mxu0 %v3700
    %4059 = vmatpush.bf16.msra.mxu0 %v3696
    %4060 = vmatpush.bf16.msra.mxu0 %v3692
    %4061 = vmatpush.bf16.msra.mxu0 %v3688
    %4062 = vmatpush.bf16.msra.mxu0 %v3684
    %4063 = vmatmul.bf16.gmra.mxu0 %v3093
    %v4064 = vpop.f32.mrf.mxu0
    %v4065 = vadd.f32 %v4052, %v4064
    %v4066 = vpop.f32.mrf.mxu0
    %4067 = vdwg.mxu0
    %4068 = vmatpush.bf16.msra.mxu0 %v3744
    %4069 = vmatpush.bf16.msra.mxu0 %v3740
    %4070 = vmatpush.bf16.msra.mxu0 %v3736
    %4071 = vmatpush.bf16.msra.mxu0 %v3732
    %4072 = vmatpush.bf16.msra.mxu0 %v3728
    %4073 = vmatpush.bf16.msra.mxu0 %v3724
    %4074 = vmatpush.bf16.msra.mxu0 %v3720
    %4075 = vmatpush.bf16.msra.mxu0 %v3716
    %4076 = vmatmul.bf16.gmra.mxu0 %v3094
    %v4077 = vpop.f32.mrf.mxu0
    %v4078 = vadd.f32 %v4065, %v4077
    %v4079 = vpop.f32.mrf.mxu0
    %4080 = vdwg.mxu0
    %vm4081 = vcmp.gt.f32.partialorder %v3922, 0.0
    %vm4082 = vcmp.gt.f32.partialorder %v3974, 0.0
    %vm4083 = vcmp.gt.f32.partialorder %v4026, 0.0
    %vm4084 = vcmp.gt.f32.partialorder %v4078, 0.0
    %v4085 = vmul.f32 %v3922, 0.01
    %v4086 = vmul.f32 %v3974, 0.01
    %v4087 = vmul.f32 %v4026, 0.01
    %v4088 = vmul.f32 %v4078, 0.01
    %v4089 = vsel %vm4081, %v3922, %v4085
    %v4090 = vsel %vm4082, %v3974, %v4086
    %v4091 = vsel %vm4083, %v4026, %v4087
    %v4092 = vsel %vm4084, %v4078, %v4088
    %v4093 = vpack.c.bf16 %v4089, %v4089
    %v4094 = vpack.c.bf16 %v4090, %v4090
    %v4095 = vpack.c.bf16 %v4091, %v4091
    %v4096 = vpack.c.bf16 %v4092, %v4092
    %v4097 = vld [vmem:[#allocation8] sm:$0xff]
    %v4098 = vld [vmem:[#allocation8 + $0x8] sm:$0xff]
    %v4099 = vld [vmem:[#allocation8 + $0x10] sm:$0xff]
    %v4100 = vld [vmem:[#allocation8 + $0x18] sm:$0xff]
    %v4101 = vld [vmem:[#allocation8 + $0x20] sm:$0xff]
    %v4102 = vld [vmem:[#allocation8 + $0x28] sm:$0xff]
    %v4103 = vld [vmem:[#allocation8 + $0x30] sm:$0xff]
    %v4104 = vld [vmem:[#allocation8 + $0x38] sm:$0xff]
    %v4105 = vld [vmem:[#allocation8 + $0x40] sm:$0xff]
    %v4106 = vld [vmem:[#allocation8 + $0x48] sm:$0xff]
    %v4107 = vld [vmem:[#allocation8 + $0x50] sm:$0xff]
    %v4108 = vld [vmem:[#allocation8 + $0x58] sm:$0xff]
    %v4109 = vld [vmem:[#allocation8 + $0x60] sm:$0xff]
    %v4110 = vld [vmem:[#allocation8 + $0x68] sm:$0xff]
    %v4111 = vld [vmem:[#allocation8 + $0x70] sm:$0xff]
    %v4112 = vld [vmem:[#allocation8 + $0x78] sm:$0xff]
    %v4113 = vld [vmem:[#allocation8 + $0x80] sm:$0xff]
    %v4114 = vld [vmem:[#allocation8 + $0x88] sm:$0xff]
    %v4115 = vld [vmem:[#allocation8 + $0x90] sm:$0xff]
    %v4116 = vld [vmem:[#allocation8 + $0x98] sm:$0xff]
    %v4117 = vld [vmem:[#allocation8 + $0xa0] sm:$0xff]
    %v4118 = vld [vmem:[#allocation8 + $0xa8] sm:$0xff]
    %v4119 = vld [vmem:[#allocation8 + $0xb0] sm:$0xff]
    %v4120 = vld [vmem:[#allocation8 + $0xb8] sm:$0xff]
    %v4121 = vld [vmem:[#allocation8 + $0xc0] sm:$0xff]
    %v4122 = vld [vmem:[#allocation8 + $0xc8] sm:$0xff]
    %v4123 = vld [vmem:[#allocation8 + $0xd0] sm:$0xff]
    %v4124 = vld [vmem:[#allocation8 + $0xd8] sm:$0xff]
    %v4125 = vld [vmem:[#allocation8 + $0xe0] sm:$0xff]
    %v4126 = vld [vmem:[#allocation8 + $0xe8] sm:$0xff]
    %v4127 = vld [vmem:[#allocation8 + $0xf0] sm:$0xff]
    %v4128 = vld [vmem:[#allocation8 + $0xf8] sm:$0xff]
    %v4129 = vld [vmem:[#allocation8 + $0x100] sm:$0xff]
    %v4130 = vld [vmem:[#allocation8 + $0x108] sm:$0xff]
    %v4131 = vld [vmem:[#allocation8 + $0x110] sm:$0xff]
    %v4132 = vld [vmem:[#allocation8 + $0x118] sm:$0xff]
    %v4133 = vld [vmem:[#allocation8 + $0x120] sm:$0xff]
    %v4134 = vld [vmem:[#allocation8 + $0x128] sm:$0xff]
    %v4135 = vld [vmem:[#allocation8 + $0x130] sm:$0xff]
    %v4136 = vld [vmem:[#allocation8 + $0x138] sm:$0xff]
    %v4137 = vld [vmem:[#allocation8 + $0x140] sm:$0xff]
    %v4138 = vld [vmem:[#allocation8 + $0x148] sm:$0xff]
    %v4139 = vld [vmem:[#allocation8 + $0x150] sm:$0xff]
    %v4140 = vld [vmem:[#allocation8 + $0x158] sm:$0xff]
    %v4141 = vld [vmem:[#allocation8 + $0x160] sm:$0xff]
    %v4142 = vld [vmem:[#allocation8 + $0x168] sm:$0xff]
    %v4143 = vld [vmem:[#allocation8 + $0x170] sm:$0xff]
    %v4144 = vld [vmem:[#allocation8 + $0x178] sm:$0xff]
    %v4145 = vld [vmem:[#allocation8 + $0x180] sm:$0xff]
    %v4146 = vld [vmem:[#allocation8 + $0x188] sm:$0xff]
    %v4147 = vld [vmem:[#allocation8 + $0x190] sm:$0xff]
    %v4148 = vld [vmem:[#allocation8 + $0x198] sm:$0xff]
    %v4149 = vld [vmem:[#allocation8 + $0x1a0] sm:$0xff]
    %v4150 = vld [vmem:[#allocation8 + $0x1a8] sm:$0xff]
    %v4151 = vld [vmem:[#allocation8 + $0x1b0] sm:$0xff]
    %v4152 = vld [vmem:[#allocation8 + $0x1b8] sm:$0xff]
    %v4153 = vld [vmem:[#allocation8 + $0x1c0] sm:$0xff]
    %v4154 = vld [vmem:[#allocation8 + $0x1c8] sm:$0xff]
    %v4155 = vld [vmem:[#allocation8 + $0x1d0] sm:$0xff]
    %v4156 = vld [vmem:[#allocation8 + $0x1d8] sm:$0xff]
    %v4157 = vld [vmem:[#allocation8 + $0x1e0] sm:$0xff]
    %v4158 = vld [vmem:[#allocation8 + $0x1e8] sm:$0xff]
    %v4159 = vld [vmem:[#allocation8 + $0x1f0] sm:$0xff]
    %v4160 = vld [vmem:[#allocation8 + $0x1f8] sm:$0xff]
    %v4161 = vld [vmem:[#allocation8 + $0x200] sm:$0xff]
    %v4162 = vld [vmem:[#allocation8 + $0x208] sm:$0xff]
    %v4163 = vld [vmem:[#allocation8 + $0x210] sm:$0xff]
    %v4164 = vld [vmem:[#allocation8 + $0x218] sm:$0xff]
    %v4165 = vld [vmem:[#allocation8 + $0x220] sm:$0xff]
    %v4166 = vld [vmem:[#allocation8 + $0x228] sm:$0xff]
    %v4167 = vld [vmem:[#allocation8 + $0x230] sm:$0xff]
    %v4168 = vld [vmem:[#allocation8 + $0x238] sm:$0xff]
    %v4169 = vld [vmem:[#allocation8 + $0x240] sm:$0xff]
    %v4170 = vld [vmem:[#allocation8 + $0x248] sm:$0xff]
    %v4171 = vld [vmem:[#allocation8 + $0x250] sm:$0xff]
    %v4172 = vld [vmem:[#allocation8 + $0x258] sm:$0xff]
    %v4173 = vld [vmem:[#allocation8 + $0x260] sm:$0xff]
    %v4174 = vld [vmem:[#allocation8 + $0x268] sm:$0xff]
    %v4175 = vld [vmem:[#allocation8 + $0x270] sm:$0xff]
    %v4176 = vld [vmem:[#allocation8 + $0x278] sm:$0xff]
    %v4177 = vld [vmem:[#allocation8 + $0x280] sm:$0xff]
    %v4178 = vld [vmem:[#allocation8 + $0x288] sm:$0xff]
    %v4179 = vld [vmem:[#allocation8 + $0x290] sm:$0xff]
    %v4180 = vld [vmem:[#allocation8 + $0x298] sm:$0xff]
    %v4181 = vld [vmem:[#allocation8 + $0x2a0] sm:$0xff]
    %v4182 = vld [vmem:[#allocation8 + $0x2a8] sm:$0xff]
    %v4183 = vld [vmem:[#allocation8 + $0x2b0] sm:$0xff]
    %v4184 = vld [vmem:[#allocation8 + $0x2b8] sm:$0xff]
    %v4185 = vld [vmem:[#allocation8 + $0x2c0] sm:$0xff]
    %v4186 = vld [vmem:[#allocation8 + $0x2c8] sm:$0xff]
    %v4187 = vld [vmem:[#allocation8 + $0x2d0] sm:$0xff]
    %v4188 = vld [vmem:[#allocation8 + $0x2d8] sm:$0xff]
    %v4189 = vld [vmem:[#allocation8 + $0x2e0] sm:$0xff]
    %v4190 = vld [vmem:[#allocation8 + $0x2e8] sm:$0xff]
    %v4191 = vld [vmem:[#allocation8 + $0x2f0] sm:$0xff]
    %v4192 = vld [vmem:[#allocation8 + $0x2f8] sm:$0xff]
    %v4193 = vld [vmem:[#allocation8 + $0x300] sm:$0xff]
    %v4194 = vld [vmem:[#allocation8 + $0x308] sm:$0xff]
    %v4195 = vld [vmem:[#allocation8 + $0x310] sm:$0xff]
    %v4196 = vld [vmem:[#allocation8 + $0x318] sm:$0xff]
    %v4197 = vld [vmem:[#allocation8 + $0x320] sm:$0xff]
    %v4198 = vld [vmem:[#allocation8 + $0x328] sm:$0xff]
    %v4199 = vld [vmem:[#allocation8 + $0x330] sm:$0xff]
    %v4200 = vld [vmem:[#allocation8 + $0x338] sm:$0xff]
    %v4201 = vld [vmem:[#allocation8 + $0x340] sm:$0xff]
    %v4202 = vld [vmem:[#allocation8 + $0x348] sm:$0xff]
    %v4203 = vld [vmem:[#allocation8 + $0x350] sm:$0xff]
    %v4204 = vld [vmem:[#allocation8 + $0x358] sm:$0xff]
    %v4205 = vld [vmem:[#allocation8 + $0x360] sm:$0xff]
    %v4206 = vld [vmem:[#allocation8 + $0x368] sm:$0xff]
    %v4207 = vld [vmem:[#allocation8 + $0x370] sm:$0xff]
    %v4208 = vld [vmem:[#allocation8 + $0x378] sm:$0xff]
    %v4209 = vld [vmem:[#allocation8 + $0x380] sm:$0xff]
    %v4210 = vld [vmem:[#allocation8 + $0x388] sm:$0xff]
    %v4211 = vld [vmem:[#allocation8 + $0x390] sm:$0xff]
    %v4212 = vld [vmem:[#allocation8 + $0x398] sm:$0xff]
    %v4213 = vld [vmem:[#allocation8 + $0x3a0] sm:$0xff]
    %v4214 = vld [vmem:[#allocation8 + $0x3a8] sm:$0xff]
    %v4215 = vld [vmem:[#allocation8 + $0x3b0] sm:$0xff]
    %v4216 = vld [vmem:[#allocation8 + $0x3b8] sm:$0xff]
    %v4217 = vld [vmem:[#allocation8 + $0x3c0] sm:$0xff]
    %v4218 = vld [vmem:[#allocation8 + $0x3c8] sm:$0xff]
    %v4219 = vld [vmem:[#allocation8 + $0x3d0] sm:$0xff]
    %v4220 = vld [vmem:[#allocation8 + $0x3d8] sm:$0xff]
    %v4221 = vld [vmem:[#allocation8 + $0x3e0] sm:$0xff]
    %v4222 = vld [vmem:[#allocation8 + $0x3e8] sm:$0xff]
    %v4223 = vld [vmem:[#allocation8 + $0x3f0] sm:$0xff]
    %v4224 = vld [vmem:[#allocation8 + $0x3f8] sm:$0xff]
    %v4225 = vld [vmem:[%s8] sm:$0xf]
    %v4227 = vperm.slane %v4225, 0
    %v4228 = vperm.slane %v4225, 1
    %v4229 = vperm.slane %v4225, 2
    %v4230 = vperm.slane %v4225, 3
    %v4363 = vunpack.c.l.b16 %v4097
    %v4364 = vunpack.c.h.b16 %v4097
    %v4365 = vunpack.c.l.b16 %v4098
    %v4366 = vunpack.c.h.b16 %v4098
    %v4367 = vunpack.c.l.b16 %v4099
    %v4368 = vunpack.c.h.b16 %v4099
    %v4369 = vunpack.c.l.b16 %v4100
    %v4370 = vunpack.c.h.b16 %v4100
    %v4371 = vunpack.c.l.b16 %v4101
    %v4372 = vunpack.c.h.b16 %v4101
    %v4373 = vunpack.c.l.b16 %v4102
    %v4374 = vunpack.c.h.b16 %v4102
    %v4375 = vunpack.c.l.b16 %v4103
    %v4376 = vunpack.c.h.b16 %v4103
    %v4377 = vunpack.c.l.b16 %v4104
    %v4378 = vunpack.c.h.b16 %v4104
    %v4379 = vunpack.c.l.b16 %v4105
    %v4380 = vunpack.c.h.b16 %v4105
    %v4381 = vunpack.c.l.b16 %v4106
    %v4382 = vunpack.c.h.b16 %v4106
    %v4383 = vunpack.c.l.b16 %v4107
    %v4384 = vunpack.c.h.b16 %v4107
    %v4385 = vunpack.c.l.b16 %v4108
    %v4386 = vunpack.c.h.b16 %v4108
    %v4387 = vunpack.c.l.b16 %v4109
    %v4388 = vunpack.c.h.b16 %v4109
    %v4389 = vunpack.c.l.b16 %v4110
    %v4390 = vunpack.c.h.b16 %v4110
    %v4391 = vunpack.c.l.b16 %v4111
    %v4392 = vunpack.c.h.b16 %v4111
    %v4393 = vunpack.c.l.b16 %v4112
    %v4394 = vunpack.c.h.b16 %v4112
    %v4395 = vunpack.c.l.b16 %v4113
    %v4396 = vunpack.c.h.b16 %v4113
    %v4397 = vunpack.c.l.b16 %v4114
    %v4398 = vunpack.c.h.b16 %v4114
    %v4399 = vunpack.c.l.b16 %v4115
    %v4400 = vunpack.c.h.b16 %v4115
    %v4401 = vunpack.c.l.b16 %v4116
    %v4402 = vunpack.c.h.b16 %v4116
    %v4403 = vunpack.c.l.b16 %v4117
    %v4404 = vunpack.c.h.b16 %v4117
    %v4405 = vunpack.c.l.b16 %v4118
    %v4406 = vunpack.c.h.b16 %v4118
    %v4407 = vunpack.c.l.b16 %v4119
    %v4408 = vunpack.c.h.b16 %v4119
    %v4409 = vunpack.c.l.b16 %v4120
    %v4410 = vunpack.c.h.b16 %v4120
    %v4411 = vunpack.c.l.b16 %v4121
    %v4412 = vunpack.c.h.b16 %v4121
    %v4413 = vunpack.c.l.b16 %v4122
    %v4414 = vunpack.c.h.b16 %v4122
    %v4415 = vunpack.c.l.b16 %v4123
    %v4416 = vunpack.c.h.b16 %v4123
    %v4417 = vunpack.c.l.b16 %v4124
    %v4418 = vunpack.c.h.b16 %v4124
    %v4419 = vunpack.c.l.b16 %v4125
    %v4420 = vunpack.c.h.b16 %v4125
    %v4421 = vunpack.c.l.b16 %v4126
    %v4422 = vunpack.c.h.b16 %v4126
    %v4423 = vunpack.c.l.b16 %v4127
    %v4424 = vunpack.c.h.b16 %v4127
    %v4425 = vunpack.c.l.b16 %v4128
    %v4426 = vunpack.c.h.b16 %v4128
    %v4427 = vunpack.c.l.b16 %v4129
    %v4428 = vunpack.c.h.b16 %v4129
    %v4429 = vunpack.c.l.b16 %v4130
    %v4430 = vunpack.c.h.b16 %v4130
    %v4431 = vunpack.c.l.b16 %v4131
    %v4432 = vunpack.c.h.b16 %v4131
    %v4433 = vunpack.c.l.b16 %v4132
    %v4434 = vunpack.c.h.b16 %v4132
    %v4435 = vunpack.c.l.b16 %v4133
    %v4436 = vunpack.c.h.b16 %v4133
    %v4437 = vunpack.c.l.b16 %v4134
    %v4438 = vunpack.c.h.b16 %v4134
    %v4439 = vunpack.c.l.b16 %v4135
    %v4440 = vunpack.c.h.b16 %v4135
    %v4441 = vunpack.c.l.b16 %v4136
    %v4442 = vunpack.c.h.b16 %v4136
    %v4443 = vunpack.c.l.b16 %v4137
    %v4444 = vunpack.c.h.b16 %v4137
    %v4445 = vunpack.c.l.b16 %v4138
    %v4446 = vunpack.c.h.b16 %v4138
    %v4447 = vunpack.c.l.b16 %v4139
    %v4448 = vunpack.c.h.b16 %v4139
    %v4449 = vunpack.c.l.b16 %v4140
    %v4450 = vunpack.c.h.b16 %v4140
    %v4451 = vunpack.c.l.b16 %v4141
    %v4452 = vunpack.c.h.b16 %v4141
    %v4453 = vunpack.c.l.b16 %v4142
    %v4454 = vunpack.c.h.b16 %v4142
    %v4455 = vunpack.c.l.b16 %v4143
    %v4456 = vunpack.c.h.b16 %v4143
    %v4457 = vunpack.c.l.b16 %v4144
    %v4458 = vunpack.c.h.b16 %v4144
    %v4459 = vunpack.c.l.b16 %v4145
    %v4460 = vunpack.c.h.b16 %v4145
    %v4461 = vunpack.c.l.b16 %v4146
    %v4462 = vunpack.c.h.b16 %v4146
    %v4463 = vunpack.c.l.b16 %v4147
    %v4464 = vunpack.c.h.b16 %v4147
    %v4465 = vunpack.c.l.b16 %v4148
    %v4466 = vunpack.c.h.b16 %v4148
    %v4467 = vunpack.c.l.b16 %v4149
    %v4468 = vunpack.c.h.b16 %v4149
    %v4469 = vunpack.c.l.b16 %v4150
    %v4470 = vunpack.c.h.b16 %v4150
    %v4471 = vunpack.c.l.b16 %v4151
    %v4472 = vunpack.c.h.b16 %v4151
    %v4473 = vunpack.c.l.b16 %v4152
    %v4474 = vunpack.c.h.b16 %v4152
    %v4475 = vunpack.c.l.b16 %v4153
    %v4476 = vunpack.c.h.b16 %v4153
    %v4477 = vunpack.c.l.b16 %v4154
    %v4478 = vunpack.c.h.b16 %v4154
    %v4479 = vunpack.c.l.b16 %v4155
    %v4480 = vunpack.c.h.b16 %v4155
    %v4481 = vunpack.c.l.b16 %v4156
    %v4482 = vunpack.c.h.b16 %v4156
    %v4483 = vunpack.c.l.b16 %v4157
    %v4484 = vunpack.c.h.b16 %v4157
    %v4485 = vunpack.c.l.b16 %v4158
    %v4486 = vunpack.c.h.b16 %v4158
    %v4487 = vunpack.c.l.b16 %v4159
    %v4488 = vunpack.c.h.b16 %v4159
    %v4489 = vunpack.c.l.b16 %v4160
    %v4490 = vunpack.c.h.b16 %v4160
    %v4491 = vunpack.c.l.b16 %v4161
    %v4492 = vunpack.c.h.b16 %v4161
    %v4493 = vunpack.c.l.b16 %v4162
    %v4494 = vunpack.c.h.b16 %v4162
    %v4495 = vunpack.c.l.b16 %v4163
    %v4496 = vunpack.c.h.b16 %v4163
    %v4497 = vunpack.c.l.b16 %v4164
    %v4498 = vunpack.c.h.b16 %v4164
    %v4499 = vunpack.c.l.b16 %v4165
    %v4500 = vunpack.c.h.b16 %v4165
    %v4501 = vunpack.c.l.b16 %v4166
    %v4502 = vunpack.c.h.b16 %v4166
    %v4503 = vunpack.c.l.b16 %v4167
    %v4504 = vunpack.c.h.b16 %v4167
    %v4505 = vunpack.c.l.b16 %v4168
    %v4506 = vunpack.c.h.b16 %v4168
    %v4507 = vunpack.c.l.b16 %v4169
    %v4508 = vunpack.c.h.b16 %v4169
    %v4509 = vunpack.c.l.b16 %v4170
    %v4510 = vunpack.c.h.b16 %v4170
    %v4511 = vunpack.c.l.b16 %v4171
    %v4512 = vunpack.c.h.b16 %v4171
    %v4513 = vunpack.c.l.b16 %v4172
    %v4514 = vunpack.c.h.b16 %v4172
    %v4515 = vunpack.c.l.b16 %v4173
    %v4516 = vunpack.c.h.b16 %v4173
    %v4517 = vunpack.c.l.b16 %v4174
    %v4518 = vunpack.c.h.b16 %v4174
    %v4519 = vunpack.c.l.b16 %v4175
    %v4520 = vunpack.c.h.b16 %v4175
    %v4521 = vunpack.c.l.b16 %v4176
    %v4522 = vunpack.c.h.b16 %v4176
    %v4523 = vunpack.c.l.b16 %v4177
    %v4524 = vunpack.c.h.b16 %v4177
    %v4525 = vunpack.c.l.b16 %v4178
    %v4526 = vunpack.c.h.b16 %v4178
    %v4527 = vunpack.c.l.b16 %v4179
    %v4528 = vunpack.c.h.b16 %v4179
    %v4529 = vunpack.c.l.b16 %v4180
    %v4530 = vunpack.c.h.b16 %v4180
    %v4531 = vunpack.c.l.b16 %v4181
    %v4532 = vunpack.c.h.b16 %v4181
    %v4533 = vunpack.c.l.b16 %v4182
    %v4534 = vunpack.c.h.b16 %v4182
    %v4535 = vunpack.c.l.b16 %v4183
    %v4536 = vunpack.c.h.b16 %v4183
    %v4537 = vunpack.c.l.b16 %v4184
    %v4538 = vunpack.c.h.b16 %v4184
    %v4539 = vunpack.c.l.b16 %v4185
    %v4540 = vunpack.c.h.b16 %v4185
    %v4541 = vunpack.c.l.b16 %v4186
    %v4542 = vunpack.c.h.b16 %v4186
    %v4543 = vunpack.c.l.b16 %v4187
    %v4544 = vunpack.c.h.b16 %v4187
    %v4545 = vunpack.c.l.b16 %v4188
    %v4546 = vunpack.c.h.b16 %v4188
    %v4547 = vunpack.c.l.b16 %v4189
    %v4548 = vunpack.c.h.b16 %v4189
    %v4549 = vunpack.c.l.b16 %v4190
    %v4550 = vunpack.c.h.b16 %v4190
    %v4551 = vunpack.c.l.b16 %v4191
    %v4552 = vunpack.c.h.b16 %v4191
    %v4553 = vunpack.c.l.b16 %v4192
    %v4554 = vunpack.c.h.b16 %v4192
    %v4555 = vunpack.c.l.b16 %v4193
    %v4556 = vunpack.c.h.b16 %v4193
    %v4557 = vunpack.c.l.b16 %v4194
    %v4558 = vunpack.c.h.b16 %v4194
    %v4559 = vunpack.c.l.b16 %v4195
    %v4560 = vunpack.c.h.b16 %v4195
    %v4561 = vunpack.c.l.b16 %v4196
    %v4562 = vunpack.c.h.b16 %v4196
    %v4563 = vunpack.c.l.b16 %v4197
    %v4564 = vunpack.c.h.b16 %v4197
    %v4565 = vunpack.c.l.b16 %v4198
    %v4566 = vunpack.c.h.b16 %v4198
    %v4567 = vunpack.c.l.b16 %v4199
    %v4568 = vunpack.c.h.b16 %v4199
    %v4569 = vunpack.c.l.b16 %v4200
    %v4570 = vunpack.c.h.b16 %v4200
    %v4571 = vunpack.c.l.b16 %v4201
    %v4572 = vunpack.c.h.b16 %v4201
    %v4573 = vunpack.c.l.b16 %v4202
    %v4574 = vunpack.c.h.b16 %v4202
    %v4575 = vunpack.c.l.b16 %v4203
    %v4576 = vunpack.c.h.b16 %v4203
    %v4577 = vunpack.c.l.b16 %v4204
    %v4578 = vunpack.c.h.b16 %v4204
    %v4579 = vunpack.c.l.b16 %v4205
    %v4580 = vunpack.c.h.b16 %v4205
    %v4581 = vunpack.c.l.b16 %v4206
    %v4582 = vunpack.c.h.b16 %v4206
    %v4583 = vunpack.c.l.b16 %v4207
    %v4584 = vunpack.c.h.b16 %v4207
    %v4585 = vunpack.c.l.b16 %v4208
    %v4586 = vunpack.c.h.b16 %v4208
    %v4587 = vunpack.c.l.b16 %v4209
    %v4588 = vunpack.c.h.b16 %v4209
    %v4589 = vunpack.c.l.b16 %v4210
    %v4590 = vunpack.c.h.b16 %v4210
    %v4591 = vunpack.c.l.b16 %v4211
    %v4592 = vunpack.c.h.b16 %v4211
    %v4593 = vunpack.c.l.b16 %v4212
    %v4594 = vunpack.c.h.b16 %v4212
    %v4595 = vunpack.c.l.b16 %v4213
    %v4596 = vunpack.c.h.b16 %v4213
    %v4597 = vunpack.c.l.b16 %v4214
    %v4598 = vunpack.c.h.b16 %v4214
    %v4599 = vunpack.c.l.b16 %v4215
    %v4600 = vunpack.c.h.b16 %v4215
    %v4601 = vunpack.c.l.b16 %v4216
    %v4602 = vunpack.c.h.b16 %v4216
    %v4603 = vunpack.c.l.b16 %v4217
    %v4604 = vunpack.c.h.b16 %v4217
    %v4605 = vunpack.c.l.b16 %v4218
    %v4606 = vunpack.c.h.b16 %v4218
    %v4607 = vunpack.c.l.b16 %v4219
    %v4608 = vunpack.c.h.b16 %v4219
    %v4609 = vunpack.c.l.b16 %v4220
    %v4610 = vunpack.c.h.b16 %v4220
    %v4611 = vunpack.c.l.b16 %v4221
    %v4612 = vunpack.c.h.b16 %v4221
    %v4613 = vunpack.c.l.b16 %v4222
    %v4614 = vunpack.c.h.b16 %v4222
    %v4615 = vunpack.c.l.b16 %v4223
    %v4616 = vunpack.c.h.b16 %v4223
    %v4617 = vunpack.c.l.b16 %v4224
    %v4618 = vunpack.c.h.b16 %v4224
    %v4619 = vpack.c.b16 %v4367, %v4363
    %v4620 = vpack.c.b16 %v4368, %v4364
    %v4621 = vpack.c.b16 %v4369, %v4365
    %v4622 = vpack.c.b16 %v4370, %v4366
    %v4623 = vpack.c.b16 %v4375, %v4371
    %v4624 = vpack.c.b16 %v4376, %v4372
    %v4625 = vpack.c.b16 %v4377, %v4373
    %v4626 = vpack.c.b16 %v4378, %v4374
    %v4627 = vpack.c.b16 %v4383, %v4379
    %v4628 = vpack.c.b16 %v4384, %v4380
    %v4629 = vpack.c.b16 %v4385, %v4381
    %v4630 = vpack.c.b16 %v4386, %v4382
    %v4631 = vpack.c.b16 %v4391, %v4387
    %v4632 = vpack.c.b16 %v4392, %v4388
    %v4633 = vpack.c.b16 %v4393, %v4389
    %v4634 = vpack.c.b16 %v4394, %v4390
    %v4635 = vpack.c.b16 %v4399, %v4395
    %v4636 = vpack.c.b16 %v4400, %v4396
    %v4637 = vpack.c.b16 %v4401, %v4397
    %v4638 = vpack.c.b16 %v4402, %v4398
    %v4639 = vpack.c.b16 %v4407, %v4403
    %v4640 = vpack.c.b16 %v4408, %v4404
    %v4641 = vpack.c.b16 %v4409, %v4405
    %v4642 = vpack.c.b16 %v4410, %v4406
    %v4643 = vpack.c.b16 %v4415, %v4411
    %v4644 = vpack.c.b16 %v4416, %v4412
    %v4645 = vpack.c.b16 %v4417, %v4413
    %v4646 = vpack.c.b16 %v4418, %v4414
    %v4647 = vpack.c.b16 %v4423, %v4419
    %v4648 = vpack.c.b16 %v4424, %v4420
    %v4649 = vpack.c.b16 %v4425, %v4421
    %v4650 = vpack.c.b16 %v4426, %v4422
    %v4651 = vpack.c.b16 %v4431, %v4427
    %v4652 = vpack.c.b16 %v4432, %v4428
    %v4653 = vpack.c.b16 %v4433, %v4429
    %v4654 = vpack.c.b16 %v4434, %v4430
    %v4655 = vpack.c.b16 %v4439, %v4435
    %v4656 = vpack.c.b16 %v4440, %v4436
    %v4657 = vpack.c.b16 %v4441, %v4437
    %v4658 = vpack.c.b16 %v4442, %v4438
    %v4659 = vpack.c.b16 %v4447, %v4443
    %v4660 = vpack.c.b16 %v4448, %v4444
    %v4661 = vpack.c.b16 %v4449, %v4445
    %v4662 = vpack.c.b16 %v4450, %v4446
    %v4663 = vpack.c.b16 %v4455, %v4451
    %v4664 = vpack.c.b16 %v4456, %v4452
    %v4665 = vpack.c.b16 %v4457, %v4453
    %v4666 = vpack.c.b16 %v4458, %v4454
    %v4667 = vpack.c.b16 %v4463, %v4459
    %v4668 = vpack.c.b16 %v4464, %v4460
    %v4669 = vpack.c.b16 %v4465, %v4461
    %v4670 = vpack.c.b16 %v4466, %v4462
    %v4671 = vpack.c.b16 %v4471, %v4467
    %v4672 = vpack.c.b16 %v4472, %v4468
    %v4673 = vpack.c.b16 %v4473, %v4469
    %v4674 = vpack.c.b16 %v4474, %v4470
    %v4675 = vpack.c.b16 %v4479, %v4475
    %v4676 = vpack.c.b16 %v4480, %v4476
    %v4677 = vpack.c.b16 %v4481, %v4477
    %v4678 = vpack.c.b16 %v4482, %v4478
    %v4679 = vpack.c.b16 %v4487, %v4483
    %v4680 = vpack.c.b16 %v4488, %v4484
    %v4681 = vpack.c.b16 %v4489, %v4485
    %v4682 = vpack.c.b16 %v4490, %v4486
    %v4683 = vpack.c.b16 %v4495, %v4491
    %v4684 = vpack.c.b16 %v4496, %v4492
    %v4685 = vpack.c.b16 %v4497, %v4493
    %v4686 = vpack.c.b16 %v4498, %v4494
    %v4687 = vpack.c.b16 %v4503, %v4499
    %v4688 = vpack.c.b16 %v4504, %v4500
    %v4689 = vpack.c.b16 %v4505, %v4501
    %v4690 = vpack.c.b16 %v4506, %v4502
    %v4691 = vpack.c.b16 %v4511, %v4507
    %v4692 = vpack.c.b16 %v4512, %v4508
    %v4693 = vpack.c.b16 %v4513, %v4509
    %v4694 = vpack.c.b16 %v4514, %v4510
    %v4695 = vpack.c.b16 %v4519, %v4515
    %v4696 = vpack.c.b16 %v4520, %v4516
    %v4697 = vpack.c.b16 %v4521, %v4517
    %v4698 = vpack.c.b16 %v4522, %v4518
    %v4699 = vpack.c.b16 %v4527, %v4523
    %v4700 = vpack.c.b16 %v4528, %v4524
    %v4701 = vpack.c.b16 %v4529, %v4525
    %v4702 = vpack.c.b16 %v4530, %v4526
    %v4703 = vpack.c.b16 %v4535, %v4531
    %v4704 = vpack.c.b16 %v4536, %v4532
    %v4705 = vpack.c.b16 %v4537, %v4533
    %v4706 = vpack.c.b16 %v4538, %v4534
    %v4707 = vpack.c.b16 %v4543, %v4539
    %v4708 = vpack.c.b16 %v4544, %v4540
    %v4709 = vpack.c.b16 %v4545, %v4541
    %v4710 = vpack.c.b16 %v4546, %v4542
    %v4711 = vpack.c.b16 %v4551, %v4547
    %v4712 = vpack.c.b16 %v4552, %v4548
    %v4713 = vpack.c.b16 %v4553, %v4549
    %v4714 = vpack.c.b16 %v4554, %v4550
    %v4715 = vpack.c.b16 %v4559, %v4555
    %v4716 = vpack.c.b16 %v4560, %v4556
    %v4717 = vpack.c.b16 %v4561, %v4557
    %v4718 = vpack.c.b16 %v4562, %v4558
    %v4719 = vpack.c.b16 %v4567, %v4563
    %v4720 = vpack.c.b16 %v4568, %v4564
    %v4721 = vpack.c.b16 %v4569, %v4565
    %v4722 = vpack.c.b16 %v4570, %v4566
    %v4723 = vpack.c.b16 %v4575, %v4571
    %v4724 = vpack.c.b16 %v4576, %v4572
    %v4725 = vpack.c.b16 %v4577, %v4573
    %v4726 = vpack.c.b16 %v4578, %v4574
    %v4727 = vpack.c.b16 %v4583, %v4579
    %v4728 = vpack.c.b16 %v4584, %v4580
    %v4729 = vpack.c.b16 %v4585, %v4581
    %v4730 = vpack.c.b16 %v4586, %v4582
    %v4731 = vpack.c.b16 %v4591, %v4587
    %v4732 = vpack.c.b16 %v4592, %v4588
    %v4733 = vpack.c.b16 %v4593, %v4589
    %v4734 = vpack.c.b16 %v4594, %v4590
    %v4735 = vpack.c.b16 %v4599, %v4595
    %v4736 = vpack.c.b16 %v4600, %v4596
    %v4737 = vpack.c.b16 %v4601, %v4597
    %v4738 = vpack.c.b16 %v4602, %v4598
    %v4739 = vpack.c.b16 %v4607, %v4603
    %v4740 = vpack.c.b16 %v4608, %v4604
    %v4741 = vpack.c.b16 %v4609, %v4605
    %v4742 = vpack.c.b16 %v4610, %v4606
    %v4743 = vpack.c.b16 %v4615, %v4611
    %v4744 = vpack.c.b16 %v4616, %v4612
    %v4745 = vpack.c.b16 %v4617, %v4613
    %v4746 = vpack.c.b16 %v4618, %v4614
    %4875 = vmatpush.bf16.msra.mxu0 %v4647
    %4876 = vmatpush.bf16.msra.mxu0 %v4643
    %4877 = vmatpush.bf16.msra.mxu0 %v4639
    %4878 = vmatpush.bf16.msra.mxu0 %v4635
    %4879 = vmatpush.bf16.msra.mxu0 %v4631
    %4880 = vmatpush.bf16.msra.mxu0 %v4627
    %4881 = vmatpush.bf16.msra.mxu0 %v4623
    %4882 = vmatpush.bf16.msra.mxu0 %v4619
    %4883 = vmatmul.bf16.gmra.mxu0 %v4093
    %v4884 = vpop.f32.mrf.mxu0
    %v4885 = vadd.f32 %v4227, %v4884
    %v4886 = vpop.f32.mrf.mxu0
    %4887 = vdwg.mxu0
    %4888 = vmatpush.bf16.msra.mxu0 %v4679
    %4889 = vmatpush.bf16.msra.mxu0 %v4675
    %4890 = vmatpush.bf16.msra.mxu0 %v4671
    %4891 = vmatpush.bf16.msra.mxu0 %v4667
    %4892 = vmatpush.bf16.msra.mxu0 %v4663
    %4893 = vmatpush.bf16.msra.mxu0 %v4659
    %4894 = vmatpush.bf16.msra.mxu0 %v4655
    %4895 = vmatpush.bf16.msra.mxu0 %v4651
    %4896 = vmatmul.bf16.gmra.mxu0 %v4094
    %v4897 = vpop.f32.mrf.mxu0
    %v4898 = vadd.f32 %v4885, %v4897
    %v4899 = vpop.f32.mrf.mxu0
    %4900 = vdwg.mxu0
    %4901 = vmatpush.bf16.msra.mxu0 %v4711
    %4902 = vmatpush.bf16.msra.mxu0 %v4707
    %4903 = vmatpush.bf16.msra.mxu0 %v4703
    %4904 = vmatpush.bf16.msra.mxu0 %v4699
    %4905 = vmatpush.bf16.msra.mxu0 %v4695
    %4906 = vmatpush.bf16.msra.mxu0 %v4691
    %4907 = vmatpush.bf16.msra.mxu0 %v4687
    %4908 = vmatpush.bf16.msra.mxu0 %v4683
    %4909 = vmatmul.bf16.gmra.mxu0 %v4095
    %v4910 = vpop.f32.mrf.mxu0
    %v4911 = vadd.f32 %v4898, %v4910
    %v4912 = vpop.f32.mrf.mxu0
    %4913 = vdwg.mxu0
    %4914 = vmatpush.bf16.msra.mxu0 %v4743
    %4915 = vmatpush.bf16.msra.mxu0 %v4739
    %4916 = vmatpush.bf16.msra.mxu0 %v4735
    %4917 = vmatpush.bf16.msra.mxu0 %v4731
    %4918 = vmatpush.bf16.msra.mxu0 %v4727
    %4919 = vmatpush.bf16.msra.mxu0 %v4723
    %4920 = vmatpush.bf16.msra.mxu0 %v4719
    %4921 = vmatpush.bf16.msra.mxu0 %v4715
    %4922 = vmatmul.bf16.gmra.mxu0 %v4096
    %v4923 = vpop.f32.mrf.mxu0
    %v4924 = vadd.f32 %v4911, %v4923
    %v4925 = vpop.f32.mrf.mxu0
    %4926 = vdwg.mxu0
    %4927 = vmatpush.bf16.msra.mxu0 %v4648
    %4928 = vmatpush.bf16.msra.mxu0 %v4644
    %4929 = vmatpush.bf16.msra.mxu0 %v4640
    %4930 = vmatpush.bf16.msra.mxu0 %v4636
    %4931 = vmatpush.bf16.msra.mxu0 %v4632
    %4932 = vmatpush.bf16.msra.mxu0 %v4628
    %4933 = vmatpush.bf16.msra.mxu0 %v4624
    %4934 = vmatpush.bf16.msra.mxu0 %v4620
    %4935 = vmatmul.bf16.gmra.mxu0 %v4093
    %v4936 = vpop.f32.mrf.mxu0
    %v4937 = vadd.f32 %v4228, %v4936
    %v4938 = vpop.f32.mrf.mxu0
    %4939 = vdwg.mxu0
    %4940 = vmatpush.bf16.msra.mxu0 %v4680
    %4941 = vmatpush.bf16.msra.mxu0 %v4676
    %4942 = vmatpush.bf16.msra.mxu0 %v4672
    %4943 = vmatpush.bf16.msra.mxu0 %v4668
    %4944 = vmatpush.bf16.msra.mxu0 %v4664
    %4945 = vmatpush.bf16.msra.mxu0 %v4660
    %4946 = vmatpush.bf16.msra.mxu0 %v4656
    %4947 = vmatpush.bf16.msra.mxu0 %v4652
    %4948 = vmatmul.bf16.gmra.mxu0 %v4094
    %v4949 = vpop.f32.mrf.mxu0
    %v4950 = vadd.f32 %v4937, %v4949
    %v4951 = vpop.f32.mrf.mxu0
    %4952 = vdwg.mxu0
    %4953 = vmatpush.bf16.msra.mxu0 %v4712
    %4954 = vmatpush.bf16.msra.mxu0 %v4708
    %4955 = vmatpush.bf16.msra.mxu0 %v4704
    %4956 = vmatpush.bf16.msra.mxu0 %v4700
    %4957 = vmatpush.bf16.msra.mxu0 %v4696
    %4958 = vmatpush.bf16.msra.mxu0 %v4692
    %4959 = vmatpush.bf16.msra.mxu0 %v4688
    %4960 = vmatpush.bf16.msra.mxu0 %v4684
    %4961 = vmatmul.bf16.gmra.mxu0 %v4095
    %v4962 = vpop.f32.mrf.mxu0
    %v4963 = vadd.f32 %v4950, %v4962
    %v4964 = vpop.f32.mrf.mxu0
    %4965 = vdwg.mxu0
    %4966 = vmatpush.bf16.msra.mxu0 %v4744
    %4967 = vmatpush.bf16.msra.mxu0 %v4740
    %4968 = vmatpush.bf16.msra.mxu0 %v4736
    %4969 = vmatpush.bf16.msra.mxu0 %v4732
    %4970 = vmatpush.bf16.msra.mxu0 %v4728
    %4971 = vmatpush.bf16.msra.mxu0 %v4724
    %4972 = vmatpush.bf16.msra.mxu0 %v4720
    %4973 = vmatpush.bf16.msra.mxu0 %v4716
    %4974 = vmatmul.bf16.gmra.mxu0 %v4096
    %v4975 = vpop.f32.mrf.mxu0
    %v4976 = vadd.f32 %v4963, %v4975
    %v4977 = vpop.f32.mrf.mxu0
    %4978 = vdwg.mxu0
    %4979 = vmatpush.bf16.msra.mxu0 %v4649
    %4980 = vmatpush.bf16.msra.mxu0 %v4645
    %4981 = vmatpush.bf16.msra.mxu0 %v4641
    %4982 = vmatpush.bf16.msra.mxu0 %v4637
    %4983 = vmatpush.bf16.msra.mxu0 %v4633
    %4984 = vmatpush.bf16.msra.mxu0 %v4629
    %4985 = vmatpush.bf16.msra.mxu0 %v4625
    %4986 = vmatpush.bf16.msra.mxu0 %v4621
    %4987 = vmatmul.bf16.gmra.mxu0 %v4093
    %v4988 = vpop.f32.mrf.mxu0
    %v4989 = vadd.f32 %v4229, %v4988
    %v4990 = vpop.f32.mrf.mxu0
    %4991 = vdwg.mxu0
    %4992 = vmatpush.bf16.msra.mxu0 %v4681
    %4993 = vmatpush.bf16.msra.mxu0 %v4677
    %4994 = vmatpush.bf16.msra.mxu0 %v4673
    %4995 = vmatpush.bf16.msra.mxu0 %v4669
    %4996 = vmatpush.bf16.msra.mxu0 %v4665
    %4997 = vmatpush.bf16.msra.mxu0 %v4661
    %4998 = vmatpush.bf16.msra.mxu0 %v4657
    %4999 = vmatpush.bf16.msra.mxu0 %v4653
    %5000 = vmatmul.bf16.gmra.mxu0 %v4094
    %v5001 = vpop.f32.mrf.mxu0
    %v5002 = vadd.f32 %v4989, %v5001
    %v5003 = vpop.f32.mrf.mxu0
    %5004 = vdwg.mxu0
    %5005 = vmatpush.bf16.msra.mxu0 %v4713
    %5006 = vmatpush.bf16.msra.mxu0 %v4709
    %5007 = vmatpush.bf16.msra.mxu0 %v4705
    %5008 = vmatpush.bf16.msra.mxu0 %v4701
    %5009 = vmatpush.bf16.msra.mxu0 %v4697
    %5010 = vmatpush.bf16.msra.mxu0 %v4693
    %5011 = vmatpush.bf16.msra.mxu0 %v4689
    %5012 = vmatpush.bf16.msra.mxu0 %v4685
    %5013 = vmatmul.bf16.gmra.mxu0 %v4095
    %v5014 = vpop.f32.mrf.mxu0
    %v5015 = vadd.f32 %v5002, %v5014
    %v5016 = vpop.f32.mrf.mxu0
    %5017 = vdwg.mxu0
    %5018 = vmatpush.bf16.msra.mxu0 %v4745
    %5019 = vmatpush.bf16.msra.mxu0 %v4741
    %5020 = vmatpush.bf16.msra.mxu0 %v4737
    %5021 = vmatpush.bf16.msra.mxu0 %v4733
    %5022 = vmatpush.bf16.msra.mxu0 %v4729
    %5023 = vmatpush.bf16.msra.mxu0 %v4725
    %5024 = vmatpush.bf16.msra.mxu0 %v4721
    %5025 = vmatpush.bf16.msra.mxu0 %v4717
    %5026 = vmatmul.bf16.gmra.mxu0 %v4096
    %v5027 = vpop.f32.mrf.mxu0
    %v5028 = vadd.f32 %v5015, %v5027
    %v5029 = vpop.f32.mrf.mxu0
    %5030 = vdwg.mxu0
    %5031 = vmatpush.bf16.msra.mxu0 %v4650
    %5032 = vmatpush.bf16.msra.mxu0 %v4646
    %5033 = vmatpush.bf16.msra.mxu0 %v4642
    %5034 = vmatpush.bf16.msra.mxu0 %v4638
    %5035 = vmatpush.bf16.msra.mxu0 %v4634
    %5036 = vmatpush.bf16.msra.mxu0 %v4630
    %5037 = vmatpush.bf16.msra.mxu0 %v4626
    %5038 = vmatpush.bf16.msra.mxu0 %v4622
    %5039 = vmatmul.bf16.gmra.mxu0 %v4093
    %v5040 = vpop.f32.mrf.mxu0
    %v5041 = vadd.f32 %v4230, %v5040
    %v5042 = vpop.f32.mrf.mxu0
    %5043 = vdwg.mxu0
    %5044 = vmatpush.bf16.msra.mxu0 %v4682
    %5045 = vmatpush.bf16.msra.mxu0 %v4678
    %5046 = vmatpush.bf16.msra.mxu0 %v4674
    %5047 = vmatpush.bf16.msra.mxu0 %v4670
    %5048 = vmatpush.bf16.msra.mxu0 %v4666
    %5049 = vmatpush.bf16.msra.mxu0 %v4662
    %5050 = vmatpush.bf16.msra.mxu0 %v4658
    %5051 = vmatpush.bf16.msra.mxu0 %v4654
    %5052 = vmatmul.bf16.gmra.mxu0 %v4094
    %v5053 = vpop.f32.mrf.mxu0
    %v5054 = vadd.f32 %v5041, %v5053
    %v5055 = vpop.f32.mrf.mxu0
    %5056 = vdwg.mxu0
    %5057 = vmatpush.bf16.msra.mxu0 %v4714
    %5058 = vmatpush.bf16.msra.mxu0 %v4710
    %5059 = vmatpush.bf16.msra.mxu0 %v4706
    %5060 = vmatpush.bf16.msra.mxu0 %v4702
    %5061 = vmatpush.bf16.msra.mxu0 %v4698
    %5062 = vmatpush.bf16.msra.mxu0 %v4694
    %5063 = vmatpush.bf16.msra.mxu0 %v4690
    %5064 = vmatpush.bf16.msra.mxu0 %v4686
    %5065 = vmatmul.bf16.gmra.mxu0 %v4095
    %v5066 = vpop.f32.mrf.mxu0
    %v5067 = vadd.f32 %v5054, %v5066
    %v5068 = vpop.f32.mrf.mxu0
    %5069 = vdwg.mxu0
    %5070 = vmatpush.bf16.msra.mxu0 %v4746
    %5071 = vmatpush.bf16.msra.mxu0 %v4742
    %5072 = vmatpush.bf16.msra.mxu0 %v4738
    %5073 = vmatpush.bf16.msra.mxu0 %v4734
    %5074 = vmatpush.bf16.msra.mxu0 %v4730
    %5075 = vmatpush.bf16.msra.mxu0 %v4726
    %5076 = vmatpush.bf16.msra.mxu0 %v4722
    %5077 = vmatpush.bf16.msra.mxu0 %v4718
    %5078 = vmatmul.bf16.gmra.mxu0 %v4096
    %v5079 = vpop.f32.mrf.mxu0
    %v5080 = vadd.f32 %v5067, %v5079
    %v5081 = vpop.f32.mrf.mxu0
    %5082 = vdwg.mxu0
    %v5083 = vsub.f32 %v5028, 5.0
    %v5084 = vsub.f32 %v5080, 5.0
    %v5085 = vmax.f32 %v5083, 0.0
    %v5086 = vmax.f32 %v5084, 0.0
    %v5087 = vand.u32 2147483647, %v5083
    %v5088 = vand.u32 2147483647, %v5084
    %v5089 = vsub.f32 0.0, %v5087
    %v5090 = vsub.f32 0.0, %v5088
    %v5091 = vmul.f32 %v5089, 1.442695
    %v5092 = vpow.pop %v5091
    %v5093 = vmul.f32 %v5090, 1.442695
    %v5094 = vpow.pop %v5093
    %v5095 = vadd.f32 %v5092, 1.0
    %v5096 = vadd.f32 %v5094, 1.0
    %v5097 = vlog2.pop %v5095
    %v5098 = vmul.f32 %v5097, 0.6931472
    %v5099 = vlog2.pop %v5096
    %v5100 = vmul.f32 %v5099, 0.6931472
    %v5101 = vadd.f32 %v5085, %v5098
    %v5102 = vadd.f32 %v5086, %v5100
    %v5103 = vld [vmem:[%s15] sm:$0xf]
    %v5106 = vrot.slane %v5102, 6
    %vm5107 = vcmask 1041408
    %v5108 = vsel %vm5107, %v5101, %v5106
    %v5110 = vmul.f32 %v5103, %v5108
    %5112 = vst [vmem:[#allocation1] ss:$4 sm:$0xff] %v5110
    %v5113 = vld.sshfl [vmem:[#allocation1] sm:$0xff pattern:$0x73625140]
    %v5114 = vld.sshfl [vmem:[#allocation1 + $0x8] sm:$0xff pattern:$0x73625140]
    %v5117 = vadd.f32 %v4924, %v5113
    %v5118 = vadd.f32 %v4976, %v5114
    %v5119 = vpack.c.bf16 %v5117, %v5117
    %v5120 = vpack.c.bf16 %v5118, %v5118
    %v5121 = vld [vmem:[#allocation10] sm:$0xff]
    %v5122 = vld [vmem:[#allocation10 + $0x8] sm:$0xff]
    %v5123 = vld [vmem:[#allocation10 + $0x10] sm:$0xff]
    %v5124 = vld [vmem:[#allocation10 + $0x18] sm:$0xff]
    %v5125 = vld [vmem:[#allocation10 + $0x20] sm:$0xff]
    %v5126 = vld [vmem:[#allocation10 + $0x28] sm:$0xff]
    %v5127 = vld [vmem:[#allocation10 + $0x30] sm:$0xff]
    %v5128 = vld [vmem:[#allocation10 + $0x38] sm:$0xff]
    %v5129 = vld [vmem:[#allocation10 + $0x40] sm:$0xff]
    %v5130 = vld [vmem:[#allocation10 + $0x48] sm:$0xff]
    %v5131 = vld [vmem:[#allocation10 + $0x50] sm:$0xff]
    %v5132 = vld [vmem:[#allocation10 + $0x58] sm:$0xff]
    %v5133 = vld [vmem:[#allocation10 + $0x60] sm:$0xff]
    %v5134 = vld [vmem:[#allocation10 + $0x68] sm:$0xff]
    %v5135 = vld [vmem:[#allocation10 + $0x70] sm:$0xff]
    %v5136 = vld [vmem:[#allocation10 + $0x78] sm:$0xff]
    %v5137 = vld [vmem:[#allocation10 + $0x80] sm:$0xff]
    %v5138 = vld [vmem:[#allocation10 + $0x88] sm:$0xff]
    %v5139 = vld [vmem:[#allocation10 + $0x90] sm:$0xff]
    %v5140 = vld [vmem:[#allocation10 + $0x98] sm:$0xff]
    %v5141 = vld [vmem:[#allocation10 + $0xa0] sm:$0xff]
    %v5142 = vld [vmem:[#allocation10 + $0xa8] sm:$0xff]
    %v5143 = vld [vmem:[#allocation10 + $0xb0] sm:$0xff]
    %v5144 = vld [vmem:[#allocation10 + $0xb8] sm:$0xff]
    %v5145 = vld [vmem:[#allocation10 + $0xc0] sm:$0xff]
    %v5146 = vld [vmem:[#allocation10 + $0xc8] sm:$0xff]
    %v5147 = vld [vmem:[#allocation10 + $0xd0] sm:$0xff]
    %v5148 = vld [vmem:[#allocation10 + $0xd8] sm:$0xff]
    %v5149 = vld [vmem:[#allocation10 + $0xe0] sm:$0xff]
    %v5150 = vld [vmem:[#allocation10 + $0xe8] sm:$0xff]
    %v5151 = vld [vmem:[#allocation10 + $0xf0] sm:$0xff]
    %v5152 = vld [vmem:[#allocation10 + $0xf8] sm:$0xff]
    %v5153 = vld [vmem:[#allocation10 + $0x100] sm:$0xff]
    %v5154 = vld [vmem:[#allocation10 + $0x108] sm:$0xff]
    %v5155 = vld [vmem:[#allocation10 + $0x110] sm:$0xff]
    %v5156 = vld [vmem:[#allocation10 + $0x118] sm:$0xff]
    %v5157 = vld [vmem:[#allocation10 + $0x120] sm:$0xff]
    %v5158 = vld [vmem:[#allocation10 + $0x128] sm:$0xff]
    %v5159 = vld [vmem:[#allocation10 + $0x130] sm:$0xff]
    %v5160 = vld [vmem:[#allocation10 + $0x138] sm:$0xff]
    %v5161 = vld [vmem:[#allocation10 + $0x140] sm:$0xff]
    %v5162 = vld [vmem:[#allocation10 + $0x148] sm:$0xff]
    %v5163 = vld [vmem:[#allocation10 + $0x150] sm:$0xff]
    %v5164 = vld [vmem:[#allocation10 + $0x158] sm:$0xff]
    %v5165 = vld [vmem:[#allocation10 + $0x160] sm:$0xff]
    %v5166 = vld [vmem:[#allocation10 + $0x168] sm:$0xff]
    %v5167 = vld [vmem:[#allocation10 + $0x170] sm:$0xff]
    %v5168 = vld [vmem:[#allocation10 + $0x178] sm:$0xff]
    %v5169 = vld [vmem:[#allocation10 + $0x180] sm:$0xff]
    %v5170 = vld [vmem:[#allocation10 + $0x188] sm:$0xff]
    %v5171 = vld [vmem:[#allocation10 + $0x190] sm:$0xff]
    %v5172 = vld [vmem:[#allocation10 + $0x198] sm:$0xff]
    %v5173 = vld [vmem:[#allocation10 + $0x1a0] sm:$0xff]
    %v5174 = vld [vmem:[#allocation10 + $0x1a8] sm:$0xff]
    %v5175 = vld [vmem:[#allocation10 + $0x1b0] sm:$0xff]
    %v5176 = vld [vmem:[#allocation10 + $0x1b8] sm:$0xff]
    %v5177 = vld [vmem:[#allocation10 + $0x1c0] sm:$0xff]
    %v5178 = vld [vmem:[#allocation10 + $0x1c8] sm:$0xff]
    %v5179 = vld [vmem:[#allocation10 + $0x1d0] sm:$0xff]
    %v5180 = vld [vmem:[#allocation10 + $0x1d8] sm:$0xff]
    %v5181 = vld [vmem:[#allocation10 + $0x1e0] sm:$0xff]
    %v5182 = vld [vmem:[#allocation10 + $0x1e8] sm:$0xff]
    %v5183 = vld [vmem:[#allocation10 + $0x1f0] sm:$0xff]
    %v5184 = vld [vmem:[#allocation10 + $0x1f8] sm:$0xff]
    %v5185 = vld [vmem:[%s10] sm:$0xf]
    %v5187 = vperm.slane %v5185, 0
    %v5188 = vperm.slane %v5185, 1
    %v5189 = vperm.slane %v5185, 2
    %v5190 = vperm.slane %v5185, 3
    %v5259 = vunpack.c.l.b16 %v5121
    %v5260 = vunpack.c.h.b16 %v5121
    %v5261 = vunpack.c.l.b16 %v5122
    %v5262 = vunpack.c.h.b16 %v5122
    %v5263 = vunpack.c.l.b16 %v5123
    %v5264 = vunpack.c.h.b16 %v5123
    %v5265 = vunpack.c.l.b16 %v5124
    %v5266 = vunpack.c.h.b16 %v5124
    %v5267 = vunpack.c.l.b16 %v5125
    %v5268 = vunpack.c.h.b16 %v5125
    %v5269 = vunpack.c.l.b16 %v5126
    %v5270 = vunpack.c.h.b16 %v5126
    %v5271 = vunpack.c.l.b16 %v5127
    %v5272 = vunpack.c.h.b16 %v5127
    %v5273 = vunpack.c.l.b16 %v5128
    %v5274 = vunpack.c.h.b16 %v5128
    %v5275 = vunpack.c.l.b16 %v5129
    %v5276 = vunpack.c.h.b16 %v5129
    %v5277 = vunpack.c.l.b16 %v5130
    %v5278 = vunpack.c.h.b16 %v5130
    %v5279 = vunpack.c.l.b16 %v5131
    %v5280 = vunpack.c.h.b16 %v5131
    %v5281 = vunpack.c.l.b16 %v5132
    %v5282 = vunpack.c.h.b16 %v5132
    %v5283 = vunpack.c.l.b16 %v5133
    %v5284 = vunpack.c.h.b16 %v5133
    %v5285 = vunpack.c.l.b16 %v5134
    %v5286 = vunpack.c.h.b16 %v5134
    %v5287 = vunpack.c.l.b16 %v5135
    %v5288 = vunpack.c.h.b16 %v5135
    %v5289 = vunpack.c.l.b16 %v5136
    %v5290 = vunpack.c.h.b16 %v5136
    %v5291 = vunpack.c.l.b16 %v5137
    %v5292 = vunpack.c.h.b16 %v5137
    %v5293 = vunpack.c.l.b16 %v5138
    %v5294 = vunpack.c.h.b16 %v5138
    %v5295 = vunpack.c.l.b16 %v5139
    %v5296 = vunpack.c.h.b16 %v5139
    %v5297 = vunpack.c.l.b16 %v5140
    %v5298 = vunpack.c.h.b16 %v5140
    %v5299 = vunpack.c.l.b16 %v5141
    %v5300 = vunpack.c.h.b16 %v5141
    %v5301 = vunpack.c.l.b16 %v5142
    %v5302 = vunpack.c.h.b16 %v5142
    %v5303 = vunpack.c.l.b16 %v5143
    %v5304 = vunpack.c.h.b16 %v5143
    %v5305 = vunpack.c.l.b16 %v5144
    %v5306 = vunpack.c.h.b16 %v5144
    %v5307 = vunpack.c.l.b16 %v5145
    %v5308 = vunpack.c.h.b16 %v5145
    %v5309 = vunpack.c.l.b16 %v5146
    %v5310 = vunpack.c.h.b16 %v5146
    %v5311 = vunpack.c.l.b16 %v5147
    %v5312 = vunpack.c.h.b16 %v5147
    %v5313 = vunpack.c.l.b16 %v5148
    %v5314 = vunpack.c.h.b16 %v5148
    %v5315 = vunpack.c.l.b16 %v5149
    %v5316 = vunpack.c.h.b16 %v5149
    %v5317 = vunpack.c.l.b16 %v5150
    %v5318 = vunpack.c.h.b16 %v5150
    %v5319 = vunpack.c.l.b16 %v5151
    %v5320 = vunpack.c.h.b16 %v5151
    %v5321 = vunpack.c.l.b16 %v5152
    %v5322 = vunpack.c.h.b16 %v5152
    %v5323 = vunpack.c.l.b16 %v5153
    %v5324 = vunpack.c.h.b16 %v5153
    %v5325 = vunpack.c.l.b16 %v5154
    %v5326 = vunpack.c.h.b16 %v5154
    %v5327 = vunpack.c.l.b16 %v5155
    %v5328 = vunpack.c.h.b16 %v5155
    %v5329 = vunpack.c.l.b16 %v5156
    %v5330 = vunpack.c.h.b16 %v5156
    %v5331 = vunpack.c.l.b16 %v5157
    %v5332 = vunpack.c.h.b16 %v5157
    %v5333 = vunpack.c.l.b16 %v5158
    %v5334 = vunpack.c.h.b16 %v5158
    %v5335 = vunpack.c.l.b16 %v5159
    %v5336 = vunpack.c.h.b16 %v5159
    %v5337 = vunpack.c.l.b16 %v5160
    %v5338 = vunpack.c.h.b16 %v5160
    %v5339 = vunpack.c.l.b16 %v5161
    %v5340 = vunpack.c.h.b16 %v5161
    %v5341 = vunpack.c.l.b16 %v5162
    %v5342 = vunpack.c.h.b16 %v5162
    %v5343 = vunpack.c.l.b16 %v5163
    %v5344 = vunpack.c.h.b16 %v5163
    %v5345 = vunpack.c.l.b16 %v5164
    %v5346 = vunpack.c.h.b16 %v5164
    %v5347 = vunpack.c.l.b16 %v5165
    %v5348 = vunpack.c.h.b16 %v5165
    %v5349 = vunpack.c.l.b16 %v5166
    %v5350 = vunpack.c.h.b16 %v5166
    %v5351 = vunpack.c.l.b16 %v5167
    %v5352 = vunpack.c.h.b16 %v5167
    %v5353 = vunpack.c.l.b16 %v5168
    %v5354 = vunpack.c.h.b16 %v5168
    %v5355 = vunpack.c.l.b16 %v5169
    %v5356 = vunpack.c.h.b16 %v5169
    %v5357 = vunpack.c.l.b16 %v5170
    %v5358 = vunpack.c.h.b16 %v5170
    %v5359 = vunpack.c.l.b16 %v5171
    %v5360 = vunpack.c.h.b16 %v5171
    %v5361 = vunpack.c.l.b16 %v5172
    %v5362 = vunpack.c.h.b16 %v5172
    %v5363 = vunpack.c.l.b16 %v5173
    %v5364 = vunpack.c.h.b16 %v5173
    %v5365 = vunpack.c.l.b16 %v5174
    %v5366 = vunpack.c.h.b16 %v5174
    %v5367 = vunpack.c.l.b16 %v5175
    %v5368 = vunpack.c.h.b16 %v5175
    %v5369 = vunpack.c.l.b16 %v5176
    %v5370 = vunpack.c.h.b16 %v5176
    %v5371 = vunpack.c.l.b16 %v5177
    %v5372 = vunpack.c.h.b16 %v5177
    %v5373 = vunpack.c.l.b16 %v5178
    %v5374 = vunpack.c.h.b16 %v5178
    %v5375 = vunpack.c.l.b16 %v5179
    %v5376 = vunpack.c.h.b16 %v5179
    %v5377 = vunpack.c.l.b16 %v5180
    %v5378 = vunpack.c.h.b16 %v5180
    %v5379 = vunpack.c.l.b16 %v5181
    %v5380 = vunpack.c.h.b16 %v5181
    %v5381 = vunpack.c.l.b16 %v5182
    %v5382 = vunpack.c.h.b16 %v5182
    %v5383 = vunpack.c.l.b16 %v5183
    %v5384 = vunpack.c.h.b16 %v5183
    %v5385 = vunpack.c.l.b16 %v5184
    %v5386 = vunpack.c.h.b16 %v5184
    %v5387 = vpack.c.b16 %v5263, %v5259
    %v5388 = vpack.c.b16 %v5264, %v5260
    %v5389 = vpack.c.b16 %v5265, %v5261
    %v5390 = vpack.c.b16 %v5266, %v5262
    %v5391 = vpack.c.b16 %v5271, %v5267
    %v5392 = vpack.c.b16 %v5272, %v5268
    %v5393 = vpack.c.b16 %v5273, %v5269
    %v5394 = vpack.c.b16 %v5274, %v5270
    %v5395 = vpack.c.b16 %v5279, %v5275
    %v5396 = vpack.c.b16 %v5280, %v5276
    %v5397 = vpack.c.b16 %v5281, %v5277
    %v5398 = vpack.c.b16 %v5282, %v5278
    %v5399 = vpack.c.b16 %v5287, %v5283
    %v5400 = vpack.c.b16 %v5288, %v5284
    %v5401 = vpack.c.b16 %v5289, %v5285
    %v5402 = vpack.c.b16 %v5290, %v5286
    %v5403 = vpack.c.b16 %v5295, %v5291
    %v5404 = vpack.c.b16 %v5296, %v5292
    %v5405 = vpack.c.b16 %v5297, %v5293
    %v5406 = vpack.c.b16 %v5298, %v5294
    %v5407 = vpack.c.b16 %v5303, %v5299
    %v5408 = vpack.c.b16 %v5304, %v5300
    %v5409 = vpack.c.b16 %v5305, %v5301
    %v5410 = vpack.c.b16 %v5306, %v5302
    %v5411 = vpack.c.b16 %v5311, %v5307
    %v5412 = vpack.c.b16 %v5312, %v5308
    %v5413 = vpack.c.b16 %v5313, %v5309
    %v5414 = vpack.c.b16 %v5314, %v5310
    %v5415 = vpack.c.b16 %v5319, %v5315
    %v5416 = vpack.c.b16 %v5320, %v5316
    %v5417 = vpack.c.b16 %v5321, %v5317
    %v5418 = vpack.c.b16 %v5322, %v5318
    %v5419 = vpack.c.b16 %v5327, %v5323
    %v5420 = vpack.c.b16 %v5328, %v5324
    %v5421 = vpack.c.b16 %v5329, %v5325
    %v5422 = vpack.c.b16 %v5330, %v5326
    %v5423 = vpack.c.b16 %v5335, %v5331
    %v5424 = vpack.c.b16 %v5336, %v5332
    %v5425 = vpack.c.b16 %v5337, %v5333
    %v5426 = vpack.c.b16 %v5338, %v5334
    %v5427 = vpack.c.b16 %v5343, %v5339
    %v5428 = vpack.c.b16 %v5344, %v5340
    %v5429 = vpack.c.b16 %v5345, %v5341
    %v5430 = vpack.c.b16 %v5346, %v5342
    %v5431 = vpack.c.b16 %v5351, %v5347
    %v5432 = vpack.c.b16 %v5352, %v5348
    %v5433 = vpack.c.b16 %v5353, %v5349
    %v5434 = vpack.c.b16 %v5354, %v5350
    %v5435 = vpack.c.b16 %v5359, %v5355
    %v5436 = vpack.c.b16 %v5360, %v5356
    %v5437 = vpack.c.b16 %v5361, %v5357
    %v5438 = vpack.c.b16 %v5362, %v5358
    %v5439 = vpack.c.b16 %v5367, %v5363
    %v5440 = vpack.c.b16 %v5368, %v5364
    %v5441 = vpack.c.b16 %v5369, %v5365
    %v5442 = vpack.c.b16 %v5370, %v5366
    %v5443 = vpack.c.b16 %v5375, %v5371
    %v5444 = vpack.c.b16 %v5376, %v5372
    %v5445 = vpack.c.b16 %v5377, %v5373
    %v5446 = vpack.c.b16 %v5378, %v5374
    %v5447 = vpack.c.b16 %v5383, %v5379
    %v5448 = vpack.c.b16 %v5384, %v5380
    %v5449 = vpack.c.b16 %v5385, %v5381
    %v5450 = vpack.c.b16 %v5386, %v5382
    %5515 = vmatpush.bf16.msra.mxu0 %v5415
    %5516 = vmatpush.bf16.msra.mxu0 %v5411
    %5517 = vmatpush.bf16.msra.mxu0 %v5407
    %5518 = vmatpush.bf16.msra.mxu0 %v5403
    %5519 = vmatpush.bf16.msra.mxu0 %v5399
    %5520 = vmatpush.bf16.msra.mxu0 %v5395
    %5521 = vmatpush.bf16.msra.mxu0 %v5391
    %5522 = vmatpush.bf16.msra.mxu0 %v5387
    %5523 = vmatmul.bf16.gmra.mxu0 %v5119
    %v5524 = vpop.f32.mrf.mxu0
    %v5525 = vadd.f32 %v5187, %v5524
    %v5526 = vpop.f32.mrf.mxu0
    %5527 = vdwg.mxu0
    %5528 = vmatpush.bf16.msra.mxu0 %v5447
    %5529 = vmatpush.bf16.msra.mxu0 %v5443
    %5530 = vmatpush.bf16.msra.mxu0 %v5439
    %5531 = vmatpush.bf16.msra.mxu0 %v5435
    %5532 = vmatpush.bf16.msra.mxu0 %v5431
    %5533 = vmatpush.bf16.msra.mxu0 %v5427
    %5534 = vmatpush.bf16.msra.mxu0 %v5423
    %5535 = vmatpush.bf16.msra.mxu0 %v5419
    %5536 = vmatmul.bf16.gmra.mxu0 %v5120
    %v5537 = vpop.f32.mrf.mxu0
    %v5538 = vadd.f32 %v5525, %v5537
    %v5539 = vpop.f32.mrf.mxu0
    %5540 = vdwg.mxu0
    %5541 = vmatpush.bf16.msra.mxu0 %v5416
    %5542 = vmatpush.bf16.msra.mxu0 %v5412
    %5543 = vmatpush.bf16.msra.mxu0 %v5408
    %5544 = vmatpush.bf16.msra.mxu0 %v5404
    %5545 = vmatpush.bf16.msra.mxu0 %v5400
    %5546 = vmatpush.bf16.msra.mxu0 %v5396
    %5547 = vmatpush.bf16.msra.mxu0 %v5392
    %5548 = vmatpush.bf16.msra.mxu0 %v5388
    %5549 = vmatmul.bf16.gmra.mxu0 %v5119
    %v5550 = vpop.f32.mrf.mxu0
    %v5551 = vadd.f32 %v5188, %v5550
    %v5552 = vpop.f32.mrf.mxu0
    %5553 = vdwg.mxu0
    %5554 = vmatpush.bf16.msra.mxu0 %v5448
    %5555 = vmatpush.bf16.msra.mxu0 %v5444
    %5556 = vmatpush.bf16.msra.mxu0 %v5440
    %5557 = vmatpush.bf16.msra.mxu0 %v5436
    %5558 = vmatpush.bf16.msra.mxu0 %v5432
    %5559 = vmatpush.bf16.msra.mxu0 %v5428
    %5560 = vmatpush.bf16.msra.mxu0 %v5424
    %5561 = vmatpush.bf16.msra.mxu0 %v5420
    %5562 = vmatmul.bf16.gmra.mxu0 %v5120
    %v5563 = vpop.f32.mrf.mxu0
    %v5564 = vadd.f32 %v5551, %v5563
    %v5565 = vpop.f32.mrf.mxu0
    %5566 = vdwg.mxu0
    %5567 = vmatpush.bf16.msra.mxu0 %v5417
    %5568 = vmatpush.bf16.msra.mxu0 %v5413
    %5569 = vmatpush.bf16.msra.mxu0 %v5409
    %5570 = vmatpush.bf16.msra.mxu0 %v5405
    %5571 = vmatpush.bf16.msra.mxu0 %v5401
    %5572 = vmatpush.bf16.msra.mxu0 %v5397
    %5573 = vmatpush.bf16.msra.mxu0 %v5393
    %5574 = vmatpush.bf16.msra.mxu0 %v5389
    %5575 = vmatmul.bf16.gmra.mxu0 %v5119
    %v5576 = vpop.f32.mrf.mxu0
    %v5577 = vadd.f32 %v5189, %v5576
    %v5578 = vpop.f32.mrf.mxu0
    %5579 = vdwg.mxu0
    %5580 = vmatpush.bf16.msra.mxu0 %v5449
    %5581 = vmatpush.bf16.msra.mxu0 %v5445
    %5582 = vmatpush.bf16.msra.mxu0 %v5441
    %5583 = vmatpush.bf16.msra.mxu0 %v5437
    %5584 = vmatpush.bf16.msra.mxu0 %v5433
    %5585 = vmatpush.bf16.msra.mxu0 %v5429
    %5586 = vmatpush.bf16.msra.mxu0 %v5425
    %5587 = vmatpush.bf16.msra.mxu0 %v5421
    %5588 = vmatmul.bf16.gmra.mxu0 %v5120
    %v5589 = vpop.f32.mrf.mxu0
    %v5590 = vadd.f32 %v5577, %v5589
    %v5591 = vpop.f32.mrf.mxu0
    %5592 = vdwg.mxu0
    %5593 = vmatpush.bf16.msra.mxu0 %v5418
    %5594 = vmatpush.bf16.msra.mxu0 %v5414
    %5595 = vmatpush.bf16.msra.mxu0 %v5410
    %5596 = vmatpush.bf16.msra.mxu0 %v5406
    %5597 = vmatpush.bf16.msra.mxu0 %v5402
    %5598 = vmatpush.bf16.msra.mxu0 %v5398
    %5599 = vmatpush.bf16.msra.mxu0 %v5394
    %5600 = vmatpush.bf16.msra.mxu0 %v5390
    %5601 = vmatmul.bf16.gmra.mxu0 %v5119
    %v5602 = vpop.f32.mrf.mxu0
    %v5603 = vadd.f32 %v5190, %v5602
    %v5604 = vpop.f32.mrf.mxu0
    %5605 = vdwg.mxu0
    %5606 = vmatpush.bf16.msra.mxu0 %v5450
    %5607 = vmatpush.bf16.msra.mxu0 %v5446
    %5608 = vmatpush.bf16.msra.mxu0 %v5442
    %5609 = vmatpush.bf16.msra.mxu0 %v5438
    %5610 = vmatpush.bf16.msra.mxu0 %v5434
    %5611 = vmatpush.bf16.msra.mxu0 %v5430
    %5612 = vmatpush.bf16.msra.mxu0 %v5426
    %5613 = vmatpush.bf16.msra.mxu0 %v5422
    %5614 = vmatmul.bf16.gmra.mxu0 %v5120
    %v5615 = vpop.f32.mrf.mxu0
    %v5616 = vadd.f32 %v5603, %v5615
    %v5617 = vpop.f32.mrf.mxu0
    %5618 = vdwg.mxu0
    %vm5619 = vcmp.gt.f32.partialorder %v5538, 0.0
    %vm5620 = vcmp.gt.f32.partialorder %v5564, 0.0
    %vm5621 = vcmp.gt.f32.partialorder %v5590, 0.0
    %vm5622 = vcmp.gt.f32.partialorder %v5616, 0.0
    %v5623 = vmul.f32 %v5538, 0.01
    %v5624 = vmul.f32 %v5564, 0.01
    %v5625 = vmul.f32 %v5590, 0.01
    %v5626 = vmul.f32 %v5616, 0.01
    %v5627 = vsel %vm5619, %v5538, %v5623
    %v5628 = vsel %vm5620, %v5564, %v5624
    %v5629 = vsel %vm5621, %v5590, %v5625
    %v5630 = vsel %vm5622, %v5616, %v5626
    %v5631 = vpack.c.bf16 %v5627, %v5627
    %v5632 = vpack.c.bf16 %v5628, %v5628
    %v5633 = vpack.c.bf16 %v5629, %v5629
    %v5634 = vpack.c.bf16 %v5630, %v5630
    %v5635 = vld [vmem:[#allocation11] sm:$0xff]
    %v5636 = vld [vmem:[#allocation11 + $0x8] sm:$0xff]
    %v5637 = vld [vmem:[#allocation11 + $0x10] sm:$0xff]
    %v5638 = vld [vmem:[#allocation11 + $0x18] sm:$0xff]
    %v5639 = vld [vmem:[#allocation11 + $0x20] sm:$0xff]
    %v5640 = vld [vmem:[#allocation11 + $0x28] sm:$0xff]
    %v5641 = vld [vmem:[#allocation11 + $0x30] sm:$0xff]
    %v5642 = vld [vmem:[#allocation11 + $0x38] sm:$0xff]
    %v5643 = vld [vmem:[#allocation11 + $0x40] sm:$0xff]
    %v5644 = vld [vmem:[#allocation11 + $0x48] sm:$0xff]
    %v5645 = vld [vmem:[#allocation11 + $0x50] sm:$0xff]
    %v5646 = vld [vmem:[#allocation11 + $0x58] sm:$0xff]
    %v5647 = vld [vmem:[#allocation11 + $0x60] sm:$0xff]
    %v5648 = vld [vmem:[#allocation11 + $0x68] sm:$0xff]
    %v5649 = vld [vmem:[#allocation11 + $0x70] sm:$0xff]
    %v5650 = vld [vmem:[#allocation11 + $0x78] sm:$0xff]
    %v5651 = vld [vmem:[#allocation11 + $0x80] sm:$0xff]
    %v5652 = vld [vmem:[#allocation11 + $0x88] sm:$0xff]
    %v5653 = vld [vmem:[#allocation11 + $0x90] sm:$0xff]
    %v5654 = vld [vmem:[#allocation11 + $0x98] sm:$0xff]
    %v5655 = vld [vmem:[#allocation11 + $0xa0] sm:$0xff]
    %v5656 = vld [vmem:[#allocation11 + $0xa8] sm:$0xff]
    %v5657 = vld [vmem:[#allocation11 + $0xb0] sm:$0xff]
    %v5658 = vld [vmem:[#allocation11 + $0xb8] sm:$0xff]
    %v5659 = vld [vmem:[#allocation11 + $0xc0] sm:$0xff]
    %v5660 = vld [vmem:[#allocation11 + $0xc8] sm:$0xff]
    %v5661 = vld [vmem:[#allocation11 + $0xd0] sm:$0xff]
    %v5662 = vld [vmem:[#allocation11 + $0xd8] sm:$0xff]
    %v5663 = vld [vmem:[#allocation11 + $0xe0] sm:$0xff]
    %v5664 = vld [vmem:[#allocation11 + $0xe8] sm:$0xff]
    %v5665 = vld [vmem:[#allocation11 + $0xf0] sm:$0xff]
    %v5666 = vld [vmem:[#allocation11 + $0xf8] sm:$0xff]
    %v5667 = vld [vmem:[#allocation11 + $0x100] sm:$0xff]
    %v5668 = vld [vmem:[#allocation11 + $0x108] sm:$0xff]
    %v5669 = vld [vmem:[#allocation11 + $0x110] sm:$0xff]
    %v5670 = vld [vmem:[#allocation11 + $0x118] sm:$0xff]
    %v5671 = vld [vmem:[#allocation11 + $0x120] sm:$0xff]
    %v5672 = vld [vmem:[#allocation11 + $0x128] sm:$0xff]
    %v5673 = vld [vmem:[#allocation11 + $0x130] sm:$0xff]
    %v5674 = vld [vmem:[#allocation11 + $0x138] sm:$0xff]
    %v5675 = vld [vmem:[#allocation11 + $0x140] sm:$0xff]
    %v5676 = vld [vmem:[#allocation11 + $0x148] sm:$0xff]
    %v5677 = vld [vmem:[#allocation11 + $0x150] sm:$0xff]
    %v5678 = vld [vmem:[#allocation11 + $0x158] sm:$0xff]
    %v5679 = vld [vmem:[#allocation11 + $0x160] sm:$0xff]
    %v5680 = vld [vmem:[#allocation11 + $0x168] sm:$0xff]
    %v5681 = vld [vmem:[#allocation11 + $0x170] sm:$0xff]
    %v5682 = vld [vmem:[#allocation11 + $0x178] sm:$0xff]
    %v5683 = vld [vmem:[#allocation11 + $0x180] sm:$0xff]
    %v5684 = vld [vmem:[#allocation11 + $0x188] sm:$0xff]
    %v5685 = vld [vmem:[#allocation11 + $0x190] sm:$0xff]
    %v5686 = vld [vmem:[#allocation11 + $0x198] sm:$0xff]
    %v5687 = vld [vmem:[#allocation11 + $0x1a0] sm:$0xff]
    %v5688 = vld [vmem:[#allocation11 + $0x1a8] sm:$0xff]
    %v5689 = vld [vmem:[#allocation11 + $0x1b0] sm:$0xff]
    %v5690 = vld [vmem:[#allocation11 + $0x1b8] sm:$0xff]
    %v5691 = vld [vmem:[#allocation11 + $0x1c0] sm:$0xff]
    %v5692 = vld [vmem:[#allocation11 + $0x1c8] sm:$0xff]
    %v5693 = vld [vmem:[#allocation11 + $0x1d0] sm:$0xff]
    %v5694 = vld [vmem:[#allocation11 + $0x1d8] sm:$0xff]
    %v5695 = vld [vmem:[#allocation11 + $0x1e0] sm:$0xff]
    %v5696 = vld [vmem:[#allocation11 + $0x1e8] sm:$0xff]
    %v5697 = vld [vmem:[#allocation11 + $0x1f0] sm:$0xff]
    %v5698 = vld [vmem:[#allocation11 + $0x1f8] sm:$0xff]
    %v5699 = vld [vmem:[#allocation11 + $0x200] sm:$0xff]
    %v5700 = vld [vmem:[#allocation11 + $0x208] sm:$0xff]
    %v5701 = vld [vmem:[#allocation11 + $0x210] sm:$0xff]
    %v5702 = vld [vmem:[#allocation11 + $0x218] sm:$0xff]
    %v5703 = vld [vmem:[#allocation11 + $0x220] sm:$0xff]
    %v5704 = vld [vmem:[#allocation11 + $0x228] sm:$0xff]
    %v5705 = vld [vmem:[#allocation11 + $0x230] sm:$0xff]
    %v5706 = vld [vmem:[#allocation11 + $0x238] sm:$0xff]
    %v5707 = vld [vmem:[#allocation11 + $0x240] sm:$0xff]
    %v5708 = vld [vmem:[#allocation11 + $0x248] sm:$0xff]
    %v5709 = vld [vmem:[#allocation11 + $0x250] sm:$0xff]
    %v5710 = vld [vmem:[#allocation11 + $0x258] sm:$0xff]
    %v5711 = vld [vmem:[#allocation11 + $0x260] sm:$0xff]
    %v5712 = vld [vmem:[#allocation11 + $0x268] sm:$0xff]
    %v5713 = vld [vmem:[#allocation11 + $0x270] sm:$0xff]
    %v5714 = vld [vmem:[#allocation11 + $0x278] sm:$0xff]
    %v5715 = vld [vmem:[#allocation11 + $0x280] sm:$0xff]
    %v5716 = vld [vmem:[#allocation11 + $0x288] sm:$0xff]
    %v5717 = vld [vmem:[#allocation11 + $0x290] sm:$0xff]
    %v5718 = vld [vmem:[#allocation11 + $0x298] sm:$0xff]
    %v5719 = vld [vmem:[#allocation11 + $0x2a0] sm:$0xff]
    %v5720 = vld [vmem:[#allocation11 + $0x2a8] sm:$0xff]
    %v5721 = vld [vmem:[#allocation11 + $0x2b0] sm:$0xff]
    %v5722 = vld [vmem:[#allocation11 + $0x2b8] sm:$0xff]
    %v5723 = vld [vmem:[#allocation11 + $0x2c0] sm:$0xff]
    %v5724 = vld [vmem:[#allocation11 + $0x2c8] sm:$0xff]
    %v5725 = vld [vmem:[#allocation11 + $0x2d0] sm:$0xff]
    %v5726 = vld [vmem:[#allocation11 + $0x2d8] sm:$0xff]
    %v5727 = vld [vmem:[#allocation11 + $0x2e0] sm:$0xff]
    %v5728 = vld [vmem:[#allocation11 + $0x2e8] sm:$0xff]
    %v5729 = vld [vmem:[#allocation11 + $0x2f0] sm:$0xff]
    %v5730 = vld [vmem:[#allocation11 + $0x2f8] sm:$0xff]
    %v5731 = vld [vmem:[#allocation11 + $0x300] sm:$0xff]
    %v5732 = vld [vmem:[#allocation11 + $0x308] sm:$0xff]
    %v5733 = vld [vmem:[#allocation11 + $0x310] sm:$0xff]
    %v5734 = vld [vmem:[#allocation11 + $0x318] sm:$0xff]
    %v5735 = vld [vmem:[#allocation11 + $0x320] sm:$0xff]
    %v5736 = vld [vmem:[#allocation11 + $0x328] sm:$0xff]
    %v5737 = vld [vmem:[#allocation11 + $0x330] sm:$0xff]
    %v5738 = vld [vmem:[#allocation11 + $0x338] sm:$0xff]
    %v5739 = vld [vmem:[#allocation11 + $0x340] sm:$0xff]
    %v5740 = vld [vmem:[#allocation11 + $0x348] sm:$0xff]
    %v5741 = vld [vmem:[#allocation11 + $0x350] sm:$0xff]
    %v5742 = vld [vmem:[#allocation11 + $0x358] sm:$0xff]
    %v5743 = vld [vmem:[#allocation11 + $0x360] sm:$0xff]
    %v5744 = vld [vmem:[#allocation11 + $0x368] sm:$0xff]
    %v5745 = vld [vmem:[#allocation11 + $0x370] sm:$0xff]
    %v5746 = vld [vmem:[#allocation11 + $0x378] sm:$0xff]
    %v5747 = vld [vmem:[#allocation11 + $0x380] sm:$0xff]
    %v5748 = vld [vmem:[#allocation11 + $0x388] sm:$0xff]
    %v5749 = vld [vmem:[#allocation11 + $0x390] sm:$0xff]
    %v5750 = vld [vmem:[#allocation11 + $0x398] sm:$0xff]
    %v5751 = vld [vmem:[#allocation11 + $0x3a0] sm:$0xff]
    %v5752 = vld [vmem:[#allocation11 + $0x3a8] sm:$0xff]
    %v5753 = vld [vmem:[#allocation11 + $0x3b0] sm:$0xff]
    %v5754 = vld [vmem:[#allocation11 + $0x3b8] sm:$0xff]
    %v5755 = vld [vmem:[#allocation11 + $0x3c0] sm:$0xff]
    %v5756 = vld [vmem:[#allocation11 + $0x3c8] sm:$0xff]
    %v5757 = vld [vmem:[#allocation11 + $0x3d0] sm:$0xff]
    %v5758 = vld [vmem:[#allocation11 + $0x3d8] sm:$0xff]
    %v5759 = vld [vmem:[#allocation11 + $0x3e0] sm:$0xff]
    %v5760 = vld [vmem:[#allocation11 + $0x3e8] sm:$0xff]
    %v5761 = vld [vmem:[#allocation11 + $0x3f0] sm:$0xff]
    %v5762 = vld [vmem:[#allocation11 + $0x3f8] sm:$0xff]
    %v5763 = vld [vmem:[%s12] sm:$0xf]
    %v5765 = vperm.slane %v5763, 0
    %v5766 = vperm.slane %v5763, 1
    %v5767 = vperm.slane %v5763, 2
    %v5768 = vperm.slane %v5763, 3
    %v5901 = vunpack.c.l.b16 %v5635
    %v5902 = vunpack.c.h.b16 %v5635
    %v5903 = vunpack.c.l.b16 %v5636
    %v5904 = vunpack.c.h.b16 %v5636
    %v5905 = vunpack.c.l.b16 %v5637
    %v5906 = vunpack.c.h.b16 %v5637
    %v5907 = vunpack.c.l.b16 %v5638
    %v5908 = vunpack.c.h.b16 %v5638
    %v5909 = vunpack.c.l.b16 %v5639
    %v5910 = vunpack.c.h.b16 %v5639
    %v5911 = vunpack.c.l.b16 %v5640
    %v5912 = vunpack.c.h.b16 %v5640
    %v5913 = vunpack.c.l.b16 %v5641
    %v5914 = vunpack.c.h.b16 %v5641
    %v5915 = vunpack.c.l.b16 %v5642
    %v5916 = vunpack.c.h.b16 %v5642
    %v5917 = vunpack.c.l.b16 %v5643
    %v5918 = vunpack.c.h.b16 %v5643
    %v5919 = vunpack.c.l.b16 %v5644
    %v5920 = vunpack.c.h.b16 %v5644
    %v5921 = vunpack.c.l.b16 %v5645
    %v5922 = vunpack.c.h.b16 %v5645
    %v5923 = vunpack.c.l.b16 %v5646
    %v5924 = vunpack.c.h.b16 %v5646
    %v5925 = vunpack.c.l.b16 %v5647
    %v5926 = vunpack.c.h.b16 %v5647
    %v5927 = vunpack.c.l.b16 %v5648
    %v5928 = vunpack.c.h.b16 %v5648
    %v5929 = vunpack.c.l.b16 %v5649
    %v5930 = vunpack.c.h.b16 %v5649
    %v5931 = vunpack.c.l.b16 %v5650
    %v5932 = vunpack.c.h.b16 %v5650
    %v5933 = vunpack.c.l.b16 %v5651
    %v5934 = vunpack.c.h.b16 %v5651
    %v5935 = vunpack.c.l.b16 %v5652
    %v5936 = vunpack.c.h.b16 %v5652
    %v5937 = vunpack.c.l.b16 %v5653
    %v5938 = vunpack.c.h.b16 %v5653
    %v5939 = vunpack.c.l.b16 %v5654
    %v5940 = vunpack.c.h.b16 %v5654
    %v5941 = vunpack.c.l.b16 %v5655
    %v5942 = vunpack.c.h.b16 %v5655
    %v5943 = vunpack.c.l.b16 %v5656
    %v5944 = vunpack.c.h.b16 %v5656
    %v5945 = vunpack.c.l.b16 %v5657
    %v5946 = vunpack.c.h.b16 %v5657
    %v5947 = vunpack.c.l.b16 %v5658
    %v5948 = vunpack.c.h.b16 %v5658
    %v5949 = vunpack.c.l.b16 %v5659
    %v5950 = vunpack.c.h.b16 %v5659
    %v5951 = vunpack.c.l.b16 %v5660
    %v5952 = vunpack.c.h.b16 %v5660
    %v5953 = vunpack.c.l.b16 %v5661
    %v5954 = vunpack.c.h.b16 %v5661
    %v5955 = vunpack.c.l.b16 %v5662
    %v5956 = vunpack.c.h.b16 %v5662
    %v5957 = vunpack.c.l.b16 %v5663
    %v5958 = vunpack.c.h.b16 %v5663
    %v5959 = vunpack.c.l.b16 %v5664
    %v5960 = vunpack.c.h.b16 %v5664
    %v5961 = vunpack.c.l.b16 %v5665
    %v5962 = vunpack.c.h.b16 %v5665
    %v5963 = vunpack.c.l.b16 %v5666
    %v5964 = vunpack.c.h.b16 %v5666
    %v5965 = vunpack.c.l.b16 %v5667
    %v5966 = vunpack.c.h.b16 %v5667
    %v5967 = vunpack.c.l.b16 %v5668
    %v5968 = vunpack.c.h.b16 %v5668
    %v5969 = vunpack.c.l.b16 %v5669
    %v5970 = vunpack.c.h.b16 %v5669
    %v5971 = vunpack.c.l.b16 %v5670
    %v5972 = vunpack.c.h.b16 %v5670
    %v5973 = vunpack.c.l.b16 %v5671
    %v5974 = vunpack.c.h.b16 %v5671
    %v5975 = vunpack.c.l.b16 %v5672
    %v5976 = vunpack.c.h.b16 %v5672
    %v5977 = vunpack.c.l.b16 %v5673
    %v5978 = vunpack.c.h.b16 %v5673
    %v5979 = vunpack.c.l.b16 %v5674
    %v5980 = vunpack.c.h.b16 %v5674
    %v5981 = vunpack.c.l.b16 %v5675
    %v5982 = vunpack.c.h.b16 %v5675
    %v5983 = vunpack.c.l.b16 %v5676
    %v5984 = vunpack.c.h.b16 %v5676
    %v5985 = vunpack.c.l.b16 %v5677
    %v5986 = vunpack.c.h.b16 %v5677
    %v5987 = vunpack.c.l.b16 %v5678
    %v5988 = vunpack.c.h.b16 %v5678
    %v5989 = vunpack.c.l.b16 %v5679
    %v5990 = vunpack.c.h.b16 %v5679
    %v5991 = vunpack.c.l.b16 %v5680
    %v5992 = vunpack.c.h.b16 %v5680
    %v5993 = vunpack.c.l.b16 %v5681
    %v5994 = vunpack.c.h.b16 %v5681
    %v5995 = vunpack.c.l.b16 %v5682
    %v5996 = vunpack.c.h.b16 %v5682
    %v5997 = vunpack.c.l.b16 %v5683
    %v5998 = vunpack.c.h.b16 %v5683
    %v5999 = vunpack.c.l.b16 %v5684
    %v6000 = vunpack.c.h.b16 %v5684
    %v6001 = vunpack.c.l.b16 %v5685
    %v6002 = vunpack.c.h.b16 %v5685
    %v6003 = vunpack.c.l.b16 %v5686
    %v6004 = vunpack.c.h.b16 %v5686
    %v6005 = vunpack.c.l.b16 %v5687
    %v6006 = vunpack.c.h.b16 %v5687
    %v6007 = vunpack.c.l.b16 %v5688
    %v6008 = vunpack.c.h.b16 %v5688
    %v6009 = vunpack.c.l.b16 %v5689
    %v6010 = vunpack.c.h.b16 %v5689
    %v6011 = vunpack.c.l.b16 %v5690
    %v6012 = vunpack.c.h.b16 %v5690
    %v6013 = vunpack.c.l.b16 %v5691
    %v6014 = vunpack.c.h.b16 %v5691
    %v6015 = vunpack.c.l.b16 %v5692
    %v6016 = vunpack.c.h.b16 %v5692
    %v6017 = vunpack.c.l.b16 %v5693
    %v6018 = vunpack.c.h.b16 %v5693
    %v6019 = vunpack.c.l.b16 %v5694
    %v6020 = vunpack.c.h.b16 %v5694
    %v6021 = vunpack.c.l.b16 %v5695
    %v6022 = vunpack.c.h.b16 %v5695
    %v6023 = vunpack.c.l.b16 %v5696
    %v6024 = vunpack.c.h.b16 %v5696
    %v6025 = vunpack.c.l.b16 %v5697
    %v6026 = vunpack.c.h.b16 %v5697
    %v6027 = vunpack.c.l.b16 %v5698
    %v6028 = vunpack.c.h.b16 %v5698
    %v6029 = vunpack.c.l.b16 %v5699
    %v6030 = vunpack.c.h.b16 %v5699
    %v6031 = vunpack.c.l.b16 %v5700
    %v6032 = vunpack.c.h.b16 %v5700
    %v6033 = vunpack.c.l.b16 %v5701
    %v6034 = vunpack.c.h.b16 %v5701
    %v6035 = vunpack.c.l.b16 %v5702
    %v6036 = vunpack.c.h.b16 %v5702
    %v6037 = vunpack.c.l.b16 %v5703
    %v6038 = vunpack.c.h.b16 %v5703
    %v6039 = vunpack.c.l.b16 %v5704
    %v6040 = vunpack.c.h.b16 %v5704
    %v6041 = vunpack.c.l.b16 %v5705
    %v6042 = vunpack.c.h.b16 %v5705
    %v6043 = vunpack.c.l.b16 %v5706
    %v6044 = vunpack.c.h.b16 %v5706
    %v6045 = vunpack.c.l.b16 %v5707
    %v6046 = vunpack.c.h.b16 %v5707
    %v6047 = vunpack.c.l.b16 %v5708
    %v6048 = vunpack.c.h.b16 %v5708
    %v6049 = vunpack.c.l.b16 %v5709
    %v6050 = vunpack.c.h.b16 %v5709
    %v6051 = vunpack.c.l.b16 %v5710
    %v6052 = vunpack.c.h.b16 %v5710
    %v6053 = vunpack.c.l.b16 %v5711
    %v6054 = vunpack.c.h.b16 %v5711
    %v6055 = vunpack.c.l.b16 %v5712
    %v6056 = vunpack.c.h.b16 %v5712
    %v6057 = vunpack.c.l.b16 %v5713
    %v6058 = vunpack.c.h.b16 %v5713
    %v6059 = vunpack.c.l.b16 %v5714
    %v6060 = vunpack.c.h.b16 %v5714
    %v6061 = vunpack.c.l.b16 %v5715
    %v6062 = vunpack.c.h.b16 %v5715
    %v6063 = vunpack.c.l.b16 %v5716
    %v6064 = vunpack.c.h.b16 %v5716
    %v6065 = vunpack.c.l.b16 %v5717
    %v6066 = vunpack.c.h.b16 %v5717
    %v6067 = vunpack.c.l.b16 %v5718
    %v6068 = vunpack.c.h.b16 %v5718
    %v6069 = vunpack.c.l.b16 %v5719
    %v6070 = vunpack.c.h.b16 %v5719
    %v6071 = vunpack.c.l.b16 %v5720
    %v6072 = vunpack.c.h.b16 %v5720
    %v6073 = vunpack.c.l.b16 %v5721
    %v6074 = vunpack.c.h.b16 %v5721
    %v6075 = vunpack.c.l.b16 %v5722
    %v6076 = vunpack.c.h.b16 %v5722
    %v6077 = vunpack.c.l.b16 %v5723
    %v6078 = vunpack.c.h.b16 %v5723
    %v6079 = vunpack.c.l.b16 %v5724
    %v6080 = vunpack.c.h.b16 %v5724
    %v6081 = vunpack.c.l.b16 %v5725
    %v6082 = vunpack.c.h.b16 %v5725
    %v6083 = vunpack.c.l.b16 %v5726
    %v6084 = vunpack.c.h.b16 %v5726
    %v6085 = vunpack.c.l.b16 %v5727
    %v6086 = vunpack.c.h.b16 %v5727
    %v6087 = vunpack.c.l.b16 %v5728
    %v6088 = vunpack.c.h.b16 %v5728
    %v6089 = vunpack.c.l.b16 %v5729
    %v6090 = vunpack.c.h.b16 %v5729
    %v6091 = vunpack.c.l.b16 %v5730
    %v6092 = vunpack.c.h.b16 %v5730
    %v6093 = vunpack.c.l.b16 %v5731
    %v6094 = vunpack.c.h.b16 %v5731
    %v6095 = vunpack.c.l.b16 %v5732
    %v6096 = vunpack.c.h.b16 %v5732
    %v6097 = vunpack.c.l.b16 %v5733
    %v6098 = vunpack.c.h.b16 %v5733
    %v6099 = vunpack.c.l.b16 %v5734
    %v6100 = vunpack.c.h.b16 %v5734
    %v6101 = vunpack.c.l.b16 %v5735
    %v6102 = vunpack.c.h.b16 %v5735
    %v6103 = vunpack.c.l.b16 %v5736
    %v6104 = vunpack.c.h.b16 %v5736
    %v6105 = vunpack.c.l.b16 %v5737
    %v6106 = vunpack.c.h.b16 %v5737
    %v6107 = vunpack.c.l.b16 %v5738
    %v6108 = vunpack.c.h.b16 %v5738
    %v6109 = vunpack.c.l.b16 %v5739
    %v6110 = vunpack.c.h.b16 %v5739
    %v6111 = vunpack.c.l.b16 %v5740
    %v6112 = vunpack.c.h.b16 %v5740
    %v6113 = vunpack.c.l.b16 %v5741
    %v6114 = vunpack.c.h.b16 %v5741
    %v6115 = vunpack.c.l.b16 %v5742
    %v6116 = vunpack.c.h.b16 %v5742
    %v6117 = vunpack.c.l.b16 %v5743
    %v6118 = vunpack.c.h.b16 %v5743
    %v6119 = vunpack.c.l.b16 %v5744
    %v6120 = vunpack.c.h.b16 %v5744
    %v6121 = vunpack.c.l.b16 %v5745
    %v6122 = vunpack.c.h.b16 %v5745
    %v6123 = vunpack.c.l.b16 %v5746
    %v6124 = vunpack.c.h.b16 %v5746
    %v6125 = vunpack.c.l.b16 %v5747
    %v6126 = vunpack.c.h.b16 %v5747
    %v6127 = vunpack.c.l.b16 %v5748
    %v6128 = vunpack.c.h.b16 %v5748
    %v6129 = vunpack.c.l.b16 %v5749
    %v6130 = vunpack.c.h.b16 %v5749
    %v6131 = vunpack.c.l.b16 %v5750
    %v6132 = vunpack.c.h.b16 %v5750
    %v6133 = vunpack.c.l.b16 %v5751
    %v6134 = vunpack.c.h.b16 %v5751
    %v6135 = vunpack.c.l.b16 %v5752
    %v6136 = vunpack.c.h.b16 %v5752
    %v6137 = vunpack.c.l.b16 %v5753
    %v6138 = vunpack.c.h.b16 %v5753
    %v6139 = vunpack.c.l.b16 %v5754
    %v6140 = vunpack.c.h.b16 %v5754
    %v6141 = vunpack.c.l.b16 %v5755
    %v6142 = vunpack.c.h.b16 %v5755
    %v6143 = vunpack.c.l.b16 %v5756
    %v6144 = vunpack.c.h.b16 %v5756
    %v6145 = vunpack.c.l.b16 %v5757
    %v6146 = vunpack.c.h.b16 %v5757
    %v6147 = vunpack.c.l.b16 %v5758
    %v6148 = vunpack.c.h.b16 %v5758
    %v6149 = vunpack.c.l.b16 %v5759
    %v6150 = vunpack.c.h.b16 %v5759
    %v6151 = vunpack.c.l.b16 %v5760
    %v6152 = vunpack.c.h.b16 %v5760
    %v6153 = vunpack.c.l.b16 %v5761
    %v6154 = vunpack.c.h.b16 %v5761
    %v6155 = vunpack.c.l.b16 %v5762
    %v6156 = vunpack.c.h.b16 %v5762
    %v6157 = vpack.c.b16 %v5905, %v5901
    %v6158 = vpack.c.b16 %v5906, %v5902
    %v6159 = vpack.c.b16 %v5907, %v5903
    %v6160 = vpack.c.b16 %v5908, %v5904
    %v6161 = vpack.c.b16 %v5913, %v5909
    %v6162 = vpack.c.b16 %v5914, %v5910
    %v6163 = vpack.c.b16 %v5915, %v5911
    %v6164 = vpack.c.b16 %v5916, %v5912
    %v6165 = vpack.c.b16 %v5921, %v5917
    %v6166 = vpack.c.b16 %v5922, %v5918
    %v6167 = vpack.c.b16 %v5923, %v5919
    %v6168 = vpack.c.b16 %v5924, %v5920
    %v6169 = vpack.c.b16 %v5929, %v5925
    %v6170 = vpack.c.b16 %v5930, %v5926
    %v6171 = vpack.c.b16 %v5931, %v5927
    %v6172 = vpack.c.b16 %v5932, %v5928
    %v6173 = vpack.c.b16 %v5937, %v5933
    %v6174 = vpack.c.b16 %v5938, %v5934
    %v6175 = vpack.c.b16 %v5939, %v5935
    %v6176 = vpack.c.b16 %v5940, %v5936
    %v6177 = vpack.c.b16 %v5945, %v5941
    %v6178 = vpack.c.b16 %v5946, %v5942
    %v6179 = vpack.c.b16 %v5947, %v5943
    %v6180 = vpack.c.b16 %v5948, %v5944
    %v6181 = vpack.c.b16 %v5953, %v5949
    %v6182 = vpack.c.b16 %v5954, %v5950
    %v6183 = vpack.c.b16 %v5955, %v5951
    %v6184 = vpack.c.b16 %v5956, %v5952
    %v6185 = vpack.c.b16 %v5961, %v5957
    %v6186 = vpack.c.b16 %v5962, %v5958
    %v6187 = vpack.c.b16 %v5963, %v5959
    %v6188 = vpack.c.b16 %v5964, %v5960
    %v6189 = vpack.c.b16 %v5969, %v5965
    %v6190 = vpack.c.b16 %v5970, %v5966
    %v6191 = vpack.c.b16 %v5971, %v5967
    %v6192 = vpack.c.b16 %v5972, %v5968
    %v6193 = vpack.c.b16 %v5977, %v5973
    %v6194 = vpack.c.b16 %v5978, %v5974
    %v6195 = vpack.c.b16 %v5979, %v5975
    %v6196 = vpack.c.b16 %v5980, %v5976
    %v6197 = vpack.c.b16 %v5985, %v5981
    %v6198 = vpack.c.b16 %v5986, %v5982
    %v6199 = vpack.c.b16 %v5987, %v5983
    %v6200 = vpack.c.b16 %v5988, %v5984
    %v6201 = vpack.c.b16 %v5993, %v5989
    %v6202 = vpack.c.b16 %v5994, %v5990
    %v6203 = vpack.c.b16 %v5995, %v5991
    %v6204 = vpack.c.b16 %v5996, %v5992
    %v6205 = vpack.c.b16 %v6001, %v5997
    %v6206 = vpack.c.b16 %v6002, %v5998
    %v6207 = vpack.c.b16 %v6003, %v5999
    %v6208 = vpack.c.b16 %v6004, %v6000
    %v6209 = vpack.c.b16 %v6009, %v6005
    %v6210 = vpack.c.b16 %v6010, %v6006
    %v6211 = vpack.c.b16 %v6011, %v6007
    %v6212 = vpack.c.b16 %v6012, %v6008
    %v6213 = vpack.c.b16 %v6017, %v6013
    %v6214 = vpack.c.b16 %v6018, %v6014
    %v6215 = vpack.c.b16 %v6019, %v6015
    %v6216 = vpack.c.b16 %v6020, %v6016
    %v6217 = vpack.c.b16 %v6025, %v6021
    %v6218 = vpack.c.b16 %v6026, %v6022
    %v6219 = vpack.c.b16 %v6027, %v6023
    %v6220 = vpack.c.b16 %v6028, %v6024
    %v6221 = vpack.c.b16 %v6033, %v6029
    %v6222 = vpack.c.b16 %v6034, %v6030
    %v6223 = vpack.c.b16 %v6035, %v6031
    %v6224 = vpack.c.b16 %v6036, %v6032
    %v6225 = vpack.c.b16 %v6041, %v6037
    %v6226 = vpack.c.b16 %v6042, %v6038
    %v6227 = vpack.c.b16 %v6043, %v6039
    %v6228 = vpack.c.b16 %v6044, %v6040
    %v6229 = vpack.c.b16 %v6049, %v6045
    %v6230 = vpack.c.b16 %v6050, %v6046
    %v6231 = vpack.c.b16 %v6051, %v6047
    %v6232 = vpack.c.b16 %v6052, %v6048
    %v6233 = vpack.c.b16 %v6057, %v6053
    %v6234 = vpack.c.b16 %v6058, %v6054
    %v6235 = vpack.c.b16 %v6059, %v6055
    %v6236 = vpack.c.b16 %v6060, %v6056
    %v6237 = vpack.c.b16 %v6065, %v6061
    %v6238 = vpack.c.b16 %v6066, %v6062
    %v6239 = vpack.c.b16 %v6067, %v6063
    %v6240 = vpack.c.b16 %v6068, %v6064
    %v6241 = vpack.c.b16 %v6073, %v6069
    %v6242 = vpack.c.b16 %v6074, %v6070
    %v6243 = vpack.c.b16 %v6075, %v6071
    %v6244 = vpack.c.b16 %v6076, %v6072
    %v6245 = vpack.c.b16 %v6081, %v6077
    %v6246 = vpack.c.b16 %v6082, %v6078
    %v6247 = vpack.c.b16 %v6083, %v6079
    %v6248 = vpack.c.b16 %v6084, %v6080
    %v6249 = vpack.c.b16 %v6089, %v6085
    %v6250 = vpack.c.b16 %v6090, %v6086
    %v6251 = vpack.c.b16 %v6091, %v6087
    %v6252 = vpack.c.b16 %v6092, %v6088
    %v6253 = vpack.c.b16 %v6097, %v6093
    %v6254 = vpack.c.b16 %v6098, %v6094
    %v6255 = vpack.c.b16 %v6099, %v6095
    %v6256 = vpack.c.b16 %v6100, %v6096
    %v6257 = vpack.c.b16 %v6105, %v6101
    %v6258 = vpack.c.b16 %v6106, %v6102
    %v6259 = vpack.c.b16 %v6107, %v6103
    %v6260 = vpack.c.b16 %v6108, %v6104
    %v6261 = vpack.c.b16 %v6113, %v6109
    %v6262 = vpack.c.b16 %v6114, %v6110
    %v6263 = vpack.c.b16 %v6115, %v6111
    %v6264 = vpack.c.b16 %v6116, %v6112
    %v6265 = vpack.c.b16 %v6121, %v6117
    %v6266 = vpack.c.b16 %v6122, %v6118
    %v6267 = vpack.c.b16 %v6123, %v6119
    %v6268 = vpack.c.b16 %v6124, %v6120
    %v6269 = vpack.c.b16 %v6129, %v6125
    %v6270 = vpack.c.b16 %v6130, %v6126
    %v6271 = vpack.c.b16 %v6131, %v6127
    %v6272 = vpack.c.b16 %v6132, %v6128
    %v6273 = vpack.c.b16 %v6137, %v6133
    %v6274 = vpack.c.b16 %v6138, %v6134
    %v6275 = vpack.c.b16 %v6139, %v6135
    %v6276 = vpack.c.b16 %v6140, %v6136
    %v6277 = vpack.c.b16 %v6145, %v6141
    %v6278 = vpack.c.b16 %v6146, %v6142
    %v6279 = vpack.c.b16 %v6147, %v6143
    %v6280 = vpack.c.b16 %v6148, %v6144
    %v6281 = vpack.c.b16 %v6153, %v6149
    %v6282 = vpack.c.b16 %v6154, %v6150
    %v6283 = vpack.c.b16 %v6155, %v6151
    %v6284 = vpack.c.b16 %v6156, %v6152
    %6413 = vmatpush.bf16.msra.mxu0 %v6185
    %6414 = vmatpush.bf16.msra.mxu0 %v6181
    %6415 = vmatpush.bf16.msra.mxu0 %v6177
    %6416 = vmatpush.bf16.msra.mxu0 %v6173
    %6417 = vmatpush.bf16.msra.mxu0 %v6169
    %6418 = vmatpush.bf16.msra.mxu0 %v6165
    %6419 = vmatpush.bf16.msra.mxu0 %v6161
    %6420 = vmatpush.bf16.msra.mxu0 %v6157
    %6421 = vmatmul.bf16.gmra.mxu0 %v5631
    %v6422 = vpop.f32.mrf.mxu0
    %v6423 = vadd.f32 %v5765, %v6422
    %v6424 = vpop.f32.mrf.mxu0
    %6425 = vdwg.mxu0
    %6426 = vmatpush.bf16.msra.mxu0 %v6217
    %6427 = vmatpush.bf16.msra.mxu0 %v6213
    %6428 = vmatpush.bf16.msra.mxu0 %v6209
    %6429 = vmatpush.bf16.msra.mxu0 %v6205
    %6430 = vmatpush.bf16.msra.mxu0 %v6201
    %6431 = vmatpush.bf16.msra.mxu0 %v6197
    %6432 = vmatpush.bf16.msra.mxu0 %v6193
    %6433 = vmatpush.bf16.msra.mxu0 %v6189
    %6434 = vmatmul.bf16.gmra.mxu0 %v5632
    %v6435 = vpop.f32.mrf.mxu0
    %v6436 = vadd.f32 %v6423, %v6435
    %v6437 = vpop.f32.mrf.mxu0
    %6438 = vdwg.mxu0
    %6439 = vmatpush.bf16.msra.mxu0 %v6249
    %6440 = vmatpush.bf16.msra.mxu0 %v6245
    %6441 = vmatpush.bf16.msra.mxu0 %v6241
    %6442 = vmatpush.bf16.msra.mxu0 %v6237
    %6443 = vmatpush.bf16.msra.mxu0 %v6233
    %6444 = vmatpush.bf16.msra.mxu0 %v6229
    %6445 = vmatpush.bf16.msra.mxu0 %v6225
    %6446 = vmatpush.bf16.msra.mxu0 %v6221
    %6447 = vmatmul.bf16.gmra.mxu0 %v5633
    %v6448 = vpop.f32.mrf.mxu0
    %v6449 = vadd.f32 %v6436, %v6448
    %v6450 = vpop.f32.mrf.mxu0
    %6451 = vdwg.mxu0
    %6452 = vmatpush.bf16.msra.mxu0 %v6281
    %6453 = vmatpush.bf16.msra.mxu0 %v6277
    %6454 = vmatpush.bf16.msra.mxu0 %v6273
    %6455 = vmatpush.bf16.msra.mxu0 %v6269
    %6456 = vmatpush.bf16.msra.mxu0 %v6265
    %6457 = vmatpush.bf16.msra.mxu0 %v6261
    %6458 = vmatpush.bf16.msra.mxu0 %v6257
    %6459 = vmatpush.bf16.msra.mxu0 %v6253
    %6460 = vmatmul.bf16.gmra.mxu0 %v5634
    %v6461 = vpop.f32.mrf.mxu0
    %v6462 = vadd.f32 %v6449, %v6461
    %v6463 = vpop.f32.mrf.mxu0
    %6464 = vdwg.mxu0
    %6465 = vmatpush.bf16.msra.mxu0 %v6186
    %6466 = vmatpush.bf16.msra.mxu0 %v6182
    %6467 = vmatpush.bf16.msra.mxu0 %v6178
    %6468 = vmatpush.bf16.msra.mxu0 %v6174
    %6469 = vmatpush.bf16.msra.mxu0 %v6170
    %6470 = vmatpush.bf16.msra.mxu0 %v6166
    %6471 = vmatpush.bf16.msra.mxu0 %v6162
    %6472 = vmatpush.bf16.msra.mxu0 %v6158
    %6473 = vmatmul.bf16.gmra.mxu0 %v5631
    %v6474 = vpop.f32.mrf.mxu0
    %v6475 = vadd.f32 %v5766, %v6474
    %v6476 = vpop.f32.mrf.mxu0
    %6477 = vdwg.mxu0
    %6478 = vmatpush.bf16.msra.mxu0 %v6218
    %6479 = vmatpush.bf16.msra.mxu0 %v6214
    %6480 = vmatpush.bf16.msra.mxu0 %v6210
    %6481 = vmatpush.bf16.msra.mxu0 %v6206
    %6482 = vmatpush.bf16.msra.mxu0 %v6202
    %6483 = vmatpush.bf16.msra.mxu0 %v6198
    %6484 = vmatpush.bf16.msra.mxu0 %v6194
    %6485 = vmatpush.bf16.msra.mxu0 %v6190
    %6486 = vmatmul.bf16.gmra.mxu0 %v5632
    %v6487 = vpop.f32.mrf.mxu0
    %v6488 = vadd.f32 %v6475, %v6487
    %v6489 = vpop.f32.mrf.mxu0
    %6490 = vdwg.mxu0
    %6491 = vmatpush.bf16.msra.mxu0 %v6250
    %6492 = vmatpush.bf16.msra.mxu0 %v6246
    %6493 = vmatpush.bf16.msra.mxu0 %v6242
    %6494 = vmatpush.bf16.msra.mxu0 %v6238
    %6495 = vmatpush.bf16.msra.mxu0 %v6234
    %6496 = vmatpush.bf16.msra.mxu0 %v6230
    %6497 = vmatpush.bf16.msra.mxu0 %v6226
    %6498 = vmatpush.bf16.msra.mxu0 %v6222
    %6499 = vmatmul.bf16.gmra.mxu0 %v5633
    %v6500 = vpop.f32.mrf.mxu0
    %v6501 = vadd.f32 %v6488, %v6500
    %v6502 = vpop.f32.mrf.mxu0
    %6503 = vdwg.mxu0
    %6504 = vmatpush.bf16.msra.mxu0 %v6282
    %6505 = vmatpush.bf16.msra.mxu0 %v6278
    %6506 = vmatpush.bf16.msra.mxu0 %v6274
    %6507 = vmatpush.bf16.msra.mxu0 %v6270
    %6508 = vmatpush.bf16.msra.mxu0 %v6266
    %6509 = vmatpush.bf16.msra.mxu0 %v6262
    %6510 = vmatpush.bf16.msra.mxu0 %v6258
    %6511 = vmatpush.bf16.msra.mxu0 %v6254
    %6512 = vmatmul.bf16.gmra.mxu0 %v5634
    %v6513 = vpop.f32.mrf.mxu0
    %v6514 = vadd.f32 %v6501, %v6513
    %v6515 = vpop.f32.mrf.mxu0
    %6516 = vdwg.mxu0
    %6517 = vmatpush.bf16.msra.mxu0 %v6187
    %6518 = vmatpush.bf16.msra.mxu0 %v6183
    %6519 = vmatpush.bf16.msra.mxu0 %v6179
    %6520 = vmatpush.bf16.msra.mxu0 %v6175
    %6521 = vmatpush.bf16.msra.mxu0 %v6171
    %6522 = vmatpush.bf16.msra.mxu0 %v6167
    %6523 = vmatpush.bf16.msra.mxu0 %v6163
    %6524 = vmatpush.bf16.msra.mxu0 %v6159
    %6525 = vmatmul.bf16.gmra.mxu0 %v5631
    %v6526 = vpop.f32.mrf.mxu0
    %v6527 = vadd.f32 %v5767, %v6526
    %v6528 = vpop.f32.mrf.mxu0
    %6529 = vdwg.mxu0
    %6530 = vmatpush.bf16.msra.mxu0 %v6219
    %6531 = vmatpush.bf16.msra.mxu0 %v6215
    %6532 = vmatpush.bf16.msra.mxu0 %v6211
    %6533 = vmatpush.bf16.msra.mxu0 %v6207
    %6534 = vmatpush.bf16.msra.mxu0 %v6203
    %6535 = vmatpush.bf16.msra.mxu0 %v6199
    %6536 = vmatpush.bf16.msra.mxu0 %v6195
    %6537 = vmatpush.bf16.msra.mxu0 %v6191
    %6538 = vmatmul.bf16.gmra.mxu0 %v5632
    %v6539 = vpop.f32.mrf.mxu0
    %v6540 = vadd.f32 %v6527, %v6539
    %v6541 = vpop.f32.mrf.mxu0
    %6542 = vdwg.mxu0
    %6543 = vmatpush.bf16.msra.mxu0 %v6251
    %6544 = vmatpush.bf16.msra.mxu0 %v6247
    %6545 = vmatpush.bf16.msra.mxu0 %v6243
    %6546 = vmatpush.bf16.msra.mxu0 %v6239
    %6547 = vmatpush.bf16.msra.mxu0 %v6235
    %6548 = vmatpush.bf16.msra.mxu0 %v6231
    %6549 = vmatpush.bf16.msra.mxu0 %v6227
    %6550 = vmatpush.bf16.msra.mxu0 %v6223
    %6551 = vmatmul.bf16.gmra.mxu0 %v5633
    %v6552 = vpop.f32.mrf.mxu0
    %v6553 = vadd.f32 %v6540, %v6552
    %v6554 = vpop.f32.mrf.mxu0
    %6555 = vdwg.mxu0
    %6556 = vmatpush.bf16.msra.mxu0 %v6283
    %6557 = vmatpush.bf16.msra.mxu0 %v6279
    %6558 = vmatpush.bf16.msra.mxu0 %v6275
    %6559 = vmatpush.bf16.msra.mxu0 %v6271
    %6560 = vmatpush.bf16.msra.mxu0 %v6267
    %6561 = vmatpush.bf16.msra.mxu0 %v6263
    %6562 = vmatpush.bf16.msra.mxu0 %v6259
    %6563 = vmatpush.bf16.msra.mxu0 %v6255
    %6564 = vmatmul.bf16.gmra.mxu0 %v5634
    %v6565 = vpop.f32.mrf.mxu0
    %v6566 = vadd.f32 %v6553, %v6565
    %v6567 = vpop.f32.mrf.mxu0
    %6568 = vdwg.mxu0
    %6569 = vmatpush.bf16.msra.mxu0 %v6188
    %6570 = vmatpush.bf16.msra.mxu0 %v6184
    %6571 = vmatpush.bf16.msra.mxu0 %v6180
    %6572 = vmatpush.bf16.msra.mxu0 %v6176
    %6573 = vmatpush.bf16.msra.mxu0 %v6172
    %6574 = vmatpush.bf16.msra.mxu0 %v6168
    %6575 = vmatpush.bf16.msra.mxu0 %v6164
    %6576 = vmatpush.bf16.msra.mxu0 %v6160
    %6577 = vmatmul.bf16.gmra.mxu0 %v5631
    %v6578 = vpop.f32.mrf.mxu0
    %v6579 = vadd.f32 %v5768, %v6578
    %v6580 = vpop.f32.mrf.mxu0
    %6581 = vdwg.mxu0
    %6582 = vmatpush.bf16.msra.mxu0 %v6220
    %6583 = vmatpush.bf16.msra.mxu0 %v6216
    %6584 = vmatpush.bf16.msra.mxu0 %v6212
    %6585 = vmatpush.bf16.msra.mxu0 %v6208
    %6586 = vmatpush.bf16.msra.mxu0 %v6204
    %6587 = vmatpush.bf16.msra.mxu0 %v6200
    %6588 = vmatpush.bf16.msra.mxu0 %v6196
    %6589 = vmatpush.bf16.msra.mxu0 %v6192
    %6590 = vmatmul.bf16.gmra.mxu0 %v5632
    %v6591 = vpop.f32.mrf.mxu0
    %v6592 = vadd.f32 %v6579, %v6591
    %v6593 = vpop.f32.mrf.mxu0
    %6594 = vdwg.mxu0
    %6595 = vmatpush.bf16.msra.mxu0 %v6252
    %6596 = vmatpush.bf16.msra.mxu0 %v6248
    %6597 = vmatpush.bf16.msra.mxu0 %v6244
    %6598 = vmatpush.bf16.msra.mxu0 %v6240
    %6599 = vmatpush.bf16.msra.mxu0 %v6236
    %6600 = vmatpush.bf16.msra.mxu0 %v6232
    %6601 = vmatpush.bf16.msra.mxu0 %v6228
    %6602 = vmatpush.bf16.msra.mxu0 %v6224
    %6603 = vmatmul.bf16.gmra.mxu0 %v5633
    %v6604 = vpop.f32.mrf.mxu0
    %v6605 = vadd.f32 %v6592, %v6604
    %v6606 = vpop.f32.mrf.mxu0
    %6607 = vdwg.mxu0
    %6608 = vmatpush.bf16.msra.mxu0 %v6284
    %6609 = vmatpush.bf16.msra.mxu0 %v6280
    %6610 = vmatpush.bf16.msra.mxu0 %v6276
    %6611 = vmatpush.bf16.msra.mxu0 %v6272
    %6612 = vmatpush.bf16.msra.mxu0 %v6268
    %6613 = vmatpush.bf16.msra.mxu0 %v6264
    %6614 = vmatpush.bf16.msra.mxu0 %v6260
    %6615 = vmatpush.bf16.msra.mxu0 %v6256
    %6616 = vmatmul.bf16.gmra.mxu0 %v5634
    %v6617 = vpop.f32.mrf.mxu0
    %v6618 = vadd.f32 %v6605, %v6617
    %v6619 = vpop.f32.mrf.mxu0
    %6620 = vdwg.mxu0
    %vm6621 = vcmp.gt.f32.partialorder %v6462, 0.0
    %vm6622 = vcmp.gt.f32.partialorder %v6514, 0.0
    %vm6623 = vcmp.gt.f32.partialorder %v6566, 0.0
    %vm6624 = vcmp.gt.f32.partialorder %v6618, 0.0
    %v6625 = vmul.f32 %v6462, 0.01
    %v6626 = vmul.f32 %v6514, 0.01
    %v6627 = vmul.f32 %v6566, 0.01
    %v6628 = vmul.f32 %v6618, 0.01
    %v6629 = vsel %vm6621, %v6462, %v6625
    %v6630 = vsel %vm6622, %v6514, %v6626
    %v6631 = vsel %vm6623, %v6566, %v6627
    %v6632 = vsel %vm6624, %v6618, %v6628
    %v6633 = vpack.c.bf16 %v6629, %v6629
    %v6634 = vpack.c.bf16 %v6630, %v6630
    %v6635 = vpack.c.bf16 %v6631, %v6631
    %v6636 = vpack.c.bf16 %v6632, %v6632
    %v6637 = vld [vmem:[%s13] sm:$0xf]
    %v6638 = vld [vmem:[%s13 + $0x4] sm:$0xf]
    %v6639 = vld [vmem:[%s13 + $0x8] sm:$0xf]
    %v6640 = vld [vmem:[%s13 + $0xc] sm:$0xf]
    %v6641 = vld [vmem:[%s13 + $0x10] sm:$0xf]
    %v6642 = vld [vmem:[%s13 + $0x14] sm:$0xf]
    %v6643 = vld [vmem:[%s13 + $0x18] sm:$0xf]
    %v6644 = vld [vmem:[%s13 + $0x1c] sm:$0xf]
    %v6645 = vld [vmem:[%s13 + $0x20] sm:$0xf]
    %v6646 = vld [vmem:[%s13 + $0x24] sm:$0xf]
    %v6647 = vld [vmem:[%s13 + $0x28] sm:$0xf]
    %v6648 = vld [vmem:[%s13 + $0x2c] sm:$0xf]
    %v6649 = vld [vmem:[%s13 + $0x30] sm:$0xf]
    %v6650 = vld [vmem:[%s13 + $0x34] sm:$0xf]
    %v6651 = vld [vmem:[%s13 + $0x38] sm:$0xf]
    %v6652 = vld [vmem:[%s13 + $0x3c] sm:$0xf]
    %v6653 = vld [vmem:[%s13 + $0x40] sm:$0xf]
    %v6654 = vld [vmem:[%s13 + $0x44] sm:$0xf]
    %v6655 = vld [vmem:[%s13 + $0x48] sm:$0xf]
    %v6656 = vld [vmem:[%s13 + $0x4c] sm:$0xf]
    %v6657 = vld [vmem:[%s13 + $0x50] sm:$0xf]
    %v6658 = vld [vmem:[%s13 + $0x54] sm:$0xf]
    %v6659 = vld [vmem:[%s13 + $0x58] sm:$0xf]
    %v6660 = vld [vmem:[%s13 + $0x5c] sm:$0xf]
    %v6661 = vld [vmem:[%s13 + $0x60] sm:$0xf]
    %v6662 = vld [vmem:[%s13 + $0x64] sm:$0xf]
    %v6663 = vld [vmem:[%s13 + $0x68] sm:$0xf]
    %v6664 = vld [vmem:[%s13 + $0x6c] sm:$0xf]
    %v6665 = vld [vmem:[%s13 + $0x70] sm:$0xf]
    %v6666 = vld [vmem:[%s13 + $0x74] sm:$0xf]
    %v6667 = vld [vmem:[%s13 + $0x78] sm:$0xf]
    %v6668 = vld [vmem:[%s13 + $0x7c] sm:$0xf]
    %v6669 = vld [vmem:[%s13 + $0x80] sm:$0xf]
    %v6670 = vld [vmem:[%s13 + $0x84] sm:$0xf]
    %v6671 = vld [vmem:[%s13 + $0x88] sm:$0xf]
    %v6672 = vld [vmem:[%s13 + $0x8c] sm:$0xf]
    %v6673 = vld [vmem:[%s13 + $0x90] sm:$0xf]
    %v6674 = vld [vmem:[%s13 + $0x94] sm:$0xf]
    %v6675 = vld [vmem:[%s13 + $0x98] sm:$0xf]
    %v6676 = vld [vmem:[%s13 + $0x9c] sm:$0xf]
    %v6677 = vld [vmem:[%s13 + $0xa0] sm:$0xf]
    %v6678 = vld [vmem:[%s13 + $0xa4] sm:$0xf]
    %v6679 = vld [vmem:[%s13 + $0xa8] sm:$0xf]
    %v6680 = vld [vmem:[%s13 + $0xac] sm:$0xf]
    %v6681 = vld [vmem:[%s13 + $0xb0] sm:$0xf]
    %v6682 = vld [vmem:[%s13 + $0xb4] sm:$0xf]
    %v6683 = vld [vmem:[%s13 + $0xb8] sm:$0xf]
    %v6684 = vld [vmem:[%s13 + $0xbc] sm:$0xf]
    %v6685 = vld [vmem:[%s13 + $0xc0] sm:$0xf]
    %v6686 = vld [vmem:[%s13 + $0xc4] sm:$0xf]
    %v6687 = vld [vmem:[%s13 + $0xc8] sm:$0xf]
    %v6688 = vld [vmem:[%s13 + $0xcc] sm:$0xf]
    %v6689 = vld [vmem:[%s13 + $0xd0] sm:$0xf]
    %v6690 = vld [vmem:[%s13 + $0xd4] sm:$0xf]
    %v6691 = vld [vmem:[%s13 + $0xd8] sm:$0xf]
    %v6692 = vld [vmem:[%s13 + $0xdc] sm:$0xf]
    %v6693 = vld [vmem:[%s13 + $0xe0] sm:$0xf]
    %v6694 = vld [vmem:[%s13 + $0xe4] sm:$0xf]
    %v6695 = vld [vmem:[%s13 + $0xe8] sm:$0xf]
    %v6696 = vld [vmem:[%s13 + $0xec] sm:$0xf]
    %v6697 = vld [vmem:[%s13 + $0xf0] sm:$0xf]
    %v6698 = vld [vmem:[%s13 + $0xf4] sm:$0xf]
    %v6699 = vld [vmem:[%s13 + $0xf8] sm:$0xf]
    %v6700 = vld [vmem:[%s13 + $0xfc] sm:$0xf]
    %v6701 = vld [vmem:[%s14] sm:$0x1]
    %v6703 = vperm.slane %v6701, 0
    %v6769 = vunpack.c.l.b16 %v6637
    %v6770 = vunpack.c.l.b16 %v6638
    %v6771 = vunpack.c.l.b16 %v6639
    %v6772 = vunpack.c.l.b16 %v6640
    %v6773 = vunpack.c.l.b16 %v6641
    %v6774 = vunpack.c.l.b16 %v6642
    %v6775 = vunpack.c.l.b16 %v6643
    %v6776 = vunpack.c.l.b16 %v6644
    %v6777 = vunpack.c.l.b16 %v6645
    %v6778 = vunpack.c.l.b16 %v6646
    %v6779 = vunpack.c.l.b16 %v6647
    %v6780 = vunpack.c.l.b16 %v6648
    %v6781 = vunpack.c.l.b16 %v6649
    %v6782 = vunpack.c.l.b16 %v6650
    %v6783 = vunpack.c.l.b16 %v6651
    %v6784 = vunpack.c.l.b16 %v6652
    %v6785 = vunpack.c.l.b16 %v6653
    %v6786 = vunpack.c.l.b16 %v6654
    %v6787 = vunpack.c.l.b16 %v6655
    %v6788 = vunpack.c.l.b16 %v6656
    %v6789 = vunpack.c.l.b16 %v6657
    %v6790 = vunpack.c.l.b16 %v6658
    %v6791 = vunpack.c.l.b16 %v6659
    %v6792 = vunpack.c.l.b16 %v6660
    %v6793 = vunpack.c.l.b16 %v6661
    %v6794 = vunpack.c.l.b16 %v6662
    %v6795 = vunpack.c.l.b16 %v6663
    %v6796 = vunpack.c.l.b16 %v6664
    %v6797 = vunpack.c.l.b16 %v6665
    %v6798 = vunpack.c.l.b16 %v6666
    %v6799 = vunpack.c.l.b16 %v6667
    %v6800 = vunpack.c.l.b16 %v6668
    %v6801 = vunpack.c.l.b16 %v6669
    %v6802 = vunpack.c.l.b16 %v6670
    %v6803 = vunpack.c.l.b16 %v6671
    %v6804 = vunpack.c.l.b16 %v6672
    %v6805 = vunpack.c.l.b16 %v6673
    %v6806 = vunpack.c.l.b16 %v6674
    %v6807 = vunpack.c.l.b16 %v6675
    %v6808 = vunpack.c.l.b16 %v6676
    %v6809 = vunpack.c.l.b16 %v6677
    %v6810 = vunpack.c.l.b16 %v6678
    %v6811 = vunpack.c.l.b16 %v6679
    %v6812 = vunpack.c.l.b16 %v6680
    %v6813 = vunpack.c.l.b16 %v6681
    %v6814 = vunpack.c.l.b16 %v6682
    %v6815 = vunpack.c.l.b16 %v6683
    %v6816 = vunpack.c.l.b16 %v6684
    %v6817 = vunpack.c.l.b16 %v6685
    %v6818 = vunpack.c.l.b16 %v6686
    %v6819 = vunpack.c.l.b16 %v6687
    %v6820 = vunpack.c.l.b16 %v6688
    %v6821 = vunpack.c.l.b16 %v6689
    %v6822 = vunpack.c.l.b16 %v6690
    %v6823 = vunpack.c.l.b16 %v6691
    %v6824 = vunpack.c.l.b16 %v6692
    %v6825 = vunpack.c.l.b16 %v6693
    %v6826 = vunpack.c.l.b16 %v6694
    %v6827 = vunpack.c.l.b16 %v6695
    %v6828 = vunpack.c.l.b16 %v6696
    %v6829 = vunpack.c.l.b16 %v6697
    %v6830 = vunpack.c.l.b16 %v6698
    %v6831 = vunpack.c.l.b16 %v6699
    %v6832 = vunpack.c.l.b16 %v6700
    %v6833 = vpack.c.b16 %v6770, %v6769
    %v6834 = vpack.c.b16 %v6772, %v6771
    %v6835 = vpack.c.b16 %v6774, %v6773
    %v6836 = vpack.c.b16 %v6776, %v6775
    %v6837 = vpack.c.b16 %v6778, %v6777
    %v6838 = vpack.c.b16 %v6780, %v6779
    %v6839 = vpack.c.b16 %v6782, %v6781
    %v6840 = vpack.c.b16 %v6784, %v6783
    %v6841 = vpack.c.b16 %v6786, %v6785
    %v6842 = vpack.c.b16 %v6788, %v6787
    %v6843 = vpack.c.b16 %v6790, %v6789
    %v6844 = vpack.c.b16 %v6792, %v6791
    %v6845 = vpack.c.b16 %v6794, %v6793
    %v6846 = vpack.c.b16 %v6796, %v6795
    %v6847 = vpack.c.b16 %v6798, %v6797
    %v6848 = vpack.c.b16 %v6800, %v6799
    %v6849 = vpack.c.b16 %v6802, %v6801
    %v6850 = vpack.c.b16 %v6804, %v6803
    %v6851 = vpack.c.b16 %v6806, %v6805
    %v6852 = vpack.c.b16 %v6808, %v6807
    %v6853 = vpack.c.b16 %v6810, %v6809
    %v6854 = vpack.c.b16 %v6812, %v6811
    %v6855 = vpack.c.b16 %v6814, %v6813
    %v6856 = vpack.c.b16 %v6816, %v6815
    %v6857 = vpack.c.b16 %v6818, %v6817
    %v6858 = vpack.c.b16 %v6820, %v6819
    %v6859 = vpack.c.b16 %v6822, %v6821
    %v6860 = vpack.c.b16 %v6824, %v6823
    %v6861 = vpack.c.b16 %v6826, %v6825
    %v6862 = vpack.c.b16 %v6828, %v6827
    %v6863 = vpack.c.b16 %v6830, %v6829
    %v6864 = vpack.c.b16 %v6832, %v6831
    %6897 = vmatpush.bf16.msra.mxu0 %v6840
    %6898 = vmatpush.bf16.msra.mxu0 %v6839
    %6899 = vmatpush.bf16.msra.mxu0 %v6838
    %6900 = vmatpush.bf16.msra.mxu0 %v6837
    %6901 = vmatpush.bf16.msra.mxu0 %v6836
    %6902 = vmatpush.bf16.msra.mxu0 %v6835
    %6903 = vmatpush.bf16.msra.mxu0 %v6834
    %6904 = vmatpush.bf16.msra.mxu0 %v6833
    %6905 = vmatmul.bf16.gmra.mxu0 %v6633
    %v6906 = vpop.f32.mrf.mxu0
    %v6907 = vadd.f32 %v6703, %v6906
    %v6908 = vpop.f32.mrf.mxu0
    %6909 = vdwg.mxu0
    %6910 = vmatpush.bf16.msra.mxu0 %v6848
    %6911 = vmatpush.bf16.msra.mxu0 %v6847
    %6912 = vmatpush.bf16.msra.mxu0 %v6846
    %6913 = vmatpush.bf16.msra.mxu0 %v6845
    %6914 = vmatpush.bf16.msra.mxu0 %v6844
    %6915 = vmatpush.bf16.msra.mxu0 %v6843
    %6916 = vmatpush.bf16.msra.mxu0 %v6842
    %6917 = vmatpush.bf16.msra.mxu0 %v6841
    %6918 = vmatmul.bf16.gmra.mxu0 %v6634
    %v6919 = vpop.f32.mrf.mxu0
    %v6920 = vadd.f32 %v6907, %v6919
    %v6921 = vpop.f32.mrf.mxu0
    %6922 = vdwg.mxu0
    %6923 = vmatpush.bf16.msra.mxu0 %v6856
    %6924 = vmatpush.bf16.msra.mxu0 %v6855
    %6925 = vmatpush.bf16.msra.mxu0 %v6854
    %6926 = vmatpush.bf16.msra.mxu0 %v6853
    %6927 = vmatpush.bf16.msra.mxu0 %v6852
    %6928 = vmatpush.bf16.msra.mxu0 %v6851
    %6929 = vmatpush.bf16.msra.mxu0 %v6850
    %6930 = vmatpush.bf16.msra.mxu0 %v6849
    %6931 = vmatmul.bf16.gmra.mxu0 %v6635
    %v6932 = vpop.f32.mrf.mxu0
    %v6933 = vadd.f32 %v6920, %v6932
    %v6934 = vpop.f32.mrf.mxu0
    %6935 = vdwg.mxu0
    %6936 = vmatpush.bf16.msra.mxu0 %v6864
    %6937 = vmatpush.bf16.msra.mxu0 %v6863
    %6938 = vmatpush.bf16.msra.mxu0 %v6862
    %6939 = vmatpush.bf16.msra.mxu0 %v6861
    %6940 = vmatpush.bf16.msra.mxu0 %v6860
    %6941 = vmatpush.bf16.msra.mxu0 %v6859
    %6942 = vmatpush.bf16.msra.mxu0 %v6858
    %6943 = vmatpush.bf16.msra.mxu0 %v6857
    %6944 = vmatmul.bf16.gmra.mxu0 %v6636
    %v6945 = vpop.f32.mrf.mxu0
    %v6946 = vadd.f32 %v6933, %v6945
    %v6947 = vpop.f32.mrf.mxu0
    %6948 = vdwg.mxu0
    %v6949 = vld [vmem:[%s16] sm:$0x3]
    %vm6950 = vcmask 132096
    %v6951 = vsel %vm6950, %v6946, -inf
    %6952 = vmax.xlane.f32.xlu0 %v6951
    %v6953 = vpop.xlane.xlu0 %6952
    %v6954 = vsub.f32 %v6946, %v6953
    %v6955 = vmul.f32 %v6954, 1.442695
    %v6956 = vpow.pop %v6955
    %v6957 = vld [vmem:[%s17] sm:$0xff]
    %v6958 = vld [vmem:[%s17 + $0x8] sm:$0xff]
    %v6959 = vld [vmem:[%s17 + $0x10] sm:$0x1]
    %vm6960 = vcmask 138240
    %v6962 = vsel %vm6960, %v6956, 0
    %vm6964 = vcmask 1040384
    %v6966 = vsel %vm6964, %v6959, 0
    %6968 = vmatpush.msra.mxu0 0.0
    %6969 = vmatpush.msra.mxu0 0.0
    %6970 = vmatpush.msra.mxu0 0.0
    %6971 = vmatpush.msra.mxu0 0.0
    %6972 = vmatpush.msra.mxu0 0.0
    %6973 = vmatpush.msra.mxu0 0.0
    %6974 = vmatpush.msra.mxu0 0.0
    %6975 = vmatpush.msra.mxu0 0.0
    %6976 = vmatpush.msra.mxu0 0.0
    %6977 = vmatpush.msra.mxu0 0.0
    %6978 = vmatpush.msra.mxu0 0.0
    %6979 = vmatpush.msra.mxu0 0.0
    %6980 = vmatpush.msra.mxu0 0.0
    %6981 = vmatpush.msra.mxu0 %v6966
    %6982 = vmatpush.msra.mxu0 %v6958
    %6983 = vmatpush.msra.mxu0 %v6957
    %6984 = vmatmul.f32.gmra.mxu0 %v6962
    %v6985 = vpop.f32.mrf.mxu0
    %v6986 = vadd.f32 0.0, %v6985
    %6987 = vdwg.mxu0
    %v6988 = vlog2.pop %v6986
    %v6989 = vmul.f32 %v6988, 0.6931472
    %v6990 = vadd.f32 %v6953, %v6989
    %vm6991 = vcmask 58368
    %v6992 = vsel %vm6991, %v6990, 0.0
    %6993 = vadd.xlane.f32.xlu0 %v6992
    %v6994 = vpop.xlane.xlu0 %6993
    %v6995 = vmul.f32 %v6949, %v6946
    %v6996 = vsel %vm6950, %v6995, 0.0
    %6997 = vadd.xlane.f32.xlu0 %v6996
    %v6998 = vpop.xlane.xlu0 %6997
    %v6999 = vsub.f32 %v6994, %v6998
    %v7000 = vadd.f32 %v5101, 1e-15
    %v7001 = vadd.f32 %v5102, 1e-15
    %v7002 = vlog2.pop %v7000
    %v7003 = vmul.f32 %v7002, 0.6931472
    %v7004 = vlog2.pop %v7001
    %v7005 = vmul.f32 %v7004, 0.6931472
    %v7006 = vmul.f32 %v7003, 2.0
    %v7007 = vmul.f32 %v7005, 2.0
    %v7008 = vadd.f32 %v7006, 1.0
    %v7009 = vadd.f32 %v7007, 1.0
    %v7010 = vmul.f32 %v4924, %v4924
    %v7011 = vmul.f32 %v4976, %v4976
    %v7012 = vsub.f32 %v7008, %v7010
    %v7013 = vsub.f32 %v7009, %v7011
    %v7014 = vmul.f32 %v5101, %v5101
    %v7015 = vmul.f32 %v5102, %v5102
    %v7016 = vsub.f32 %v7012, %v7014
    %v7017 = vsub.f32 %v7013, %v7015
    %v7018 = vmul.f32 %v7016, -0.5
    %v7019 = vmul.f32 %v7017, -0.5
    %v7020 = vsel %vm5107, %v7018, 0.0
    %v7021 = vsel %vm5107, %v7019, 0.0
    %v7022 = vadd.f32 %v7020, %v7021
    %7023 = vadd.xlane.f32.xlu0 %v7022
    %v7024 = vpop.xlane.xlu0 %7023
    %v7025 = vmul.f32 %v7024, 0.001
    %v7026 = vadd.f32 %v6999, %v7025
    %v7027 = vmul.f32 %v7026, 1.442695
    %v7028 = vsel %vm5107, %v7027, 0.0
    %v7029 = vrot.slane %v7028, 4
    %v7030 = vadd.f32 %v7028, %v7029
    %v7031 = vrot.slane %v7030, 2
    %v7032 = vadd.f32 %v7030, %v7031
    %v7033 = vrot.slane %v7032, 1
    %v7034 = vadd.f32 %v7032, %v7033
    %v7035 = vrcp.pop 2.0
    %v7036 = vmul.f32 2.0, %v7035
    %v7037 = vsub.f32 1.0, %v7036
    %v7038 = vmul.f32 %v7035, %v7037
    %v7039 = vadd.f32 %v7035, %v7038
    %vm7040 = vweird.f32 %v7035
    %v7041 = vsel %vm7040, %v7035, %v7039
    %v7042 = vmul.f32 %v7034, %v7041
    %vm7043 = vcmask 0
    %7044 = vst.msk [vmem:[#allocation13] sm:$0x1] %vm7043, %v7042
    // Predicated region
    $region98: #{tpu_custom_call.1} parent=1 // pred_check
      _
    $region99: #{tpu_custom_call.1} parent=1 // pred_check_branch
      %7046 = sbr.rel (0) target = $region101
    $region100: #{tpu_custom_call.1} parent=1 // pred_region
      %7048 = vsyncadd [#allocation4], 0
      %s7050 = sshll.u32 [#allocation13], 4
      %s7051 = int_to_ptr.vmem [resolvable:$true] %s7050
      %s7052 = sshll.u32 %s18, 4
      %s7053 = int_to_ptr.hbm [resolvable:$true] %s7052
      %7055 = dma.vmem_to_hbm [thread:$0]  %s7051, 16, %s7053, [#allocation4]
    $region101: #{tpu_custom_call.1} parent=1 // pred_fallthru
      _
    // Predicated region
    $region102: #{tpu_custom_call.1} parent=1 // pred_check
      _
    $region103: #{tpu_custom_call.1} parent=1 // pred_check_branch
      %7057 = sbr.rel (0) target = $region105
    $region104: #{tpu_custom_call.1} parent=1 // pred_region
      %7059 = dma.done [#allocation4], 16
    $region105: #{tpu_custom_call.1} parent=1 // pred_fallthru
      _
    %7060 = vsyncpa [#allocation3], 1
    %7061 = vsyncpa [#allocation6], 1
    %7062 = vsyncpa [#allocation9], 1
    %7063 = vsyncpa [#allocation12], 1
    %7064 = vsyncpa [#allocation4], 1

</llo_original>
